<compile_context>
chip_gen: v7x
topology: tpu7x:2x2x1
jax: 0.10.0
libtpu: 0.0.40
codegen_flags: <defaults>
</compile_context>

<pallas_src>
import functools
import math

import jax
import jax.numpy as jnp
from jax.experimental import pallas as pl
from jax.experimental.pallas import tpu as pltpu

_VMEM = pl.BlockSpec(memory_space=pltpu.MemorySpace.VMEM)


def _vmem_limit_bytes():
    # v5e/v6e: 128 MiB per core, v7x: 64 MiB.  Use capacity minus headroom.
    try:
        cap = int(pltpu.get_tpu_info().vmem_capacity_bytes)
    except Exception:  # pragma: no cover - conservative fallback
        cap = 64 * 1024 * 1024
    return max(32 * 1024 * 1024, cap - 16 * 1024 * 1024)


_CP = pltpu.CompilerParams(vmem_limit_bytes=_vmem_limit_bytes())


# ------------------------------ fused kernel --------------------------------
def _gapnet_kernel(xT_ref, p3_ref, v_ref,
                   wtm_ref, btm_ref, wtf_ref, btf_ref,
                   wbig_ref, bbig_ref, wlog_ref, blog_ref, ws_ref, bs_ref,
                   w1xn_ref, w1att_ref, b1_ref,
                   w4a_ref, w4g_ref, b4_ref,
                   wf_ref, bf_ref, o_ref, *, knn_size, F):
    f32 = jnp.float32

    def dot(a, b):
        return jnp.dot(a, b, preferred_element_type=f32)

    # ---- tnet3 (mlp chain and fc chain composed offline) -------------------
    h = dot(xT_ref[...], wtm_ref[...]) + btm_ref[...]        # (N, 1024)
    pooled = jnp.max(h, axis=0, keepdims=True)               # (1, 1024) == torch.max(x, 2)[0]
    a9 = dot(pooled, wtf_ref[...]) + btf_ref[...]            # (1, 9) flattened (t3 + I)

    # ---- xn = torch raw-reshape((t3+I) @ x, (N,3)) via precomputed selector
    p3 = p3_ref[...]                                         # (N, 27)
    xn = a9[0:1, 0:1] * p3[:, 0:3]
    for i in range(1, 9):
        xn = xn + a9[0:1, i:i + 1] * p3[:, 3 * i:3 * i + 3]  # (N, 3)

    # ---- GAP (mlp1∘mlpF folded; torch (K,F) scramble baked into wbig) ------
    v = v_ref[...]                                           # (N, 3*K) flattened neighbors
    g = dot(v, wbig_ref[...]) + bbig_ref[...]                # (N, K*F): torch-reshaped mlpF(xknn)
    s_knn = dot(v, wlog_ref[...]) + blog_ref[...]            # (N, K)
    ws = ws_ref[...]
    s_x = (ws[0:1, 0:1] * xn[:, 0:1] + ws[0:1, 1:2] * xn[:, 1:2]
           + ws[0:1, 2:3] * xn[:, 2:3] + bs_ref[...])        # (N, 1)
    logits = s_knn + s_x                                     # (N, K)
    m = jnp.max(logits, axis=0, keepdims=True)               # softmax over POINTS (F.softmax dim=0)
    e = jnp.exp(logits - m)
    attn = e / jnp.sum(e, axis=0, keepdims=True)             # (N, K), exact division

    blk = g[:, 0:F]
    x_attn = attn[:, 0:1] * blk                              # bmm(softmax, x2)
    x2max = blk                                              # max_k x_graph (pre head-repeat)
    for k in range(1, knn_size):
        blk = g[:, k * F:(k + 1) * F]
        x_attn = x_attn + attn[:, k:k + 1] * blk
        x2max = jnp.maximum(x2max, blk)

    # ---- classification trunk (mlp1..3 composed, repeats folded) + fc head -
    a = dot(xn, w1xn_ref[...]) + dot(x_attn, w1att_ref[...]) + b1_ref[...]   # (N, 128)
    xc = dot(a, w4a_ref[...]) + dot(x2max, w4g_ref[...]) + b4_ref[...]       # (N, 1024)
    pool = jnp.max(xc, axis=0, keepdims=True)                                # (1, 1024)
    o_ref[...] = dot(pool, wf_ref[...]) + bf_ref[...]                        # (1, classes)


# ------------------------------ parameters ----------------------------------
def _init_linear(key, out_dim, in_dim):
    kw, kb = jax.random.split(key)
    bound = 1.0 / math.sqrt(in_dim)
    w = jax.random.uniform(kw, (out_dim, in_dim), jnp.float32, -bound, bound)
    b = jax.random.uniform(kb, (out_dim,), jnp.float32, -bound, bound)
    return w, b


def init_params(key, classes=3, dim=3, F=16):
    """PyTorch-layout parameters: w (out, in), b (out,)."""
    layers = [
        ("tnet_mlp1", 64, 3), ("tnet_mlp2", 128, 64), ("tnet_mlp3", 1024, 128),
        ("tnet_fc1", 512, 1024), ("tnet_fc2", 256, 512), ("tnet_fc3", 9, 256),
        ("gap_mlpF", F, dim), ("gap_mlp1", 1, F),
        ("mlp1", 64, 67), ("mlp2", 128, 64), ("mlp3", 128, 128), ("mlp4", 1024, 192),
        ("fc1", 2048, 1024), ("fc2", 1024, 2048), ("fc3", 512, 1024),
        ("fc4", 256, 512), ("fc5", classes, 256),
    ]
    params = {}
    for k, (name, o, i) in zip(jax.random.split(key, len(layers)), layers):
        params[name] = _init_linear(k, o, i)
    return params


def prepare_params(params, F=16, M=4, knn_size=10, dim=3):
    """One-time prep: compose affine chains (no nonlinearities in the reference),
    fold head repeats / identity / GAP scramble into the weights. All f32."""
    f32 = jnp.float32
    K = knn_size

    def compose(*names):
        w, b = params[names[0]]
        w = jnp.asarray(w, f32)
        b = jnp.asarray(b, f32)
        for name in names[1:]:
            wn = jnp.asarray(params[name][0], f32)
            bn = jnp.asarray(params[name][1], f32)
            b = wn @ b + bn
            w = wn @ w
        return w, b  # (out, in), (out,)

    p = {}
    # tnet: mlp1->mlp2->mlp3 (3 -> 1024) and fc1->fc2->fc3 (1024 -> 9)
    w, b = compose("tnet_mlp1", "tnet_mlp2", "tnet_mlp3")
    p["tnet_mlp"] = (w.T, b.reshape(1, -1))
    w, b = compose("tnet_fc1", "tnet_fc2", "tnet_fc3")
    eye_flat = jnp.eye(3, dtype=f32).reshape(-1)
    p["tnet_fc"] = (w.T, (b + eye_flat).reshape(1, -1))      # fold the +identity into the bias

    # GAP: fold mlp1 into mlpF -> per-point scalar; expand mlpF so one matmul
    # produces the torch raw-reshaped (K,F) layout directly from the flattened
    # (3*K) neighbor vector.
    wF = jnp.asarray(params["gap_mlpF"][0], f32)              # (F, dim)
    bF = jnp.asarray(params["gap_mlpF"][1], f32)              # (F,)
    w1 = jnp.asarray(params["gap_mlp1"][0], f32)              # (1, F)
    b1 = jnp.asarray(params["gap_mlp1"][1], f32)              # (1,)
    ws = w1 @ wF                                              # (1, dim)
    bs = (w1 @ bF + b1).reshape(1, 1)                         # (1, 1)
    rows = jnp.arange(dim * K)[:, None]                       # 10*d + k'
    cols = jnp.arange(K * F)[None, :]                         # q (flat over torch (F,K))
    wbig = jnp.where(rows % K == cols % K, wF[cols // K, rows // K], 0.0)   # (3K, K*F)
    bbig = bF[jnp.arange(K * F) // K].reshape(1, -1)
    p["gap_big"] = (wbig, bbig)
    colk = jnp.arange(K)[None, :]
    wlog = jnp.where(rows % K == colk, ws[0, rows // K], 0.0)               # (3K, K)
    p["gap_log"] = (wlog, jnp.full((1, K), bs[0, 0], f32))
    p["gap_ws"] = ws.reshape(1, dim)
    p["gap_bs"] = bs

    # trunk mlp1->mlp2->mlp3 composed (67 -> 128); M-way repeat_interleave of
    # x_attn folded into the attention columns.
    w, b = compose("mlp1", "mlp2", "mlp3")                    # (128, 67)
    p["mlp_xn"] = w[:, :dim].T                                # (3, 128)
    p["mlp_att"] = w[:, dim:].reshape(-1, F, M).sum(axis=2).T  # (F, 128)
    p["mlp_b"] = b.reshape(1, -1)

    # mlp4 (192 -> 1024); graph-pool repeat folded likewise.
    w = jnp.asarray(params["mlp4"][0], f32)
    b = jnp.asarray(params["mlp4"][1], f32)
    p["mlp4_a"] = w[:, :128].T                                # (128, 1024)
    p["mlp4_g"] = w[:, 128:].reshape(-1, F, M).sum(axis=2).T  # (F, 1024)
    p["mlp4_b"] = b.reshape(1, -1)

    # fc1..fc5 composed (1024 -> classes)
    w, b = compose("fc1", "fc2", "fc3", "fc4", "fc5")
    p["fc"] = (w.T, b.reshape(1, -1))
    return p


# ------------------------------ forward pass ---------------------------------
def gapnet_cls_forward(p, xknn, x, knn_size=10, F=16, dim=3):
    n = xknn.shape[0]
    xmat = x.reshape(dim, n).astype(jnp.float32)              # (1,3,N) -> (3,N)
    xT = xmat.T                                               # natural per-point coords (N,3)

    # Precomputed selector so the kernel can rebuild the torch raw reshape
    # xn = ((t3+I) @ x).reshape(N,3) from 9 broadcast-MACs (pure input prep).
    gath = jnp.tile(xmat, (1, 3)).T.reshape(n, dim, dim)      # [n,d,c] = x[c, (3n+d) % N]
    onehot = jnp.repeat(jnp.eye(dim, dtype=jnp.float32), n,
                        axis=0).reshape(n, dim, dim)          # [n,d,r] = 1{(3n+d)//N == r}
    p3 = (onehot[:, :, :, None] * gath[:, :, None, :]
          ).transpose(0, 2, 3, 1).reshape(n, dim * dim * dim)  # (N, 27)

    v = xknn.astype(jnp.float32).reshape(n, dim * knn_size)   # [n, K*d + k] = xknn[n,d,k]

    classes = p["fc"][0].shape[1]
    kernel = functools.partial(_gapnet_kernel, knn_size=knn_size, F=F)
    args = (xT, p3, v,
            *p["tnet_mlp"], *p["tnet_fc"],
            *p["gap_big"], *p["gap_log"], p["gap_ws"], p["gap_bs"],
            p["mlp_xn"], p["mlp_att"], p["mlp_b"],
            p["mlp4_a"], p["mlp4_g"], p["mlp4_b"],
            *p["fc"])
    out = pl.pallas_call(
        kernel,
        out_shape=jax.ShapeDtypeStruct((1, classes), jnp.float32),
        in_specs=[_VMEM] * len(args),
        out_specs=_VMEM,
        compiler_params=_CP,
    )(*args)
    return out.reshape(-1)                                    # (classes,)


if __name__ == "__main__":
    N, KNN, CLASSES = 32, 10, 3
    key = jax.random.PRNGKey(0)
    kp, kx, kk = jax.random.split(key, 3)
    raw_params = init_params(kp, classes=CLASSES)
    params = prepare_params(raw_params, knn_size=KNN)         # compose/fold ONCE

    x = jax.random.normal(kx, (1, 3, N), jnp.float32)         # torch NCL point cloud
    xknn = jax.random.normal(kk, (N, 3, KNN), jnp.float32)    # per-point KNN neighbors

    fwd = jax.jit(functools.partial(gapnet_cls_forward, knn_size=KNN))
    out = fwd(params, xknn, x)
    jax.block_until_ready(out)
    assert out.shape == (CLASSES,)
    print("KERNEL_OK")
</pallas_src>

<mosaic_0001>
module attributes {stable_mosaic.version = 11 : i64} {
  func.func @_gapnet_kernel(%arg0: memref<32x3xf32, #tpu.memory_space<vmem>>, %arg1: memref<32x27xf32, #tpu.memory_space<vmem>>, %arg2: memref<32x30xf32, #tpu.memory_space<vmem>>, %arg3: memref<3x1024xf32, #tpu.memory_space<vmem>>, %arg4: memref<1x1024xf32, #tpu.memory_space<vmem>>, %arg5: memref<1024x9xf32, #tpu.memory_space<vmem>>, %arg6: memref<1x9xf32, #tpu.memory_space<vmem>>, %arg7: memref<30x160xf32, #tpu.memory_space<vmem>>, %arg8: memref<1x160xf32, #tpu.memory_space<vmem>>, %arg9: memref<30x10xf32, #tpu.memory_space<vmem>>, %arg10: memref<1x10xf32, #tpu.memory_space<vmem>>, %arg11: memref<1x3xf32, #tpu.memory_space<vmem>>, %arg12: memref<1x1xf32, #tpu.memory_space<vmem>>, %arg13: memref<3x128xf32, #tpu.memory_space<vmem>>, %arg14: memref<16x128xf32, #tpu.memory_space<vmem>>, %arg15: memref<1x128xf32, #tpu.memory_space<vmem>>, %arg16: memref<128x1024xf32, #tpu.memory_space<vmem>>, %arg17: memref<16x1024xf32, #tpu.memory_space<vmem>>, %arg18: memref<1x1024xf32, #tpu.memory_space<vmem>>, %arg19: memref<1024x3xf32, #tpu.memory_space<vmem>>, %arg20: memref<1x3xf32, #tpu.memory_space<vmem>>, %arg21: memref<1x3xf32, #tpu.memory_space<vmem>>) attributes {dimension_semantics = [], scalar_prefetch = 0 : i64, scratch_operands = 0 : i64, tpu.core_type = #tpu.core_type<tc>} {
    %c0 = arith.constant 0 : index
    %c0_0 = arith.constant 0 : index
    %0 = vector.load %arg0[%c0, %c0_0] : memref<32x3xf32, #tpu.memory_space<vmem>>, vector<32x3xf32>
    %c0_1 = arith.constant 0 : index
    %c0_2 = arith.constant 0 : index
    %1 = vector.load %arg3[%c0_1, %c0_2] : memref<3x1024xf32, #tpu.memory_space<vmem>>, vector<3x1024xf32>
    %cst = arith.constant dense<0.000000e+00> : vector<32x1024xf32>
    %2 = tpu.matmul %0, %1, %cst {dimension_numbers = #tpu.dot_dimension_numbers<[1], [0], [0], [1], [0, 0, 1, 1], [], []>} : vector<32x3xf32>, vector<3x1024xf32>, vector<32x1024xf32> -> vector<32x1024xf32>
    %c0_3 = arith.constant 0 : index
    %c0_4 = arith.constant 0 : index
    %3 = vector.load %arg4[%c0_3, %c0_4] : memref<1x1024xf32, #tpu.memory_space<vmem>>, vector<1x1024xf32>
    %4 = vector.broadcast %3 : vector<1x1024xf32> to vector<32x1024xf32>
    %5 = arith.addf %2, %4 : vector<32x1024xf32>
    %cst_5 = arith.constant dense<0xFF800000> : vector<1024xf32>
    %6 = vector.multi_reduction <maximumf>, %5, %cst_5 [0] : vector<32x1024xf32> to vector<1024xf32>
    %7 = vector.shape_cast %6 : vector<1024xf32> to vector<1x1024xf32>
    %c0_6 = arith.constant 0 : index
    %c0_7 = arith.constant 0 : index
    %8 = vector.load %arg5[%c0_6, %c0_7] : memref<1024x9xf32, #tpu.memory_space<vmem>>, vector<1024x9xf32>
    %cst_8 = arith.constant dense<0.000000e+00> : vector<1x9xf32>
    %9 = tpu.matmul %7, %8, %cst_8 {dimension_numbers = #tpu.dot_dimension_numbers<[1], [0], [0], [1], [0, 0, 1, 1], [], []>} : vector<1x1024xf32>, vector<1024x9xf32>, vector<1x9xf32> -> vector<1x9xf32>
    %c0_9 = arith.constant 0 : index
    %c0_10 = arith.constant 0 : index
    %10 = vector.load %arg6[%c0_9, %c0_10] : memref<1x9xf32, #tpu.memory_space<vmem>>, vector<1x9xf32>
    %11 = arith.addf %9, %10 : vector<1x9xf32>
    %c0_11 = arith.constant 0 : index
    %c0_12 = arith.constant 0 : index
    %12 = vector.load %arg1[%c0_11, %c0_12] : memref<32x27xf32, #tpu.memory_space<vmem>>, vector<32x27xf32>
    %13 = vector.extract_strided_slice %11 {offsets = [0, 0], sizes = [1, 1], strides = [1, 1]} : vector<1x9xf32> to vector<1x1xf32>
    %14 = vector.extract_strided_slice %12 {offsets = [0, 0], sizes = [32, 3], strides = [1, 1]} : vector<32x27xf32> to vector<32x3xf32>
    %15 = vector.broadcast %13 : vector<1x1xf32> to vector<32x3xf32>
    %16 = arith.mulf %15, %14 : vector<32x3xf32>
    %17 = vector.extract_strided_slice %11 {offsets = [0, 1], sizes = [1, 1], strides = [1, 1]} : vector<1x9xf32> to vector<1x1xf32>
    %18 = vector.extract_strided_slice %12 {offsets = [0, 3], sizes = [32, 3], strides = [1, 1]} : vector<32x27xf32> to vector<32x3xf32>
    %19 = vector.broadcast %17 : vector<1x1xf32> to vector<32x3xf32>
    %20 = arith.mulf %19, %18 : vector<32x3xf32>
    %21 = arith.addf %16, %20 : vector<32x3xf32>
    %22 = vector.extract_strided_slice %11 {offsets = [0, 2], sizes = [1, 1], strides = [1, 1]} : vector<1x9xf32> to vector<1x1xf32>
    %23 = vector.extract_strided_slice %12 {offsets = [0, 6], sizes = [32, 3], strides = [1, 1]} : vector<32x27xf32> to vector<32x3xf32>
    %24 = vector.broadcast %22 : vector<1x1xf32> to vector<32x3xf32>
    %25 = arith.mulf %24, %23 : vector<32x3xf32>
    %26 = arith.addf %21, %25 : vector<32x3xf32>
    %27 = vector.extract_strided_slice %11 {offsets = [0, 3], sizes = [1, 1], strides = [1, 1]} : vector<1x9xf32> to vector<1x1xf32>
    %28 = vector.extract_strided_slice %12 {offsets = [0, 9], sizes = [32, 3], strides = [1, 1]} : vector<32x27xf32> to vector<32x3xf32>
    %29 = vector.broadcast %27 : vector<1x1xf32> to vector<32x3xf32>
    %30 = arith.mulf %29, %28 : vector<32x3xf32>
    %31 = arith.addf %26, %30 : vector<32x3xf32>
    %32 = vector.extract_strided_slice %11 {offsets = [0, 4], sizes = [1, 1], strides = [1, 1]} : vector<1x9xf32> to vector<1x1xf32>
    %33 = vector.extract_strided_slice %12 {offsets = [0, 12], sizes = [32, 3], strides = [1, 1]} : vector<32x27xf32> to vector<32x3xf32>
    %34 = vector.broadcast %32 : vector<1x1xf32> to vector<32x3xf32>
    %35 = arith.mulf %34, %33 : vector<32x3xf32>
    %36 = arith.addf %31, %35 : vector<32x3xf32>
    %37 = vector.extract_strided_slice %11 {offsets = [0, 5], sizes = [1, 1], strides = [1, 1]} : vector<1x9xf32> to vector<1x1xf32>
    %38 = vector.extract_strided_slice %12 {offsets = [0, 15], sizes = [32, 3], strides = [1, 1]} : vector<32x27xf32> to vector<32x3xf32>
    %39 = vector.broadcast %37 : vector<1x1xf32> to vector<32x3xf32>
    %40 = arith.mulf %39, %38 : vector<32x3xf32>
    %41 = arith.addf %36, %40 : vector<32x3xf32>
    %42 = vector.extract_strided_slice %11 {offsets = [0, 6], sizes = [1, 1], strides = [1, 1]} : vector<1x9xf32> to vector<1x1xf32>
    %43 = vector.extract_strided_slice %12 {offsets = [0, 18], sizes = [32, 3], strides = [1, 1]} : vector<32x27xf32> to vector<32x3xf32>
    %44 = vector.broadcast %42 : vector<1x1xf32> to vector<32x3xf32>
    %45 = arith.mulf %44, %43 : vector<32x3xf32>
    %46 = arith.addf %41, %45 : vector<32x3xf32>
    %47 = vector.extract_strided_slice %11 {offsets = [0, 7], sizes = [1, 1], strides = [1, 1]} : vector<1x9xf32> to vector<1x1xf32>
    %48 = vector.extract_strided_slice %12 {offsets = [0, 21], sizes = [32, 3], strides = [1, 1]} : vector<32x27xf32> to vector<32x3xf32>
    %49 = vector.broadcast %47 : vector<1x1xf32> to vector<32x3xf32>
    %50 = arith.mulf %49, %48 : vector<32x3xf32>
    %51 = arith.addf %46, %50 : vector<32x3xf32>
    %52 = vector.extract_strided_slice %11 {offsets = [0, 8], sizes = [1, 1], strides = [1, 1]} : vector<1x9xf32> to vector<1x1xf32>
    %53 = vector.extract_strided_slice %12 {offsets = [0, 24], sizes = [32, 3], strides = [1, 1]} : vector<32x27xf32> to vector<32x3xf32>
    %54 = vector.broadcast %52 : vector<1x1xf32> to vector<32x3xf32>
    %55 = arith.mulf %54, %53 : vector<32x3xf32>
    %56 = arith.addf %51, %55 : vector<32x3xf32>
    %c0_13 = arith.constant 0 : index
    %c0_14 = arith.constant 0 : index
    %57 = vector.load %arg2[%c0_13, %c0_14] : memref<32x30xf32, #tpu.memory_space<vmem>>, vector<32x30xf32>
    %c0_15 = arith.constant 0 : index
    %c0_16 = arith.constant 0 : index
    %58 = vector.load %arg7[%c0_15, %c0_16] : memref<30x160xf32, #tpu.memory_space<vmem>>, vector<30x160xf32>
    %cst_17 = arith.constant dense<0.000000e+00> : vector<32x160xf32>
    %59 = tpu.matmul %57, %58, %cst_17 {dimension_numbers = #tpu.dot_dimension_numbers<[1], [0], [0], [1], [0, 0, 1, 1], [], []>} : vector<32x30xf32>, vector<30x160xf32>, vector<32x160xf32> -> vector<32x160xf32>
    %c0_18 = arith.constant 0 : index
    %c0_19 = arith.constant 0 : index
    %60 = vector.load %arg8[%c0_18, %c0_19] : memref<1x160xf32, #tpu.memory_space<vmem>>, vector<1x160xf32>
    %61 = vector.broadcast %60 : vector<1x160xf32> to vector<32x160xf32>
    %62 = arith.addf %59, %61 : vector<32x160xf32>
    %c0_20 = arith.constant 0 : index
    %c0_21 = arith.constant 0 : index
    %63 = vector.load %arg9[%c0_20, %c0_21] : memref<30x10xf32, #tpu.memory_space<vmem>>, vector<30x10xf32>
    %cst_22 = arith.constant dense<0.000000e+00> : vector<32x10xf32>
    %64 = tpu.matmul %57, %63, %cst_22 {dimension_numbers = #tpu.dot_dimension_numbers<[1], [0], [0], [1], [0, 0, 1, 1], [], []>} : vector<32x30xf32>, vector<30x10xf32>, vector<32x10xf32> -> vector<32x10xf32>
    %c0_23 = arith.constant 0 : index
    %c0_24 = arith.constant 0 : index
    %65 = vector.load %arg10[%c0_23, %c0_24] : memref<1x10xf32, #tpu.memory_space<vmem>>, vector<1x10xf32>
    %66 = vector.broadcast %65 : vector<1x10xf32> to vector<32x10xf32>
    %67 = arith.addf %64, %66 : vector<32x10xf32>
    %c0_25 = arith.constant 0 : index
    %c0_26 = arith.constant 0 : index
    %68 = vector.load %arg11[%c0_25, %c0_26] : memref<1x3xf32, #tpu.memory_space<vmem>>, vector<1x3xf32>
    %69 = vector.extract_strided_slice %68 {offsets = [0, 0], sizes = [1, 1], strides = [1, 1]} : vector<1x3xf32> to vector<1x1xf32>
    %70 = vector.extract_strided_slice %56 {offsets = [0, 0], sizes = [32, 1], strides = [1, 1]} : vector<32x3xf32> to vector<32x1xf32>
    %71 = vector.broadcast %69 : vector<1x1xf32> to vector<32x1xf32>
    %72 = arith.mulf %71, %70 : vector<32x1xf32>
    %73 = vector.extract_strided_slice %68 {offsets = [0, 1], sizes = [1, 1], strides = [1, 1]} : vector<1x3xf32> to vector<1x1xf32>
    %74 = vector.extract_strided_slice %56 {offsets = [0, 1], sizes = [32, 1], strides = [1, 1]} : vector<32x3xf32> to vector<32x1xf32>
    %75 = vector.broadcast %73 : vector<1x1xf32> to vector<32x1xf32>
    %76 = arith.mulf %75, %74 : vector<32x1xf32>
    %77 = arith.addf %72, %76 : vector<32x1xf32>
    %78 = vector.extract_strided_slice %68 {offsets = [0, 2], sizes = [1, 1], strides = [1, 1]} : vector<1x3xf32> to vector<1x1xf32>
    %79 = vector.extract_strided_slice %56 {offsets = [0, 2], sizes = [32, 1], strides = [1, 1]} : vector<32x3xf32> to vector<32x1xf32>
    %80 = vector.broadcast %78 : vector<1x1xf32> to vector<32x1xf32>
    %81 = arith.mulf %80, %79 : vector<32x1xf32>
    %82 = arith.addf %77, %81 : vector<32x1xf32>
    %c0_27 = arith.constant 0 : index
    %c0_28 = arith.constant 0 : index
    %83 = vector.load %arg12[%c0_27, %c0_28] : memref<1x1xf32, #tpu.memory_space<vmem>>, vector<1x1xf32>
    %84 = vector.broadcast %83 : vector<1x1xf32> to vector<32x1xf32>
    %85 = arith.addf %82, %84 : vector<32x1xf32>
    %86 = vector.broadcast %85 : vector<32x1xf32> to vector<32x10xf32>
    %87 = arith.addf %67, %86 : vector<32x10xf32>
    %cst_29 = arith.constant dense<0xFF800000> : vector<10xf32>
    %88 = vector.multi_reduction <maximumf>, %87, %cst_29 [0] : vector<32x10xf32> to vector<10xf32>
    %89 = vector.shape_cast %88 : vector<10xf32> to vector<1x10xf32>
    %90 = vector.broadcast %89 : vector<1x10xf32> to vector<32x10xf32>
    %91 = arith.subf %87, %90 : vector<32x10xf32>
    %92 = math.exp %91 : vector<32x10xf32>
    %cst_30 = arith.constant dense<0.000000e+00> : vector<10xf32>
    %93 = vector.multi_reduction <add>, %92, %cst_30 [0] : vector<32x10xf32> to vector<10xf32>
    %94 = vector.shape_cast %93 : vector<10xf32> to vector<1x10xf32>
    %95 = vector.broadcast %94 : vector<1x10xf32> to vector<32x10xf32>
    %96 = arith.divf %92, %95 : vector<32x10xf32>
    %97 = vector.extract_strided_slice %62 {offsets = [0, 0], sizes = [32, 16], strides = [1, 1]} : vector<32x160xf32> to vector<32x16xf32>
    %98 = vector.extract_strided_slice %96 {offsets = [0, 0], sizes = [32, 1], strides = [1, 1]} : vector<32x10xf32> to vector<32x1xf32>
    %99 = vector.broadcast %98 : vector<32x1xf32> to vector<32x16xf32>
    %100 = arith.mulf %99, %97 : vector<32x16xf32>
    %101 = vector.extract_strided_slice %62 {offsets = [0, 16], sizes = [32, 16], strides = [1, 1]} : vector<32x160xf32> to vector<32x16xf32>
    %102 = vector.extract_strided_slice %96 {offsets = [0, 1], sizes = [32, 1], strides = [1, 1]} : vector<32x10xf32> to vector<32x1xf32>
    %103 = vector.broadcast %102 : vector<32x1xf32> to vector<32x16xf32>
    %104 = arith.mulf %103, %101 : vector<32x16xf32>
    %105 = arith.addf %100, %104 : vector<32x16xf32>
    %106 = arith.maximumf %97, %101 : vector<32x16xf32>
    %107 = vector.extract_strided_slice %62 {offsets = [0, 32], sizes = [32, 16], strides = [1, 1]} : vector<32x160xf32> to vector<32x16xf32>
    %108 = vector.extract_strided_slice %96 {offsets = [0, 2], sizes = [32, 1], strides = [1, 1]} : vector<32x10xf32> to vector<32x1xf32>
    %109 = vector.broadcast %108 : vector<32x1xf32> to vector<32x16xf32>
    %110 = arith.mulf %109, %107 : vector<32x16xf32>
    %111 = arith.addf %105, %110 : vector<32x16xf32>
    %112 = arith.maximumf %106, %107 : vector<32x16xf32>
    %113 = vector.extract_strided_slice %62 {offsets = [0, 48], sizes = [32, 16], strides = [1, 1]} : vector<32x160xf32> to vector<32x16xf32>
    %114 = vector.extract_strided_slice %96 {offsets = [0, 3], sizes = [32, 1], strides = [1, 1]} : vector<32x10xf32> to vector<32x1xf32>
    %115 = vector.broadcast %114 : vector<32x1xf32> to vector<32x16xf32>
    %116 = arith.mulf %115, %113 : vector<32x16xf32>
    %117 = arith.addf %111, %116 : vector<32x16xf32>
    %118 = arith.maximumf %112, %113 : vector<32x16xf32>
    %119 = vector.extract_strided_slice %62 {offsets = [0, 64], sizes = [32, 16], strides = [1, 1]} : vector<32x160xf32> to vector<32x16xf32>
    %120 = vector.extract_strided_slice %96 {offsets = [0, 4], sizes = [32, 1], strides = [1, 1]} : vector<32x10xf32> to vector<32x1xf32>
    %121 = vector.broadcast %120 : vector<32x1xf32> to vector<32x16xf32>
    %122 = arith.mulf %121, %119 : vector<32x16xf32>
    %123 = arith.addf %117, %122 : vector<32x16xf32>
    %124 = arith.maximumf %118, %119 : vector<32x16xf32>
    %125 = vector.extract_strided_slice %62 {offsets = [0, 80], sizes = [32, 16], strides = [1, 1]} : vector<32x160xf32> to vector<32x16xf32>
    %126 = vector.extract_strided_slice %96 {offsets = [0, 5], sizes = [32, 1], strides = [1, 1]} : vector<32x10xf32> to vector<32x1xf32>
    %127 = vector.broadcast %126 : vector<32x1xf32> to vector<32x16xf32>
    %128 = arith.mulf %127, %125 : vector<32x16xf32>
    %129 = arith.addf %123, %128 : vector<32x16xf32>
    %130 = arith.maximumf %124, %125 : vector<32x16xf32>
    %131 = vector.extract_strided_slice %62 {offsets = [0, 96], sizes = [32, 16], strides = [1, 1]} : vector<32x160xf32> to vector<32x16xf32>
    %132 = vector.extract_strided_slice %96 {offsets = [0, 6], sizes = [32, 1], strides = [1, 1]} : vector<32x10xf32> to vector<32x1xf32>
    %133 = vector.broadcast %132 : vector<32x1xf32> to vector<32x16xf32>
    %134 = arith.mulf %133, %131 : vector<32x16xf32>
    %135 = arith.addf %129, %134 : vector<32x16xf32>
    %136 = arith.maximumf %130, %131 : vector<32x16xf32>
    %137 = vector.extract_strided_slice %62 {offsets = [0, 112], sizes = [32, 16], strides = [1, 1]} : vector<32x160xf32> to vector<32x16xf32>
    %138 = vector.extract_strided_slice %96 {offsets = [0, 7], sizes = [32, 1], strides = [1, 1]} : vector<32x10xf32> to vector<32x1xf32>
    %139 = vector.broadcast %138 : vector<32x1xf32> to vector<32x16xf32>
    %140 = arith.mulf %139, %137 : vector<32x16xf32>
    %141 = arith.addf %135, %140 : vector<32x16xf32>
    %142 = arith.maximumf %136, %137 : vector<32x16xf32>
    %143 = vector.extract_strided_slice %62 {offsets = [0, 128], sizes = [32, 16], strides = [1, 1]} : vector<32x160xf32> to vector<32x16xf32>
    %144 = vector.extract_strided_slice %96 {offsets = [0, 8], sizes = [32, 1], strides = [1, 1]} : vector<32x10xf32> to vector<32x1xf32>
    %145 = vector.broadcast %144 : vector<32x1xf32> to vector<32x16xf32>
    %146 = arith.mulf %145, %143 : vector<32x16xf32>
    %147 = arith.addf %141, %146 : vector<32x16xf32>
    %148 = arith.maximumf %142, %143 : vector<32x16xf32>
    %149 = vector.extract_strided_slice %62 {offsets = [0, 144], sizes = [32, 16], strides = [1, 1]} : vector<32x160xf32> to vector<32x16xf32>
    %150 = vector.extract_strided_slice %96 {offsets = [0, 9], sizes = [32, 1], strides = [1, 1]} : vector<32x10xf32> to vector<32x1xf32>
    %151 = vector.broadcast %150 : vector<32x1xf32> to vector<32x16xf32>
    %152 = arith.mulf %151, %149 : vector<32x16xf32>
    %153 = arith.addf %147, %152 : vector<32x16xf32>
    %154 = arith.maximumf %148, %149 : vector<32x16xf32>
    %c0_31 = arith.constant 0 : index
    %c0_32 = arith.constant 0 : index
    %155 = vector.load %arg13[%c0_31, %c0_32] : memref<3x128xf32, #tpu.memory_space<vmem>>, vector<3x128xf32>
    %cst_33 = arith.constant dense<0.000000e+00> : vector<32x128xf32>
    %156 = tpu.matmul %56, %155, %cst_33 {dimension_numbers = #tpu.dot_dimension_numbers<[1], [0], [0], [1], [0, 0, 1, 1], [], []>} : vector<32x3xf32>, vector<3x128xf32>, vector<32x128xf32> -> vector<32x128xf32>
    %c0_34 = arith.constant 0 : index
    %c0_35 = arith.constant 0 : index
    %157 = vector.load %arg14[%c0_34, %c0_35] : memref<16x128xf32, #tpu.memory_space<vmem>>, vector<16x128xf32>
    %cst_36 = arith.constant dense<0.000000e+00> : vector<32x128xf32>
    %158 = tpu.matmul %153, %157, %cst_36 {dimension_numbers = #tpu.dot_dimension_numbers<[1], [0], [0], [1], [0, 0, 1, 1], [], []>} : vector<32x16xf32>, vector<16x128xf32>, vector<32x128xf32> -> vector<32x128xf32>
    %159 = arith.addf %156, %158 : vector<32x128xf32>
    %c0_37 = arith.constant 0 : index
    %c0_38 = arith.constant 0 : index
    %160 = vector.load %arg15[%c0_37, %c0_38] : memref<1x128xf32, #tpu.memory_space<vmem>>, vector<1x128xf32>
    %161 = vector.broadcast %160 : vector<1x128xf32> to vector<32x128xf32>
    %162 = arith.addf %159, %161 : vector<32x128xf32>
    %c0_39 = arith.constant 0 : index
    %c0_40 = arith.constant 0 : index
    %163 = vector.load %arg16[%c0_39, %c0_40] : memref<128x1024xf32, #tpu.memory_space<vmem>>, vector<128x1024xf32>
    %cst_41 = arith.constant dense<0.000000e+00> : vector<32x1024xf32>
    %164 = tpu.matmul %162, %163, %cst_41 {dimension_numbers = #tpu.dot_dimension_numbers<[1], [0], [0], [1], [0, 0, 1, 1], [], []>} : vector<32x128xf32>, vector<128x1024xf32>, vector<32x1024xf32> -> vector<32x1024xf32>
    %c0_42 = arith.constant 0 : index
    %c0_43 = arith.constant 0 : index
    %165 = vector.load %arg17[%c0_42, %c0_43] : memref<16x1024xf32, #tpu.memory_space<vmem>>, vector<16x1024xf32>
    %cst_44 = arith.constant dense<0.000000e+00> : vector<32x1024xf32>
    %166 = tpu.matmul %154, %165, %cst_44 {dimension_numbers = #tpu.dot_dimension_numbers<[1], [0], [0], [1], [0, 0, 1, 1], [], []>} : vector<32x16xf32>, vector<16x1024xf32>, vector<32x1024xf32> -> vector<32x1024xf32>
    %167 = arith.addf %164, %166 : vector<32x1024xf32>
    %c0_45 = arith.constant 0 : index
    %c0_46 = arith.constant 0 : index
    %168 = vector.load %arg18[%c0_45, %c0_46] : memref<1x1024xf32, #tpu.memory_space<vmem>>, vector<1x1024xf32>
    %169 = vector.broadcast %168 : vector<1x1024xf32> to vector<32x1024xf32>
    %170 = arith.addf %167, %169 : vector<32x1024xf32>
    %cst_47 = arith.constant dense<0xFF800000> : vector<1024xf32>
    %171 = vector.multi_reduction <maximumf>, %170, %cst_47 [0] : vector<32x1024xf32> to vector<1024xf32>
    %172 = vector.shape_cast %171 : vector<1024xf32> to vector<1x1024xf32>
    %c0_48 = arith.constant 0 : index
    %c0_49 = arith.constant 0 : index
    %173 = vector.load %arg19[%c0_48, %c0_49] : memref<1024x3xf32, #tpu.memory_space<vmem>>, vector<1024x3xf32>
    %cst_50 = arith.constant dense<0.000000e+00> : vector<1x3xf32>
    %174 = tpu.matmul %172, %173, %cst_50 {dimension_numbers = #tpu.dot_dimension_numbers<[1], [0], [0], [1], [0, 0, 1, 1], [], []>} : vector<1x1024xf32>, vector<1024x3xf32>, vector<1x3xf32> -> vector<1x3xf32>
    %c0_51 = arith.constant 0 : index
    %c0_52 = arith.constant 0 : index
    %175 = vector.load %arg20[%c0_51, %c0_52] : memref<1x3xf32, #tpu.memory_space<vmem>>, vector<1x3xf32>
    %176 = arith.addf %174, %175 : vector<1x3xf32>
    %c0_53 = arith.constant 0 : index
    %c0_54 = arith.constant 0 : index
    %177 = vector.load %arg21[%c0_53, %c0_54] : memref<1x3xf32, #tpu.memory_space<vmem>>, vector<1x3xf32>
    tpu.vector_store %arg21[%c0_53, %c0_54], %176 {strides = array<i32>} : memref<1x3xf32, #tpu.memory_space<vmem>>, vector<1x3xf32>,
    return
  }
}

</mosaic_0001>

<llo_original>
// kernel: tile.7
$region0: #{tile.7}
  %s0 = inlined_call_operand.vmem [shape: f32[3,3,32], index: 0, kind: input, shape index: {}]
  %s1 = inlined_call_operand.vmem [shape: f32[3,96], index: 1, kind: output, shape index: {}]
  $region1: #{tile.7} parent=0
    #allocation0 [shape = 'u8[4096]{0}', space=vmem, size = 0x1000, scoped, tag = 'scoped mem for output reshape']
    #allocation1 [shape = 'u8[12288]{0}', space=vmem, size = 0x3000, scoped, tag = 'scoped mem for input reshape']
    %s3 = sshllo.u32 0, 4
    %s4 = smul.addr 4, 2
    %s5 = scalar_lea.vmem %s0, %s4
    %v6 = vld [vmem:[%s5] sm:%s3]
    %s7 = scalar_lea.vmem [#allocation1], 16
    %8 = vst [vmem:[%s7] sm:%s3] %v6
    %s9 = scalar_lea.vmem %s0, 4
    %v10 = vld [vmem:[%s9] sm:%s3]
    %s11 = scalar_lea.vmem [#allocation1], 8
    %12 = vst [vmem:[%s11] sm:%s3] %v10
    %v13 = vld [vmem:[%s0] sm:%s3]
    %14 = vst [vmem:[#allocation1] sm:%s3] %v13
    %v15 = vld [vmem:[#allocation1] ss:$8 sm:$0x7]
    %vm16 = vcmask 261120
    %17 = vst.msk [vmem:[#allocation0] sm:$0x7] %vm16, %v15
    %s18 = scalar_lea.vmem [#allocation1], 2
    %v19 = vld [vmem:[%s18] ss:$8 sm:$0x7]
    %20 = vrot.lane.b32.xlu0 %v19, 64
    %v21 = vpop.permute.xlu0 %20
    %vm22 = vcmask 785920
    %23 = vst.msk [vmem:[#allocation0] sm:$0x7] %vm22, %v21
    %s24 = scalar_lea.vmem [#allocation1], 1
    %v25 = vld [vmem:[%s24] ss:$8 sm:$0x7]
    %26 = vrot.lane.b32.xlu0 %v25, 32
    %v27 = vpop.permute.xlu0 %26
    %vm28 = vcmask 523520
    %29 = vst.msk [vmem:[#allocation0] sm:$0x7] %vm28, %v27
    %s31 = sshllo.u32 0, 4
    %v33 = vld [vmem:[#allocation0] sm:%s31]
    %s34 = sshllo.u32 0, 4
    %35 = vst [vmem:[%s1] sm:%s34] %v33

// kernel: mul.8
$region0: #{mul.8}
  %s0 = inlined_call_operand.vmem [shape: f32[3,32,3], index: 0, kind: input, shape index: {}]
  %s1 = inlined_call_operand.vmem [shape: f32[32,3,3], index: 1, kind: output, shape index: {}]
  $region1: #{mul.8} parent=0
    #allocation0 [shape = 'u8[12288]{0}', space=vmem, size = 0x3000, scoped, tag = 'scoped mem for input reshape']
    %s3 = sshllo.u32 0, 4
    %s4 = smul.addr 4, 2
    %s5 = scalar_lea.vmem %s0, %s4
    %v6 = vld [vmem:[%s5] sm:%s3]
    %s7 = scalar_lea.vmem [#allocation0], 16
    %8 = vst [vmem:[%s7] sm:%s3] %v6
    %s9 = scalar_lea.vmem %s0, 4
    %v10 = vld [vmem:[%s9] sm:%s3]
    %s11 = scalar_lea.vmem [#allocation0], 8
    %12 = vst [vmem:[%s11] sm:%s3] %v10
    %v13 = vld [vmem:[%s0] sm:%s3]
    %14 = vst [vmem:[#allocation0] sm:%s3] %v13
    %v15 = vld [vmem:[#allocation0] ss:$8 sm:$0x7]
    %vm16 = vcmask 23552
    %17 = vst.msk [vmem:[%s1] sm:$0x1] %vm16, %v15
    %s18 = scalar_lea.vmem %s1, 31
    %19 = vst.msk [vmem:[%s18] sm:$0x2] %vm16, %v15
    %s20 = scalar_lea.vmem %s1, 62
    %21 = vst.msk [vmem:[%s20] sm:$0x4] %vm16, %v15
    %s22 = scalar_lea.vmem [#allocation0], 1
    %v23 = vld [vmem:[%s22] ss:$8 sm:$0x7]
    %24 = vrot.lane.b32.xlu0 %v23, 127
    %v25 = vpop.permute.xlu0 %24
    %vm26 = vcmask 23552
    %s27 = scalar_lea.vmem %s1, 11
    %28 = vst.msk [vmem:[%s27] sm:$0x1] %vm26, %v25
    %s29 = scalar_lea.vmem %s1, 42
    %30 = vst.msk [vmem:[%s29] sm:$0x2] %vm26, %v25
    %s31 = scalar_lea.vmem %s1, 73
    %32 = vst.msk [vmem:[%s31] sm:$0x4] %vm26, %v25
    %s33 = scalar_lea.vmem [#allocation0], 2
    %v34 = vld [vmem:[%s33] ss:$8 sm:$0x7]
    %35 = vrot.lane.b32.xlu0 %v34, 126
    %v36 = vpop.permute.xlu0 %35
    %vm37 = vcmask 23552
    %s38 = scalar_lea.vmem %s1, 22
    %39 = vst.msk [vmem:[%s38] sm:$0x1] %vm37, %v36
    %s40 = scalar_lea.vmem %s1, 53
    %41 = vst.msk [vmem:[%s40] sm:$0x2] %vm37, %v36
    %s42 = scalar_lea.vmem %s1, 84
    %43 = vst.msk [vmem:[%s42] sm:$0x4] %vm37, %v36
    %v44 = vld [vmem:[#allocation0] ss:$8 sm:$0x7]
    %45 = vrot.lane.b32.xlu0 %v44, 125
    %v46 = vpop.permute.xlu0 %45
    %vm47 = vcmask 23552
    %s48 = scalar_lea.vmem %s1, 1
    %49 = vst.msk [vmem:[%s48] sm:$0x1] %vm47, %v46
    %s50 = scalar_lea.vmem %s1, 32
    %51 = vst.msk [vmem:[%s50] sm:$0x2] %vm47, %v46
    %s52 = scalar_lea.vmem %s1, 63
    %53 = vst.msk [vmem:[%s52] sm:$0x4] %vm47, %v46
    %s54 = scalar_lea.vmem [#allocation0], 1
    %v55 = vld [vmem:[%s54] ss:$8 sm:$0x7]
    %56 = vrot.lane.b32.xlu0 %v55, 124
    %v57 = vpop.permute.xlu0 %56
    %vm58 = vcmask 23552
    %s59 = scalar_lea.vmem %s1, 12
    %60 = vst.msk [vmem:[%s59] sm:$0x1] %vm58, %v57
    %s61 = scalar_lea.vmem %s1, 43
    %62 = vst.msk [vmem:[%s61] sm:$0x2] %vm58, %v57
    %s63 = scalar_lea.vmem %s1, 74
    %64 = vst.msk [vmem:[%s63] sm:$0x4] %vm58, %v57
    %s65 = scalar_lea.vmem [#allocation0], 2
    %v66 = vld [vmem:[%s65] ss:$8 sm:$0x7]
    %67 = vrot.lane.b32.xlu0 %v66, 123
    %v68 = vpop.permute.xlu0 %67
    %vm69 = vcmask 23552
    %s70 = scalar_lea.vmem %s1, 23
    %71 = vst.msk [vmem:[%s70] sm:$0x1] %vm69, %v68
    %s72 = scalar_lea.vmem %s1, 54
    %73 = vst.msk [vmem:[%s72] sm:$0x2] %vm69, %v68
    %s74 = scalar_lea.vmem %s1, 85
    %75 = vst.msk [vmem:[%s74] sm:$0x4] %vm69, %v68
    %v76 = vld [vmem:[#allocation0] ss:$8 sm:$0x7]
    %77 = vrot.lane.b32.xlu0 %v76, 122
    %v78 = vpop.permute.xlu0 %77
    %vm79 = vcmask 23552
    %s80 = scalar_lea.vmem %s1, 2
    %81 = vst.msk [vmem:[%s80] sm:$0x1] %vm79, %v78
    %s82 = scalar_lea.vmem %s1, 33
    %83 = vst.msk [vmem:[%s82] sm:$0x2] %vm79, %v78
    %s84 = scalar_lea.vmem %s1, 64
    %85 = vst.msk [vmem:[%s84] sm:$0x4] %vm79, %v78
    %s86 = scalar_lea.vmem [#allocation0], 1
    %v87 = vld [vmem:[%s86] ss:$8 sm:$0x7]
    %88 = vrot.lane.b32.xlu0 %v87, 121
    %v89 = vpop.permute.xlu0 %88
    %vm90 = vcmask 23552
    %s91 = scalar_lea.vmem %s1, 13
    %92 = vst.msk [vmem:[%s91] sm:$0x1] %vm90, %v89
    %s93 = scalar_lea.vmem %s1, 44
    %94 = vst.msk [vmem:[%s93] sm:$0x2] %vm90, %v89
    %s95 = scalar_lea.vmem %s1, 75
    %96 = vst.msk [vmem:[%s95] sm:$0x4] %vm90, %v89
    %s97 = scalar_lea.vmem [#allocation0], 2
    %v98 = vld [vmem:[%s97] ss:$8 sm:$0x7]
    %99 = vrot.lane.b32.xlu0 %v98, 120
    %v100 = vpop.permute.xlu0 %99
    %vm101 = vcmask 23552
    %s102 = scalar_lea.vmem %s1, 24
    %103 = vst.msk [vmem:[%s102] sm:$0x1] %vm101, %v100
    %s104 = scalar_lea.vmem %s1, 55
    %105 = vst.msk [vmem:[%s104] sm:$0x2] %vm101, %v100
    %s106 = scalar_lea.vmem %s1, 86
    %107 = vst.msk [vmem:[%s106] sm:$0x4] %vm101, %v100
    %v108 = vld [vmem:[#allocation0] ss:$8 sm:$0x7]
    %109 = vrot.lane.b32.xlu0 %v108, 119
    %v110 = vpop.permute.xlu0 %109
    %vm111 = vcmask 23552
    %s112 = scalar_lea.vmem %s1, 3
    %113 = vst.msk [vmem:[%s112] sm:$0x1] %vm111, %v110
    %s114 = scalar_lea.vmem %s1, 34
    %115 = vst.msk [vmem:[%s114] sm:$0x2] %vm111, %v110
    %s116 = scalar_lea.vmem %s1, 65
    %117 = vst.msk [vmem:[%s116] sm:$0x4] %vm111, %v110
    %s118 = scalar_lea.vmem [#allocation0], 1
    %v119 = vld [vmem:[%s118] ss:$8 sm:$0x7]
    %120 = vrot.lane.b32.xlu0 %v119, 118
    %v121 = vpop.permute.xlu0 %120
    %vm122 = vcmask 23552
    %s123 = scalar_lea.vmem %s1, 14
    %124 = vst.msk [vmem:[%s123] sm:$0x1] %vm122, %v121
    %s125 = scalar_lea.vmem %s1, 45
    %126 = vst.msk [vmem:[%s125] sm:$0x2] %vm122, %v121
    %s127 = scalar_lea.vmem %s1, 76
    %128 = vst.msk [vmem:[%s127] sm:$0x4] %vm122, %v121
    %s129 = scalar_lea.vmem [#allocation0], 2
    %v130 = vld [vmem:[%s129] ss:$8 sm:$0x7]
    %131 = vrot.lane.b32.xlu0 %v130, 117
    %v132 = vpop.permute.xlu0 %131
    %vm133 = vcmask 23552
    %s134 = scalar_lea.vmem %s1, 25
    %135 = vst.msk [vmem:[%s134] sm:$0x1] %vm133, %v132
    %s136 = scalar_lea.vmem %s1, 56
    %137 = vst.msk [vmem:[%s136] sm:$0x2] %vm133, %v132
    %s138 = scalar_lea.vmem %s1, 87
    %139 = vst.msk [vmem:[%s138] sm:$0x4] %vm133, %v132
    %v140 = vld [vmem:[#allocation0] ss:$8 sm:$0x7]
    %141 = vrot.lane.b32.xlu0 %v140, 116
    %v142 = vpop.permute.xlu0 %141
    %vm143 = vcmask 23552
    %s144 = scalar_lea.vmem %s1, 4
    %145 = vst.msk [vmem:[%s144] sm:$0x1] %vm143, %v142
    %s146 = scalar_lea.vmem %s1, 35
    %147 = vst.msk [vmem:[%s146] sm:$0x2] %vm143, %v142
    %s148 = scalar_lea.vmem %s1, 66
    %149 = vst.msk [vmem:[%s148] sm:$0x4] %vm143, %v142
    %s150 = scalar_lea.vmem [#allocation0], 1
    %v151 = vld [vmem:[%s150] ss:$8 sm:$0x7]
    %152 = vrot.lane.b32.xlu0 %v151, 115
    %v153 = vpop.permute.xlu0 %152
    %vm154 = vcmask 23552
    %s155 = scalar_lea.vmem %s1, 15
    %156 = vst.msk [vmem:[%s155] sm:$0x1] %vm154, %v153
    %s157 = scalar_lea.vmem %s1, 46
    %158 = vst.msk [vmem:[%s157] sm:$0x2] %vm154, %v153
    %s159 = scalar_lea.vmem %s1, 77
    %160 = vst.msk [vmem:[%s159] sm:$0x4] %vm154, %v153
    %s161 = scalar_lea.vmem [#allocation0], 2
    %v162 = vld [vmem:[%s161] ss:$8 sm:$0x7]
    %163 = vrot.lane.b32.xlu0 %v162, 114
    %v164 = vpop.permute.xlu0 %163
    %vm165 = vcmask 23552
    %s166 = scalar_lea.vmem %s1, 26
    %167 = vst.msk [vmem:[%s166] sm:$0x1] %vm165, %v164
    %s168 = scalar_lea.vmem %s1, 57
    %169 = vst.msk [vmem:[%s168] sm:$0x2] %vm165, %v164
    %s170 = scalar_lea.vmem %s1, 88
    %171 = vst.msk [vmem:[%s170] sm:$0x4] %vm165, %v164
    %v172 = vld [vmem:[#allocation0] ss:$8 sm:$0x7]
    %173 = vrot.lane.b32.xlu0 %v172, 113
    %v174 = vpop.permute.xlu0 %173
    %vm175 = vcmask 23552
    %s176 = scalar_lea.vmem %s1, 5
    %177 = vst.msk [vmem:[%s176] sm:$0x1] %vm175, %v174
    %s178 = scalar_lea.vmem %s1, 36
    %179 = vst.msk [vmem:[%s178] sm:$0x2] %vm175, %v174
    %s180 = scalar_lea.vmem %s1, 67
    %181 = vst.msk [vmem:[%s180] sm:$0x4] %vm175, %v174
    %s182 = scalar_lea.vmem [#allocation0], 1
    %v183 = vld [vmem:[%s182] ss:$8 sm:$0x7]
    %184 = vrot.lane.b32.xlu0 %v183, 112
    %v185 = vpop.permute.xlu0 %184
    %vm186 = vcmask 23552
    %s187 = scalar_lea.vmem %s1, 16
    %188 = vst.msk [vmem:[%s187] sm:$0x1] %vm186, %v185
    %s189 = scalar_lea.vmem %s1, 47
    %190 = vst.msk [vmem:[%s189] sm:$0x2] %vm186, %v185
    %s191 = scalar_lea.vmem %s1, 78
    %192 = vst.msk [vmem:[%s191] sm:$0x4] %vm186, %v185
    %s193 = scalar_lea.vmem [#allocation0], 2
    %v194 = vld [vmem:[%s193] ss:$8 sm:$0x7]
    %195 = vrot.lane.b32.xlu0 %v194, 111
    %v196 = vpop.permute.xlu0 %195
    %vm197 = vcmask 23552
    %s198 = scalar_lea.vmem %s1, 27
    %199 = vst.msk [vmem:[%s198] sm:$0x1] %vm197, %v196
    %s200 = scalar_lea.vmem %s1, 58
    %201 = vst.msk [vmem:[%s200] sm:$0x2] %vm197, %v196
    %s202 = scalar_lea.vmem %s1, 89
    %203 = vst.msk [vmem:[%s202] sm:$0x4] %vm197, %v196
    %v204 = vld [vmem:[#allocation0] ss:$8 sm:$0x7]
    %205 = vrot.lane.b32.xlu0 %v204, 110
    %v206 = vpop.permute.xlu0 %205
    %vm207 = vcmask 23552
    %s208 = scalar_lea.vmem %s1, 6
    %209 = vst.msk [vmem:[%s208] sm:$0x1] %vm207, %v206
    %s210 = scalar_lea.vmem %s1, 37
    %211 = vst.msk [vmem:[%s210] sm:$0x2] %vm207, %v206
    %s212 = scalar_lea.vmem %s1, 68
    %213 = vst.msk [vmem:[%s212] sm:$0x4] %vm207, %v206
    %s214 = scalar_lea.vmem [#allocation0], 1
    %v215 = vld [vmem:[%s214] ss:$8 sm:$0x7]
    %216 = vrot.lane.b32.xlu0 %v215, 109
    %v217 = vpop.permute.xlu0 %216
    %vm218 = vcmask 23552
    %s219 = scalar_lea.vmem %s1, 17
    %220 = vst.msk [vmem:[%s219] sm:$0x1] %vm218, %v217
    %s221 = scalar_lea.vmem %s1, 48
    %222 = vst.msk [vmem:[%s221] sm:$0x2] %vm218, %v217
    %s223 = scalar_lea.vmem %s1, 79
    %224 = vst.msk [vmem:[%s223] sm:$0x4] %vm218, %v217
    %s225 = scalar_lea.vmem [#allocation0], 2
    %v226 = vld [vmem:[%s225] ss:$8 sm:$0x7]
    %227 = vrot.lane.b32.xlu0 %v226, 108
    %v228 = vpop.permute.xlu0 %227
    %vm229 = vcmask 23552
    %s230 = scalar_lea.vmem %s1, 28
    %231 = vst.msk [vmem:[%s230] sm:$0x1] %vm229, %v228
    %s232 = scalar_lea.vmem %s1, 59
    %233 = vst.msk [vmem:[%s232] sm:$0x2] %vm229, %v228
    %s234 = scalar_lea.vmem %s1, 90
    %235 = vst.msk [vmem:[%s234] sm:$0x4] %vm229, %v228
    %v236 = vld [vmem:[#allocation0] ss:$8 sm:$0x7]
    %237 = vrot.lane.b32.xlu0 %v236, 107
    %v238 = vpop.permute.xlu0 %237
    %vm239 = vcmask 23552
    %s240 = scalar_lea.vmem %s1, 7
    %241 = vst.msk [vmem:[%s240] sm:$0x1] %vm239, %v238
    %s242 = scalar_lea.vmem %s1, 38
    %243 = vst.msk [vmem:[%s242] sm:$0x2] %vm239, %v238
    %s244 = scalar_lea.vmem %s1, 69
    %245 = vst.msk [vmem:[%s244] sm:$0x4] %vm239, %v238
    %s246 = scalar_lea.vmem [#allocation0], 1
    %v247 = vld [vmem:[%s246] ss:$8 sm:$0x7]
    %248 = vrot.lane.b32.xlu0 %v247, 106
    %v249 = vpop.permute.xlu0 %248
    %vm250 = vcmask 23552
    %s251 = scalar_lea.vmem %s1, 18
    %252 = vst.msk [vmem:[%s251] sm:$0x1] %vm250, %v249
    %s253 = scalar_lea.vmem %s1, 49
    %254 = vst.msk [vmem:[%s253] sm:$0x2] %vm250, %v249
    %s255 = scalar_lea.vmem %s1, 80
    %256 = vst.msk [vmem:[%s255] sm:$0x4] %vm250, %v249
    %s257 = scalar_lea.vmem [#allocation0], 2
    %v258 = vld [vmem:[%s257] ss:$8 sm:$0x7]
    %259 = vrot.lane.b32.xlu0 %v258, 105
    %v260 = vpop.permute.xlu0 %259
    %vm261 = vcmask 23552
    %s262 = scalar_lea.vmem %s1, 29
    %263 = vst.msk [vmem:[%s262] sm:$0x1] %vm261, %v260
    %s264 = scalar_lea.vmem %s1, 60
    %265 = vst.msk [vmem:[%s264] sm:$0x2] %vm261, %v260
    %s266 = scalar_lea.vmem %s1, 91
    %267 = vst.msk [vmem:[%s266] sm:$0x4] %vm261, %v260
    %v268 = vld [vmem:[#allocation0] ss:$8 sm:$0x7]
    %269 = vrot.lane.b32.xlu0 %v268, 104
    %v270 = vpop.permute.xlu0 %269
    %vm271 = vcmask 23552
    %s272 = scalar_lea.vmem %s1, 8
    %273 = vst.msk [vmem:[%s272] sm:$0x1] %vm271, %v270
    %s274 = scalar_lea.vmem %s1, 39
    %275 = vst.msk [vmem:[%s274] sm:$0x2] %vm271, %v270
    %s276 = scalar_lea.vmem %s1, 70
    %277 = vst.msk [vmem:[%s276] sm:$0x4] %vm271, %v270
    %s278 = scalar_lea.vmem [#allocation0], 1
    %v279 = vld [vmem:[%s278] ss:$8 sm:$0x7]
    %280 = vrot.lane.b32.xlu0 %v279, 103
    %v281 = vpop.permute.xlu0 %280
    %vm282 = vcmask 23552
    %s283 = scalar_lea.vmem %s1, 19
    %284 = vst.msk [vmem:[%s283] sm:$0x1] %vm282, %v281
    %s285 = scalar_lea.vmem %s1, 50
    %286 = vst.msk [vmem:[%s285] sm:$0x2] %vm282, %v281
    %s287 = scalar_lea.vmem %s1, 81
    %288 = vst.msk [vmem:[%s287] sm:$0x4] %vm282, %v281
    %s289 = scalar_lea.vmem [#allocation0], 2
    %v290 = vld [vmem:[%s289] ss:$8 sm:$0x7]
    %291 = vrot.lane.b32.xlu0 %v290, 102
    %v292 = vpop.permute.xlu0 %291
    %vm293 = vcmask 23552
    %s294 = scalar_lea.vmem %s1, 30
    %295 = vst.msk [vmem:[%s294] sm:$0x1] %vm293, %v292
    %s296 = scalar_lea.vmem %s1, 61
    %297 = vst.msk [vmem:[%s296] sm:$0x2] %vm293, %v292
    %s298 = scalar_lea.vmem %s1, 92
    %299 = vst.msk [vmem:[%s298] sm:$0x4] %vm293, %v292
    %v300 = vld [vmem:[#allocation0] ss:$8 sm:$0x7]
    %301 = vrot.lane.b32.xlu0 %v300, 101
    %v302 = vpop.permute.xlu0 %301
    %vm303 = vcmask 23552
    %s304 = scalar_lea.vmem %s1, 9
    %305 = vst.msk [vmem:[%s304] sm:$0x1] %vm303, %v302
    %s306 = scalar_lea.vmem %s1, 40
    %307 = vst.msk [vmem:[%s306] sm:$0x2] %vm303, %v302
    %s308 = scalar_lea.vmem %s1, 71
    %309 = vst.msk [vmem:[%s308] sm:$0x4] %vm303, %v302
    %s310 = scalar_lea.vmem [#allocation0], 1
    %v311 = vld [vmem:[%s310] ss:$8 sm:$0x7]
    %312 = vrot.lane.b32.xlu0 %v311, 100
    %v313 = vpop.permute.xlu0 %312
    %vm314 = vcmask 23552
    %s315 = scalar_lea.vmem %s1, 20
    %316 = vst.msk [vmem:[%s315] sm:$0x1] %vm314, %v313
    %s317 = scalar_lea.vmem %s1, 51
    %318 = vst.msk [vmem:[%s317] sm:$0x2] %vm314, %v313
    %s319 = scalar_lea.vmem %s1, 82
    %320 = vst.msk [vmem:[%s319] sm:$0x4] %vm314, %v313
    %s321 = scalar_lea.vmem [#allocation0], 2
    %v322 = vld [vmem:[%s321] ss:$8 sm:$0x7]
    %323 = vrot.lane.b32.xlu0 %v322, 99
    %v324 = vpop.permute.xlu0 %323
    %vm325 = vcmask 23552
    %s326 = scalar_lea.vmem %s1, 31
    %327 = vst.msk [vmem:[%s326] sm:$0x1] %vm325, %v324
    %s328 = scalar_lea.vmem %s1, 62
    %329 = vst.msk [vmem:[%s328] sm:$0x2] %vm325, %v324
    %s330 = scalar_lea.vmem %s1, 93
    %331 = vst.msk [vmem:[%s330] sm:$0x4] %vm325, %v324
    %v332 = vld [vmem:[#allocation0] ss:$8 sm:$0x7]
    %333 = vrot.lane.b32.xlu0 %v332, 98
    %v334 = vpop.permute.xlu0 %333
    %vm335 = vcmask 15360
    %s336 = scalar_lea.vmem %s1, 10
    %337 = vst.msk [vmem:[%s336] sm:$0x1] %vm335, %v334
    %s338 = scalar_lea.vmem %s1, 41
    %339 = vst.msk [vmem:[%s338] sm:$0x2] %vm335, %v334
    %s340 = scalar_lea.vmem %s1, 72
    %341 = vst.msk [vmem:[%s340] sm:$0x4] %vm335, %v334
    %s342 = scalar_lea.vmem [#allocation0], 1
    %v343 = vld [vmem:[%s342] ss:$8 sm:$0x7]
    %344 = vrot.lane.b32.xlu0 %v343, 97
    %v345 = vpop.permute.xlu0 %344
    %vm346 = vcmask 7168
    %s347 = scalar_lea.vmem %s1, 21
    %348 = vst.msk [vmem:[%s347] sm:$0x1] %vm346, %v345
    %s349 = scalar_lea.vmem %s1, 52
    %350 = vst.msk [vmem:[%s349] sm:$0x2] %vm346, %v345
    %s351 = scalar_lea.vmem %s1, 83
    %352 = vst.msk [vmem:[%s351] sm:$0x4] %vm346, %v345
    %s353 = scalar_lea.vmem [#allocation0], 1
    %v354 = vld [vmem:[%s353] ss:$8 sm:$0x7]
    %355 = vrot.lane.b32.xlu0 %v354, 2
    %v356 = vpop.permute.xlu0 %355
    %vm357 = vcmask 23568
    %s358 = scalar_lea.vmem %s1, 10
    %359 = vst.msk [vmem:[%s358] sm:$0x1] %vm357, %v356
    %s360 = scalar_lea.vmem %s1, 41
    %361 = vst.msk [vmem:[%s360] sm:$0x2] %vm357, %v356
    %s362 = scalar_lea.vmem %s1, 72
    %363 = vst.msk [vmem:[%s362] sm:$0x4] %vm357, %v356
    %s364 = scalar_lea.vmem [#allocation0], 2
    %v365 = vld [vmem:[%s364] ss:$8 sm:$0x7]
    %366 = vrot.lane.b32.xlu0 %v365, 1
    %v367 = vpop.permute.xlu0 %366
    %vm368 = vcmask 23560
    %s369 = scalar_lea.vmem %s1, 21
    %370 = vst.msk [vmem:[%s369] sm:$0x1] %vm368, %v367
    %s371 = scalar_lea.vmem %s1, 52
    %372 = vst.msk [vmem:[%s371] sm:$0x2] %vm368, %v367
    %s373 = scalar_lea.vmem %s1, 83
    %374 = vst.msk [vmem:[%s373] sm:$0x4] %vm368, %v367

// kernel: mul.11
$region0: #{mul.11}
  %s0 = inlined_call_operand.vmem [shape: f32[96,3], index: 0, kind: input, shape index: {}]
  %s1 = inlined_call_operand.vmem [shape: f32[32,3,3], index: 1, kind: output, shape index: {}]
  $region1: #{mul.11} parent=0
    #allocation0 [shape = 'u8[4096]{0}', space=vmem, size = 0x1000, scoped, tag = 'scoped mem for input reshape']
    %s3 = sshllo.u32 0, 4
    %v4 = vld [vmem:[%s0] sm:%s3]
    %5 = vst [vmem:[#allocation0] sm:%s3] %v4
    %v6 = vld [vmem:[#allocation0] sm:$0x7]
    %vm7 = vcmask 23552
    %8 = vst.msk [vmem:[%s1] sm:$0x1] %vm7, %v6
    %s9 = scalar_lea.vmem %s1, 31
    %10 = vst.msk [vmem:[%s9] sm:$0x2] %vm7, %v6
    %s11 = scalar_lea.vmem %s1, 62
    %12 = vst.msk [vmem:[%s11] sm:$0x4] %vm7, %v6
    %v13 = vld [vmem:[#allocation0] sm:$0x7]
    %14 = vrot.lane.b32.xlu0 %v13, 125
    %v15 = vpop.permute.xlu0 %14
    %vm16 = vcmask 23552
    %s17 = scalar_lea.vmem %s1, 1
    %18 = vst.msk [vmem:[%s17] sm:$0x1] %vm16, %v15
    %s19 = scalar_lea.vmem %s1, 32
    %20 = vst.msk [vmem:[%s19] sm:$0x2] %vm16, %v15
    %s21 = scalar_lea.vmem %s1, 63
    %22 = vst.msk [vmem:[%s21] sm:$0x4] %vm16, %v15
    %v23 = vld [vmem:[#allocation0] sm:$0x7]
    %24 = vrot.lane.b32.xlu0 %v23, 122
    %v25 = vpop.permute.xlu0 %24
    %vm26 = vcmask 23552
    %s27 = scalar_lea.vmem %s1, 2
    %28 = vst.msk [vmem:[%s27] sm:$0x1] %vm26, %v25
    %s29 = scalar_lea.vmem %s1, 33
    %30 = vst.msk [vmem:[%s29] sm:$0x2] %vm26, %v25
    %s31 = scalar_lea.vmem %s1, 64
    %32 = vst.msk [vmem:[%s31] sm:$0x4] %vm26, %v25
    %v33 = vld [vmem:[#allocation0] sm:$0x7]
    %34 = vrot.lane.b32.xlu0 %v33, 119
    %v35 = vpop.permute.xlu0 %34
    %vm36 = vcmask 23552
    %s37 = scalar_lea.vmem %s1, 3
    %38 = vst.msk [vmem:[%s37] sm:$0x1] %vm36, %v35
    %s39 = scalar_lea.vmem %s1, 34
    %40 = vst.msk [vmem:[%s39] sm:$0x2] %vm36, %v35
    %s41 = scalar_lea.vmem %s1, 65
    %42 = vst.msk [vmem:[%s41] sm:$0x4] %vm36, %v35
    %v43 = vld [vmem:[#allocation0] sm:$0x7]
    %44 = vrot.lane.b32.xlu0 %v43, 116
    %v45 = vpop.permute.xlu0 %44
    %vm46 = vcmask 23552
    %s47 = scalar_lea.vmem %s1, 4
    %48 = vst.msk [vmem:[%s47] sm:$0x1] %vm46, %v45
    %s49 = scalar_lea.vmem %s1, 35
    %50 = vst.msk [vmem:[%s49] sm:$0x2] %vm46, %v45
    %s51 = scalar_lea.vmem %s1, 66
    %52 = vst.msk [vmem:[%s51] sm:$0x4] %vm46, %v45
    %v53 = vld [vmem:[#allocation0] sm:$0x7]
    %54 = vrot.lane.b32.xlu0 %v53, 113
    %v55 = vpop.permute.xlu0 %54
    %vm56 = vcmask 23552
    %s57 = scalar_lea.vmem %s1, 5
    %58 = vst.msk [vmem:[%s57] sm:$0x1] %vm56, %v55
    %s59 = scalar_lea.vmem %s1, 36
    %60 = vst.msk [vmem:[%s59] sm:$0x2] %vm56, %v55
    %s61 = scalar_lea.vmem %s1, 67
    %62 = vst.msk [vmem:[%s61] sm:$0x4] %vm56, %v55
    %v63 = vld [vmem:[#allocation0] sm:$0x7]
    %64 = vrot.lane.b32.xlu0 %v63, 110
    %v65 = vpop.permute.xlu0 %64
    %vm66 = vcmask 23552
    %s67 = scalar_lea.vmem %s1, 6
    %68 = vst.msk [vmem:[%s67] sm:$0x1] %vm66, %v65
    %s69 = scalar_lea.vmem %s1, 37
    %70 = vst.msk [vmem:[%s69] sm:$0x2] %vm66, %v65
    %s71 = scalar_lea.vmem %s1, 68
    %72 = vst.msk [vmem:[%s71] sm:$0x4] %vm66, %v65
    %v73 = vld [vmem:[#allocation0] sm:$0x7]
    %74 = vrot.lane.b32.xlu0 %v73, 107
    %v75 = vpop.permute.xlu0 %74
    %vm76 = vcmask 23552
    %s77 = scalar_lea.vmem %s1, 7
    %78 = vst.msk [vmem:[%s77] sm:$0x1] %vm76, %v75
    %s79 = scalar_lea.vmem %s1, 38
    %80 = vst.msk [vmem:[%s79] sm:$0x2] %vm76, %v75
    %s81 = scalar_lea.vmem %s1, 69
    %82 = vst.msk [vmem:[%s81] sm:$0x4] %vm76, %v75
    %v83 = vld [vmem:[#allocation0] sm:$0x7]
    %84 = vrot.lane.b32.xlu0 %v83, 104
    %v85 = vpop.permute.xlu0 %84
    %vm86 = vcmask 23552
    %s87 = scalar_lea.vmem %s1, 8
    %88 = vst.msk [vmem:[%s87] sm:$0x1] %vm86, %v85
    %s89 = scalar_lea.vmem %s1, 39
    %90 = vst.msk [vmem:[%s89] sm:$0x2] %vm86, %v85
    %s91 = scalar_lea.vmem %s1, 70
    %92 = vst.msk [vmem:[%s91] sm:$0x4] %vm86, %v85
    %v93 = vld [vmem:[#allocation0] sm:$0x7]
    %94 = vrot.lane.b32.xlu0 %v93, 101
    %v95 = vpop.permute.xlu0 %94
    %vm96 = vcmask 23552
    %s97 = scalar_lea.vmem %s1, 9
    %98 = vst.msk [vmem:[%s97] sm:$0x1] %vm96, %v95
    %s99 = scalar_lea.vmem %s1, 40
    %100 = vst.msk [vmem:[%s99] sm:$0x2] %vm96, %v95
    %s101 = scalar_lea.vmem %s1, 71
    %102 = vst.msk [vmem:[%s101] sm:$0x4] %vm96, %v95
    %v103 = vld [vmem:[#allocation0] sm:$0x7]
    %104 = vrot.lane.b32.xlu0 %v103, 98
    %v105 = vpop.permute.xlu0 %104
    %vm106 = vcmask 23552
    %s107 = scalar_lea.vmem %s1, 10
    %108 = vst.msk [vmem:[%s107] sm:$0x1] %vm106, %v105
    %s109 = scalar_lea.vmem %s1, 41
    %110 = vst.msk [vmem:[%s109] sm:$0x2] %vm106, %v105
    %s111 = scalar_lea.vmem %s1, 72
    %112 = vst.msk [vmem:[%s111] sm:$0x4] %vm106, %v105
    %v113 = vld [vmem:[#allocation0] sm:$0x7]
    %114 = vrot.lane.b32.xlu0 %v113, 95
    %v115 = vpop.permute.xlu0 %114
    %vm116 = vcmask 23552
    %s117 = scalar_lea.vmem %s1, 11
    %118 = vst.msk [vmem:[%s117] sm:$0x1] %vm116, %v115
    %s119 = scalar_lea.vmem %s1, 42
    %120 = vst.msk [vmem:[%s119] sm:$0x2] %vm116, %v115
    %s121 = scalar_lea.vmem %s1, 73
    %122 = vst.msk [vmem:[%s121] sm:$0x4] %vm116, %v115
    %v123 = vld [vmem:[#allocation0] sm:$0x7]
    %124 = vrot.lane.b32.xlu0 %v123, 92
    %v125 = vpop.permute.xlu0 %124
    %vm126 = vcmask 23552
    %s127 = scalar_lea.vmem %s1, 12
    %128 = vst.msk [vmem:[%s127] sm:$0x1] %vm126, %v125
    %s129 = scalar_lea.vmem %s1, 43
    %130 = vst.msk [vmem:[%s129] sm:$0x2] %vm126, %v125
    %s131 = scalar_lea.vmem %s1, 74
    %132 = vst.msk [vmem:[%s131] sm:$0x4] %vm126, %v125
    %v133 = vld [vmem:[#allocation0] sm:$0x7]
    %134 = vrot.lane.b32.xlu0 %v133, 89
    %v135 = vpop.permute.xlu0 %134
    %vm136 = vcmask 23552
    %s137 = scalar_lea.vmem %s1, 13
    %138 = vst.msk [vmem:[%s137] sm:$0x1] %vm136, %v135
    %s139 = scalar_lea.vmem %s1, 44
    %140 = vst.msk [vmem:[%s139] sm:$0x2] %vm136, %v135
    %s141 = scalar_lea.vmem %s1, 75
    %142 = vst.msk [vmem:[%s141] sm:$0x4] %vm136, %v135
    %v143 = vld [vmem:[#allocation0] sm:$0x7]
    %144 = vrot.lane.b32.xlu0 %v143, 86
    %v145 = vpop.permute.xlu0 %144
    %vm146 = vcmask 23552
    %s147 = scalar_lea.vmem %s1, 14
    %148 = vst.msk [vmem:[%s147] sm:$0x1] %vm146, %v145
    %s149 = scalar_lea.vmem %s1, 45
    %150 = vst.msk [vmem:[%s149] sm:$0x2] %vm146, %v145
    %s151 = scalar_lea.vmem %s1, 76
    %152 = vst.msk [vmem:[%s151] sm:$0x4] %vm146, %v145
    %v153 = vld [vmem:[#allocation0] sm:$0x7]
    %154 = vrot.lane.b32.xlu0 %v153, 83
    %v155 = vpop.permute.xlu0 %154
    %vm156 = vcmask 23552
    %s157 = scalar_lea.vmem %s1, 15
    %158 = vst.msk [vmem:[%s157] sm:$0x1] %vm156, %v155
    %s159 = scalar_lea.vmem %s1, 46
    %160 = vst.msk [vmem:[%s159] sm:$0x2] %vm156, %v155
    %s161 = scalar_lea.vmem %s1, 77
    %162 = vst.msk [vmem:[%s161] sm:$0x4] %vm156, %v155
    %v163 = vld [vmem:[#allocation0] sm:$0x7]
    %164 = vrot.lane.b32.xlu0 %v163, 80
    %v165 = vpop.permute.xlu0 %164
    %vm166 = vcmask 23552
    %s167 = scalar_lea.vmem %s1, 16
    %168 = vst.msk [vmem:[%s167] sm:$0x1] %vm166, %v165
    %s169 = scalar_lea.vmem %s1, 47
    %170 = vst.msk [vmem:[%s169] sm:$0x2] %vm166, %v165
    %s171 = scalar_lea.vmem %s1, 78
    %172 = vst.msk [vmem:[%s171] sm:$0x4] %vm166, %v165
    %v173 = vld [vmem:[#allocation0] sm:$0x7]
    %174 = vrot.lane.b32.xlu0 %v173, 77
    %v175 = vpop.permute.xlu0 %174
    %vm176 = vcmask 23552
    %s177 = scalar_lea.vmem %s1, 17
    %178 = vst.msk [vmem:[%s177] sm:$0x1] %vm176, %v175
    %s179 = scalar_lea.vmem %s1, 48
    %180 = vst.msk [vmem:[%s179] sm:$0x2] %vm176, %v175
    %s181 = scalar_lea.vmem %s1, 79
    %182 = vst.msk [vmem:[%s181] sm:$0x4] %vm176, %v175
    %v183 = vld [vmem:[#allocation0] sm:$0x7]
    %184 = vrot.lane.b32.xlu0 %v183, 74
    %v185 = vpop.permute.xlu0 %184
    %vm186 = vcmask 23552
    %s187 = scalar_lea.vmem %s1, 18
    %188 = vst.msk [vmem:[%s187] sm:$0x1] %vm186, %v185
    %s189 = scalar_lea.vmem %s1, 49
    %190 = vst.msk [vmem:[%s189] sm:$0x2] %vm186, %v185
    %s191 = scalar_lea.vmem %s1, 80
    %192 = vst.msk [vmem:[%s191] sm:$0x4] %vm186, %v185
    %v193 = vld [vmem:[#allocation0] sm:$0x7]
    %194 = vrot.lane.b32.xlu0 %v193, 71
    %v195 = vpop.permute.xlu0 %194
    %vm196 = vcmask 23552
    %s197 = scalar_lea.vmem %s1, 19
    %198 = vst.msk [vmem:[%s197] sm:$0x1] %vm196, %v195
    %s199 = scalar_lea.vmem %s1, 50
    %200 = vst.msk [vmem:[%s199] sm:$0x2] %vm196, %v195
    %s201 = scalar_lea.vmem %s1, 81
    %202 = vst.msk [vmem:[%s201] sm:$0x4] %vm196, %v195
    %v203 = vld [vmem:[#allocation0] sm:$0x7]
    %204 = vrot.lane.b32.xlu0 %v203, 68
    %v205 = vpop.permute.xlu0 %204
    %vm206 = vcmask 23552
    %s207 = scalar_lea.vmem %s1, 20
    %208 = vst.msk [vmem:[%s207] sm:$0x1] %vm206, %v205
    %s209 = scalar_lea.vmem %s1, 51
    %210 = vst.msk [vmem:[%s209] sm:$0x2] %vm206, %v205
    %s211 = scalar_lea.vmem %s1, 82
    %212 = vst.msk [vmem:[%s211] sm:$0x4] %vm206, %v205
    %v213 = vld [vmem:[#allocation0] sm:$0x7]
    %214 = vrot.lane.b32.xlu0 %v213, 65
    %v215 = vpop.permute.xlu0 %214
    %vm216 = vcmask 23552
    %s217 = scalar_lea.vmem %s1, 21
    %218 = vst.msk [vmem:[%s217] sm:$0x1] %vm216, %v215
    %s219 = scalar_lea.vmem %s1, 52
    %220 = vst.msk [vmem:[%s219] sm:$0x2] %vm216, %v215
    %s221 = scalar_lea.vmem %s1, 83
    %222 = vst.msk [vmem:[%s221] sm:$0x4] %vm216, %v215
    %v223 = vld [vmem:[#allocation0] sm:$0x7]
    %224 = vrot.lane.b32.xlu0 %v223, 62
    %v225 = vpop.permute.xlu0 %224
    %vm226 = vcmask 23552
    %s227 = scalar_lea.vmem %s1, 22
    %228 = vst.msk [vmem:[%s227] sm:$0x1] %vm226, %v225
    %s229 = scalar_lea.vmem %s1, 53
    %230 = vst.msk [vmem:[%s229] sm:$0x2] %vm226, %v225
    %s231 = scalar_lea.vmem %s1, 84
    %232 = vst.msk [vmem:[%s231] sm:$0x4] %vm226, %v225
    %v233 = vld [vmem:[#allocation0] sm:$0x7]
    %234 = vrot.lane.b32.xlu0 %v233, 59
    %v235 = vpop.permute.xlu0 %234
    %vm236 = vcmask 23552
    %s237 = scalar_lea.vmem %s1, 23
    %238 = vst.msk [vmem:[%s237] sm:$0x1] %vm236, %v235
    %s239 = scalar_lea.vmem %s1, 54
    %240 = vst.msk [vmem:[%s239] sm:$0x2] %vm236, %v235
    %s241 = scalar_lea.vmem %s1, 85
    %242 = vst.msk [vmem:[%s241] sm:$0x4] %vm236, %v235
    %v243 = vld [vmem:[#allocation0] sm:$0x7]
    %244 = vrot.lane.b32.xlu0 %v243, 56
    %v245 = vpop.permute.xlu0 %244
    %vm246 = vcmask 23552
    %s247 = scalar_lea.vmem %s1, 24
    %248 = vst.msk [vmem:[%s247] sm:$0x1] %vm246, %v245
    %s249 = scalar_lea.vmem %s1, 55
    %250 = vst.msk [vmem:[%s249] sm:$0x2] %vm246, %v245
    %s251 = scalar_lea.vmem %s1, 86
    %252 = vst.msk [vmem:[%s251] sm:$0x4] %vm246, %v245
    %v253 = vld [vmem:[#allocation0] sm:$0x7]
    %254 = vrot.lane.b32.xlu0 %v253, 53
    %v255 = vpop.permute.xlu0 %254
    %vm256 = vcmask 23552
    %s257 = scalar_lea.vmem %s1, 25
    %258 = vst.msk [vmem:[%s257] sm:$0x1] %vm256, %v255
    %s259 = scalar_lea.vmem %s1, 56
    %260 = vst.msk [vmem:[%s259] sm:$0x2] %vm256, %v255
    %s261 = scalar_lea.vmem %s1, 87
    %262 = vst.msk [vmem:[%s261] sm:$0x4] %vm256, %v255
    %v263 = vld [vmem:[#allocation0] sm:$0x7]
    %264 = vrot.lane.b32.xlu0 %v263, 50
    %v265 = vpop.permute.xlu0 %264
    %vm266 = vcmask 23552
    %s267 = scalar_lea.vmem %s1, 26
    %268 = vst.msk [vmem:[%s267] sm:$0x1] %vm266, %v265
    %s269 = scalar_lea.vmem %s1, 57
    %270 = vst.msk [vmem:[%s269] sm:$0x2] %vm266, %v265
    %s271 = scalar_lea.vmem %s1, 88
    %272 = vst.msk [vmem:[%s271] sm:$0x4] %vm266, %v265
    %v273 = vld [vmem:[#allocation0] sm:$0x7]
    %274 = vrot.lane.b32.xlu0 %v273, 47
    %v275 = vpop.permute.xlu0 %274
    %vm276 = vcmask 23552
    %s277 = scalar_lea.vmem %s1, 27
    %278 = vst.msk [vmem:[%s277] sm:$0x1] %vm276, %v275
    %s279 = scalar_lea.vmem %s1, 58
    %280 = vst.msk [vmem:[%s279] sm:$0x2] %vm276, %v275
    %s281 = scalar_lea.vmem %s1, 89
    %282 = vst.msk [vmem:[%s281] sm:$0x4] %vm276, %v275
    %v283 = vld [vmem:[#allocation0] sm:$0x7]
    %284 = vrot.lane.b32.xlu0 %v283, 44
    %v285 = vpop.permute.xlu0 %284
    %vm286 = vcmask 23552
    %s287 = scalar_lea.vmem %s1, 28
    %288 = vst.msk [vmem:[%s287] sm:$0x1] %vm286, %v285
    %s289 = scalar_lea.vmem %s1, 59
    %290 = vst.msk [vmem:[%s289] sm:$0x2] %vm286, %v285
    %s291 = scalar_lea.vmem %s1, 90
    %292 = vst.msk [vmem:[%s291] sm:$0x4] %vm286, %v285
    %v293 = vld [vmem:[#allocation0] sm:$0x7]
    %294 = vrot.lane.b32.xlu0 %v293, 41
    %v295 = vpop.permute.xlu0 %294
    %vm296 = vcmask 23552
    %s297 = scalar_lea.vmem %s1, 29
    %298 = vst.msk [vmem:[%s297] sm:$0x1] %vm296, %v295
    %s299 = scalar_lea.vmem %s1, 60
    %300 = vst.msk [vmem:[%s299] sm:$0x2] %vm296, %v295
    %s301 = scalar_lea.vmem %s1, 91
    %302 = vst.msk [vmem:[%s301] sm:$0x4] %vm296, %v295
    %v303 = vld [vmem:[#allocation0] sm:$0x7]
    %304 = vrot.lane.b32.xlu0 %v303, 38
    %v305 = vpop.permute.xlu0 %304
    %vm306 = vcmask 23552
    %s307 = scalar_lea.vmem %s1, 30
    %308 = vst.msk [vmem:[%s307] sm:$0x1] %vm306, %v305
    %s309 = scalar_lea.vmem %s1, 61
    %310 = vst.msk [vmem:[%s309] sm:$0x2] %vm306, %v305
    %s311 = scalar_lea.vmem %s1, 92
    %312 = vst.msk [vmem:[%s311] sm:$0x4] %vm306, %v305
    %v313 = vld [vmem:[#allocation0] sm:$0x7]
    %314 = vrot.lane.b32.xlu0 %v313, 35
    %v315 = vpop.permute.xlu0 %314
    %vm316 = vcmask 23552
    %s317 = scalar_lea.vmem %s1, 31
    %318 = vst.msk [vmem:[%s317] sm:$0x1] %vm316, %v315
    %s319 = scalar_lea.vmem %s1, 62
    %320 = vst.msk [vmem:[%s319] sm:$0x2] %vm316, %v315
    %s321 = scalar_lea.vmem %s1, 93
    %322 = vst.msk [vmem:[%s321] sm:$0x4] %vm316, %v315

// kernel: gapnet_cls_forward.1
$region0: #{gapnet_cls_forward.1}
  #allocation0 [shape = 'u32[]', space=smem, size = 0x4, offset = 0x4, fixed_abs, tag = 'smem constant byte address 0x4 - core index']
  #allocation1 [shape = 'u32[144,128]{1,0:T(1,128)}', space=vmem, size = 0x12000, scoped, tag = 'internal scratch']
  #allocation2 [shape = 'f32[1,1]{1,0:T(1,128)S(1)}', space=vmem, size = 0x200, scoped, tag = 'scoped memory for gapnet_cls_forward.1']
  %s0 = inlined_call_operand.vmem [shape: f32[32,3], index: 0, kind: input, shape index: {}]
  %s1 = inlined_call_operand.vmem [shape: f32[32,27], index: 1, kind: input, shape index: {}]
  %s2 = inlined_call_operand.vmem [shape: f32[32,30], index: 2, kind: input, shape index: {}]
  %s3 = inlined_call_operand.vmem [shape: f32[3,1024], index: 3, kind: input, shape index: {}]
  %s4 = inlined_call_operand.vmem [shape: f32[1,1024], index: 4, kind: input, shape index: {}]
  %s5 = inlined_call_operand.vmem [shape: f32[1024,9], index: 5, kind: input, shape index: {}]
  %s6 = inlined_call_operand.vmem [shape: f32[1,9], index: 6, kind: input, shape index: {}]
  %s7 = inlined_call_operand.vmem [shape: f32[30,160], index: 7, kind: input, shape index: {}]
  %s8 = inlined_call_operand.vmem [shape: f32[1,160], index: 8, kind: input, shape index: {}]
  %s9 = inlined_call_operand.vmem [shape: f32[30,10], index: 9, kind: input, shape index: {}]
  %s10 = inlined_call_operand.vmem [shape: f32[1,10], index: 10, kind: input, shape index: {}]
  %s11 = inlined_call_operand.vmem [shape: f32[1,3], index: 11, kind: input, shape index: {}]
  %s12 = inlined_call_operand.<no memory space> [shape: f32[1,1], index: 12, kind: input, shape index: {}]
  %s13 = inlined_call_operand.vmem [shape: f32[3,128], index: 13, kind: input, shape index: {}]
  %s14 = inlined_call_operand.vmem [shape: f32[16,128], index: 14, kind: input, shape index: {}]
  %s15 = inlined_call_operand.vmem [shape: f32[1,128], index: 15, kind: input, shape index: {}]
  %s16 = inlined_call_operand.vmem [shape: f32[128,1024], index: 16, kind: input, shape index: {}]
  %s17 = inlined_call_operand.vmem [shape: f32[16,1024], index: 17, kind: input, shape index: {}]
  %s18 = inlined_call_operand.vmem [shape: f32[1,1024], index: 18, kind: input, shape index: {}]
  %s19 = inlined_call_operand.vmem [shape: f32[1024,3], index: 19, kind: input, shape index: {}]
  %s20 = inlined_call_operand.vmem [shape: f32[1,3], index: 20, kind: input, shape index: {}]
  %s21 = inlined_call_operand.hbm [shape: f32[1,3], index: 21, kind: output, shape index: {}]
  %s22 = sld [smem:[#allocation0]]
  $region94: #{gapnet_cls_forward.1} parent=0
    _
  %s24 = ssub.s32 1, %s22
  %s25 = scalar_select 0, %s24, %s22
  %v26 = vstv %s12
  %27 = vst [vmem:[#allocation2] sm:$0x1] %v26
  $region1: #{gapnet_cls_forward.1} parent=0
    #allocation3 [shape = 'u8[512]{0}', space=vmem, size = 0x400, scoped, tag = 'output window, operand 0, single buffered']
    #allocation4 [shape = 's32[1]{0}', space=sflag, size = 0x4, scoped, tag = 'scoped memory for gapnet_cls_forward.1']
    %28 = vsyncpa [#allocation4], 0
    // Predicated region
    $region2: #{gapnet_cls_forward.1} parent=1 // pred_check
      _
    $region3: #{gapnet_cls_forward.1} parent=1 // pred_check_branch
      %30 = sbr.rel (0) target = $region5
    $region4: #{gapnet_cls_forward.1} parent=1 // pred_region
      _
    $region5: #{gapnet_cls_forward.1} parent=1 // pred_fallthru
      _
    // Predicated region
    $region6: #{gapnet_cls_forward.1} parent=1 // pred_check
      _
    $region7: #{gapnet_cls_forward.1} parent=1 // pred_check_branch
      %32 = sbr.rel (0) target = $region9
    $region8: #{gapnet_cls_forward.1} parent=1 // pred_region
      _
    $region9: #{gapnet_cls_forward.1} parent=1 // pred_fallthru
      _
    // Predicated region
    $region10: #{gapnet_cls_forward.1} parent=1 // pred_check
      _
    $region11: #{gapnet_cls_forward.1} parent=1 // pred_check_branch
      %34 = sbr.rel (0) target = $region13
    $region12: #{gapnet_cls_forward.1} parent=1 // pred_region
      _
    $region13: #{gapnet_cls_forward.1} parent=1 // pred_fallthru
      _
    // Predicated region
    $region14: #{gapnet_cls_forward.1} parent=1 // pred_check
      _
    $region15: #{gapnet_cls_forward.1} parent=1 // pred_check_branch
      %36 = sbr.rel (0) target = $region17
    $region16: #{gapnet_cls_forward.1} parent=1 // pred_region
      _
    $region17: #{gapnet_cls_forward.1} parent=1 // pred_fallthru
      _
    // Predicated region
    $region18: #{gapnet_cls_forward.1} parent=1 // pred_check
      _
    $region19: #{gapnet_cls_forward.1} parent=1 // pred_check_branch
      %38 = sbr.rel (0) target = $region21
    $region20: #{gapnet_cls_forward.1} parent=1 // pred_region
      _
    $region21: #{gapnet_cls_forward.1} parent=1 // pred_fallthru
      _
    // Predicated region
    $region22: #{gapnet_cls_forward.1} parent=1 // pred_check
      _
    $region23: #{gapnet_cls_forward.1} parent=1 // pred_check_branch
      %40 = sbr.rel (0) target = $region25
    $region24: #{gapnet_cls_forward.1} parent=1 // pred_region
      _
    $region25: #{gapnet_cls_forward.1} parent=1 // pred_fallthru
      _
    // Predicated region
    $region26: #{gapnet_cls_forward.1} parent=1 // pred_check
      _
    $region27: #{gapnet_cls_forward.1} parent=1 // pred_check_branch
      %42 = sbr.rel (0) target = $region29
    $region28: #{gapnet_cls_forward.1} parent=1 // pred_region
      _
    $region29: #{gapnet_cls_forward.1} parent=1 // pred_fallthru
      _
    // Predicated region
    $region30: #{gapnet_cls_forward.1} parent=1 // pred_check
      _
    $region31: #{gapnet_cls_forward.1} parent=1 // pred_check_branch
      %44 = sbr.rel (0) target = $region33
    $region32: #{gapnet_cls_forward.1} parent=1 // pred_region
      _
    $region33: #{gapnet_cls_forward.1} parent=1 // pred_fallthru
      _
    // Predicated region
    $region34: #{gapnet_cls_forward.1} parent=1 // pred_check
      _
    $region35: #{gapnet_cls_forward.1} parent=1 // pred_check_branch
      %46 = sbr.rel (0) target = $region37
    $region36: #{gapnet_cls_forward.1} parent=1 // pred_region
      _
    $region37: #{gapnet_cls_forward.1} parent=1 // pred_fallthru
      _
    // Predicated region
    $region38: #{gapnet_cls_forward.1} parent=1 // pred_check
      _
    $region39: #{gapnet_cls_forward.1} parent=1 // pred_check_branch
      %48 = sbr.rel (0) target = $region41
    $region40: #{gapnet_cls_forward.1} parent=1 // pred_region
      _
    $region41: #{gapnet_cls_forward.1} parent=1 // pred_fallthru
      _
    // Predicated region
    $region42: #{gapnet_cls_forward.1} parent=1 // pred_check
      _
    $region43: #{gapnet_cls_forward.1} parent=1 // pred_check_branch
      %50 = sbr.rel (0) target = $region45
    $region44: #{gapnet_cls_forward.1} parent=1 // pred_region
      _
    $region45: #{gapnet_cls_forward.1} parent=1 // pred_fallthru
      _
    // Predicated region
    $region46: #{gapnet_cls_forward.1} parent=1 // pred_check
      _
    $region47: #{gapnet_cls_forward.1} parent=1 // pred_check_branch
      %52 = sbr.rel (0) target = $region49
    $region48: #{gapnet_cls_forward.1} parent=1 // pred_region
      _
    $region49: #{gapnet_cls_forward.1} parent=1 // pred_fallthru
      _
    // Predicated region
    $region50: #{gapnet_cls_forward.1} parent=1 // pred_check
      _
    $region51: #{gapnet_cls_forward.1} parent=1 // pred_check_branch
      %54 = sbr.rel (0) target = $region53
    $region52: #{gapnet_cls_forward.1} parent=1 // pred_region
      _
    $region53: #{gapnet_cls_forward.1} parent=1 // pred_fallthru
      _
    // Predicated region
    $region54: #{gapnet_cls_forward.1} parent=1 // pred_check
      _
    $region55: #{gapnet_cls_forward.1} parent=1 // pred_check_branch
      %56 = sbr.rel (0) target = $region57
    $region56: #{gapnet_cls_forward.1} parent=1 // pred_region
      _
    $region57: #{gapnet_cls_forward.1} parent=1 // pred_fallthru
      _
    // Predicated region
    $region58: #{gapnet_cls_forward.1} parent=1 // pred_check
      _
    $region59: #{gapnet_cls_forward.1} parent=1 // pred_check_branch
      %58 = sbr.rel (0) target = $region61
    $region60: #{gapnet_cls_forward.1} parent=1 // pred_region
      _
    $region61: #{gapnet_cls_forward.1} parent=1 // pred_fallthru
      _
    // Predicated region
    $region62: #{gapnet_cls_forward.1} parent=1 // pred_check
      _
    $region63: #{gapnet_cls_forward.1} parent=1 // pred_check_branch
      %60 = sbr.rel (0) target = $region65
    $region64: #{gapnet_cls_forward.1} parent=1 // pred_region
      _
    $region65: #{gapnet_cls_forward.1} parent=1 // pred_fallthru
      _
    // Predicated region
    $region66: #{gapnet_cls_forward.1} parent=1 // pred_check
      _
    $region67: #{gapnet_cls_forward.1} parent=1 // pred_check_branch
      %62 = sbr.rel (0) target = $region69
    $region68: #{gapnet_cls_forward.1} parent=1 // pred_region
      _
    $region69: #{gapnet_cls_forward.1} parent=1 // pred_fallthru
      _
    // Predicated region
    $region70: #{gapnet_cls_forward.1} parent=1 // pred_check
      _
    $region71: #{gapnet_cls_forward.1} parent=1 // pred_check_branch
      %64 = sbr.rel (0) target = $region73
    $region72: #{gapnet_cls_forward.1} parent=1 // pred_region
      _
    $region73: #{gapnet_cls_forward.1} parent=1 // pred_fallthru
      _
    // Predicated region
    $region74: #{gapnet_cls_forward.1} parent=1 // pred_check
      _
    $region75: #{gapnet_cls_forward.1} parent=1 // pred_check_branch
      %66 = sbr.rel (0) target = $region77
    $region76: #{gapnet_cls_forward.1} parent=1 // pred_region
      _
    $region77: #{gapnet_cls_forward.1} parent=1 // pred_fallthru
      _
    // Predicated region
    $region78: #{gapnet_cls_forward.1} parent=1 // pred_check
      _
    $region79: #{gapnet_cls_forward.1} parent=1 // pred_check_branch
      %68 = sbr.rel (0) target = $region81
    $region80: #{gapnet_cls_forward.1} parent=1 // pred_region
      _
    $region81: #{gapnet_cls_forward.1} parent=1 // pred_fallthru
      _
    // Predicated region
    $region82: #{gapnet_cls_forward.1} parent=1 // pred_check
      _
    $region83: #{gapnet_cls_forward.1} parent=1 // pred_check_branch
      %70 = sbr.rel (0) target = $region85
    $region84: #{gapnet_cls_forward.1} parent=1 // pred_region
      _
    $region85: #{gapnet_cls_forward.1} parent=1 // pred_fallthru
      _
    %v71 = vld [vmem:[%s0] sm:$0xff]
    %v72 = vld [vmem:[%s0 + $0x8] sm:$0xff]
    %v73 = vld [vmem:[%s0 + $0x10] sm:$0xff]
    %v74 = vld [vmem:[%s0 + $0x18] sm:$0xff]
    %v75 = vld [vmem:[%s3] sm:$0x77]
    %v76 = vld [vmem:[%s3 + $0x8] sm:$0x77]
    %v77 = vld [vmem:[%s3 + $0x10] sm:$0x77]
    %v78 = vld [vmem:[%s3 + $0x18] sm:$0x77]
    %v79 = vld [vmem:[%s4] sm:$0xff]
    %v81 = vlaneseq
    %v82 = vshrl.u32 %v81, 7
    %v83 = vsub.s32 0, %v82
    %v84 = vrot.slane %v79, %v83
    %v85 = vlaneseq
    %v86 = vshrl.u32 %v85, 7
    %v87 = vsub.s32 1, %v86
    %v88 = vrot.slane %v79, %v87
    %v89 = vlaneseq
    %v90 = vshrl.u32 %v89, 7
    %v91 = vsub.s32 2, %v90
    %v92 = vrot.slane %v79, %v91
    %v93 = vlaneseq
    %v94 = vshrl.u32 %v93, 7
    %v95 = vsub.s32 3, %v94
    %v96 = vrot.slane %v79, %v95
    %v97 = vlaneseq
    %v98 = vshrl.u32 %v97, 7
    %v99 = vsub.s32 4, %v98
    %v100 = vrot.slane %v79, %v99
    %v101 = vlaneseq
    %v102 = vshrl.u32 %v101, 7
    %v103 = vsub.s32 5, %v102
    %v104 = vrot.slane %v79, %v103
    %v105 = vlaneseq
    %v106 = vshrl.u32 %v105, 7
    %v107 = vsub.s32 6, %v106
    %v108 = vrot.slane %v79, %v107
    %v109 = vlaneseq
    %v110 = vshrl.u32 %v109, 7
    %v111 = vsub.s32 7, %v110
    %v112 = vrot.slane %v79, %v111
    %v125 = vcombine.high %v75, %v75
    %v126 = vcombine.high %v76, %v76
    %v127 = vcombine.high %v77, %v77
    %v128 = vcombine.high %v78, %v78
    %vm129 = vcmask 23552
    %v131 = vsel %vm129, %v71, 0
    %v134 = vsel %vm129, %v72, 0
    %v137 = vsel %vm129, %v73, 0
    %v140 = vsel %vm129, %v74, 0
    %vm142 = vcmask 1042432
    %v143 = vsel %vm142, %v75, 0
    %v145 = vsel %vm142, %v125, 0
    %v147 = vsel %vm142, %v76, 0
    %v149 = vsel %vm142, %v126, 0
    %v151 = vsel %vm142, %v77, 0
    %v153 = vsel %vm142, %v127, 0
    %v155 = vsel %vm142, %v78, 0
    %v157 = vsel %vm142, %v128, 0
    %159 = vmatprep.subr.mxu0 %v145
    %160 = vmatpush1.msra.mxu0 %v143
    %161 = vmatprep.subr.mxu0 0.0
    %162 = vmatpush1.msra.mxu0 0.0
    %163 = vmatprep.subr.mxu0 0.0
    %164 = vmatpush1.msra.mxu0 0.0
    %165 = vmatprep.subr.mxu0 0.0
    %166 = vmatpush1.msra.mxu0 0.0
    %167 = vmatprep.subr.mxu0 0.0
    %168 = vmatpush1.msra.mxu0 0.0
    %169 = vmatprep.subr.mxu0 0.0
    %170 = vmatpush1.msra.mxu0 0.0
    %171 = vmatprep.subr.mxu0 0.0
    %172 = vmatpush1.msra.mxu0 0.0
    %173 = vmatprep.subr.mxu0 0.0
    %174 = vmatpush1.msra.mxu0 0.0
    %175 = vmatprep.subr.mxu0 0.0
    %176 = vmatpush1.msra.mxu0 0.0
    %177 = vmatprep.subr.mxu0 0.0
    %178 = vmatpush1.msra.mxu0 0.0
    %179 = vmatprep.subr.mxu0 0.0
    %180 = vmatpush1.msra.mxu0 0.0
    %181 = vmatprep.subr.mxu0 0.0
    %182 = vmatpush1.msra.mxu0 0.0
    %183 = vmatprep.subr.mxu0 0.0
    %184 = vmatpush1.msra.mxu0 0.0
    %185 = vmatprep.subr.mxu0 0.0
    %186 = vmatpush1.msra.mxu0 0.0
    %187 = vmatprep.subr.mxu0 0.0
    %188 = vmatpush1.msra.mxu0 0.0
    %189 = vmatprep.subr.mxu0 0.0
    %190 = vmatpush1.msra.mxu0 0.0
    %191 = vmatprep.subr.mxu0 0.0
    %192 = vmatpush1.msra.mxu0 0.0
    %193 = vmatprep.subr.mxu0 0.0
    %194 = vmatpush1.msra.mxu0 0.0
    %195 = vmatprep.subr.mxu0 0.0
    %196 = vmatpush1.msra.mxu0 0.0
    %197 = vmatprep.subr.mxu0 0.0
    %198 = vmatpush1.msra.mxu0 0.0
    %199 = vmatprep.subr.mxu0 0.0
    %200 = vmatpush1.msra.mxu0 0.0
    %201 = vmatprep.subr.mxu0 0.0
    %202 = vmatpush1.msra.mxu0 0.0
    %203 = vmatprep.subr.mxu0 0.0
    %204 = vmatpush1.msra.mxu0 0.0
    %205 = vmatprep.subr.mxu0 0.0
    %206 = vmatpush1.msra.mxu0 0.0
    %207 = vmatprep.subr.mxu0 0.0
    %208 = vmatpush1.msra.mxu0 0.0
    %209 = vmatprep.subr.mxu0 0.0
    %210 = vmatpush1.msra.mxu0 0.0
    %211 = vmatprep.subr.mxu0 0.0
    %212 = vmatpush1.msra.mxu0 0.0
    %213 = vmatprep.subr.mxu0 0.0
    %214 = vmatpush1.msra.mxu0 0.0
    %215 = vmatprep.subr.mxu0 0.0
    %216 = vmatpush1.msra.mxu0 0.0
    %217 = vmatprep.subr.mxu0 0.0
    %218 = vmatpush1.msra.mxu0 0.0
    %219 = vmatprep.subr.mxu0 0.0
    %220 = vmatpush1.msra.mxu0 0.0
    %221 = vmatprep.subr.mxu0 0.0
    %222 = vmatpush1.msra.mxu0 0.0
    %223 = vmatprep.mubr.f32.mxu0 0.0
    %224 = vmatmul.mubr.f32.gmra.mrb[0].mxu0 %v131
    %v225 = vpop.f32.mrb[0].mxu0
    %v226 = vadd.f32 %v84, %v225
    %v227 = vpop.f32.mrb[0].mxu0
    %v228 = vadd.f32 %v88, %v227
    %229 = vmatprep.mubr.f32.mxu0 0.0
    %230 = vmatmul.mubr.f32.gmra.mrb[0].mxu0 %v134
    %v231 = vpop.f32.mrb[0].mxu0
    %v232 = vadd.f32 %v84, %v231
    %v233 = vpop.f32.mrb[0].mxu0
    %v234 = vadd.f32 %v88, %v233
    %235 = vmatprep.mubr.f32.mxu0 0.0
    %236 = vmatmul.mubr.f32.gmra.mrb[0].mxu0 %v137
    %v237 = vpop.f32.mrb[0].mxu0
    %v238 = vadd.f32 %v84, %v237
    %v239 = vpop.f32.mrb[0].mxu0
    %v240 = vadd.f32 %v88, %v239
    %241 = vmatprep.mubr.f32.mxu0 0.0
    %242 = vmatmul.mubr.f32.gmra.mrb[0].mxu0 %v140
    %v243 = vpop.f32.mrb[0].mxu0
    %v244 = vadd.f32 %v84, %v243
    %v245 = vpop.f32.mrb[0].mxu0
    %v246 = vadd.f32 %v88, %v245
    %247 = vdwg.mxu0
    %248 = vmatprep.subr.mxu0 %v149
    %249 = vmatpush1.msra.mxu0 %v147
    %250 = vmatprep.subr.mxu0 0.0
    %251 = vmatpush1.msra.mxu0 0.0
    %252 = vmatprep.subr.mxu0 0.0
    %253 = vmatpush1.msra.mxu0 0.0
    %254 = vmatprep.subr.mxu0 0.0
    %255 = vmatpush1.msra.mxu0 0.0
    %256 = vmatprep.subr.mxu0 0.0
    %257 = vmatpush1.msra.mxu0 0.0
    %258 = vmatprep.subr.mxu0 0.0
    %259 = vmatpush1.msra.mxu0 0.0
    %260 = vmatprep.subr.mxu0 0.0
    %261 = vmatpush1.msra.mxu0 0.0
    %262 = vmatprep.subr.mxu0 0.0
    %263 = vmatpush1.msra.mxu0 0.0
    %264 = vmatprep.subr.mxu0 0.0
    %265 = vmatpush1.msra.mxu0 0.0
    %266 = vmatprep.subr.mxu0 0.0
    %267 = vmatpush1.msra.mxu0 0.0
    %268 = vmatprep.subr.mxu0 0.0
    %269 = vmatpush1.msra.mxu0 0.0
    %270 = vmatprep.subr.mxu0 0.0
    %271 = vmatpush1.msra.mxu0 0.0
    %272 = vmatprep.subr.mxu0 0.0
    %273 = vmatpush1.msra.mxu0 0.0
    %274 = vmatprep.subr.mxu0 0.0
    %275 = vmatpush1.msra.mxu0 0.0
    %276 = vmatprep.subr.mxu0 0.0
    %277 = vmatpush1.msra.mxu0 0.0
    %278 = vmatprep.subr.mxu0 0.0
    %279 = vmatpush1.msra.mxu0 0.0
    %280 = vmatprep.subr.mxu0 0.0
    %281 = vmatpush1.msra.mxu0 0.0
    %282 = vmatprep.subr.mxu0 0.0
    %283 = vmatpush1.msra.mxu0 0.0
    %284 = vmatprep.subr.mxu0 0.0
    %285 = vmatpush1.msra.mxu0 0.0
    %286 = vmatprep.subr.mxu0 0.0
    %287 = vmatpush1.msra.mxu0 0.0
    %288 = vmatprep.subr.mxu0 0.0
    %289 = vmatpush1.msra.mxu0 0.0
    %290 = vmatprep.subr.mxu0 0.0
    %291 = vmatpush1.msra.mxu0 0.0
    %292 = vmatprep.subr.mxu0 0.0
    %293 = vmatpush1.msra.mxu0 0.0
    %294 = vmatprep.subr.mxu0 0.0
    %295 = vmatpush1.msra.mxu0 0.0
    %296 = vmatprep.subr.mxu0 0.0
    %297 = vmatpush1.msra.mxu0 0.0
    %298 = vmatprep.subr.mxu0 0.0
    %299 = vmatpush1.msra.mxu0 0.0
    %300 = vmatprep.subr.mxu0 0.0
    %301 = vmatpush1.msra.mxu0 0.0
    %302 = vmatprep.subr.mxu0 0.0
    %303 = vmatpush1.msra.mxu0 0.0
    %304 = vmatprep.subr.mxu0 0.0
    %305 = vmatpush1.msra.mxu0 0.0
    %306 = vmatprep.subr.mxu0 0.0
    %307 = vmatpush1.msra.mxu0 0.0
    %308 = vmatprep.subr.mxu0 0.0
    %309 = vmatpush1.msra.mxu0 0.0
    %310 = vmatprep.subr.mxu0 0.0
    %311 = vmatpush1.msra.mxu0 0.0
    %312 = vmatprep.mubr.f32.mxu0 0.0
    %313 = vmatmul.mubr.f32.gmra.mrb[0].mxu0 %v131
    %v314 = vpop.f32.mrb[0].mxu0
    %v315 = vadd.f32 %v92, %v314
    %v316 = vpop.f32.mrb[0].mxu0
    %v317 = vadd.f32 %v96, %v316
    %318 = vmatprep.mubr.f32.mxu0 0.0
    %319 = vmatmul.mubr.f32.gmra.mrb[0].mxu0 %v134
    %v320 = vpop.f32.mrb[0].mxu0
    %v321 = vadd.f32 %v92, %v320
    %v322 = vpop.f32.mrb[0].mxu0
    %v323 = vadd.f32 %v96, %v322
    %324 = vmatprep.mubr.f32.mxu0 0.0
    %325 = vmatmul.mubr.f32.gmra.mrb[0].mxu0 %v137
    %v326 = vpop.f32.mrb[0].mxu0
    %v327 = vadd.f32 %v92, %v326
    %v328 = vpop.f32.mrb[0].mxu0
    %v329 = vadd.f32 %v96, %v328
    %330 = vmatprep.mubr.f32.mxu0 0.0
    %331 = vmatmul.mubr.f32.gmra.mrb[0].mxu0 %v140
    %v332 = vpop.f32.mrb[0].mxu0
    %v333 = vadd.f32 %v92, %v332
    %v334 = vpop.f32.mrb[0].mxu0
    %v335 = vadd.f32 %v96, %v334
    %336 = vdwg.mxu0
    %337 = vmatprep.subr.mxu0 %v153
    %338 = vmatpush1.msra.mxu0 %v151
    %339 = vmatprep.subr.mxu0 0.0
    %340 = vmatpush1.msra.mxu0 0.0
    %341 = vmatprep.subr.mxu0 0.0
    %342 = vmatpush1.msra.mxu0 0.0
    %343 = vmatprep.subr.mxu0 0.0
    %344 = vmatpush1.msra.mxu0 0.0
    %345 = vmatprep.subr.mxu0 0.0
    %346 = vmatpush1.msra.mxu0 0.0
    %347 = vmatprep.subr.mxu0 0.0
    %348 = vmatpush1.msra.mxu0 0.0
    %349 = vmatprep.subr.mxu0 0.0
    %350 = vmatpush1.msra.mxu0 0.0
    %351 = vmatprep.subr.mxu0 0.0
    %352 = vmatpush1.msra.mxu0 0.0
    %353 = vmatprep.subr.mxu0 0.0
    %354 = vmatpush1.msra.mxu0 0.0
    %355 = vmatprep.subr.mxu0 0.0
    %356 = vmatpush1.msra.mxu0 0.0
    %357 = vmatprep.subr.mxu0 0.0
    %358 = vmatpush1.msra.mxu0 0.0
    %359 = vmatprep.subr.mxu0 0.0
    %360 = vmatpush1.msra.mxu0 0.0
    %361 = vmatprep.subr.mxu0 0.0
    %362 = vmatpush1.msra.mxu0 0.0
    %363 = vmatprep.subr.mxu0 0.0
    %364 = vmatpush1.msra.mxu0 0.0
    %365 = vmatprep.subr.mxu0 0.0
    %366 = vmatpush1.msra.mxu0 0.0
    %367 = vmatprep.subr.mxu0 0.0
    %368 = vmatpush1.msra.mxu0 0.0
    %369 = vmatprep.subr.mxu0 0.0
    %370 = vmatpush1.msra.mxu0 0.0
    %371 = vmatprep.subr.mxu0 0.0
    %372 = vmatpush1.msra.mxu0 0.0
    %373 = vmatprep.subr.mxu0 0.0
    %374 = vmatpush1.msra.mxu0 0.0
    %375 = vmatprep.subr.mxu0 0.0
    %376 = vmatpush1.msra.mxu0 0.0
    %377 = vmatprep.subr.mxu0 0.0
    %378 = vmatpush1.msra.mxu0 0.0
    %379 = vmatprep.subr.mxu0 0.0
    %380 = vmatpush1.msra.mxu0 0.0
    %381 = vmatprep.subr.mxu0 0.0
    %382 = vmatpush1.msra.mxu0 0.0
    %383 = vmatprep.subr.mxu0 0.0
    %384 = vmatpush1.msra.mxu0 0.0
    %385 = vmatprep.subr.mxu0 0.0
    %386 = vmatpush1.msra.mxu0 0.0
    %387 = vmatprep.subr.mxu0 0.0
    %388 = vmatpush1.msra.mxu0 0.0
    %389 = vmatprep.subr.mxu0 0.0
    %390 = vmatpush1.msra.mxu0 0.0
    %391 = vmatprep.subr.mxu0 0.0
    %392 = vmatpush1.msra.mxu0 0.0
    %393 = vmatprep.subr.mxu0 0.0
    %394 = vmatpush1.msra.mxu0 0.0
    %395 = vmatprep.subr.mxu0 0.0
    %396 = vmatpush1.msra.mxu0 0.0
    %397 = vmatprep.subr.mxu0 0.0
    %398 = vmatpush1.msra.mxu0 0.0
    %399 = vmatprep.subr.mxu0 0.0
    %400 = vmatpush1.msra.mxu0 0.0
    %401 = vmatprep.mubr.f32.mxu0 0.0
    %402 = vmatmul.mubr.f32.gmra.mrb[0].mxu0 %v131
    %v403 = vpop.f32.mrb[0].mxu0
    %v404 = vadd.f32 %v100, %v403
    %v405 = vpop.f32.mrb[0].mxu0
    %v406 = vadd.f32 %v104, %v405
    %407 = vmatprep.mubr.f32.mxu0 0.0
    %408 = vmatmul.mubr.f32.gmra.mrb[0].mxu0 %v134
    %v409 = vpop.f32.mrb[0].mxu0
    %v410 = vadd.f32 %v100, %v409
    %v411 = vpop.f32.mrb[0].mxu0
    %v412 = vadd.f32 %v104, %v411
    %413 = vmatprep.mubr.f32.mxu0 0.0
    %414 = vmatmul.mubr.f32.gmra.mrb[0].mxu0 %v137
    %v415 = vpop.f32.mrb[0].mxu0
    %v416 = vadd.f32 %v100, %v415
    %v417 = vpop.f32.mrb[0].mxu0
    %v418 = vadd.f32 %v104, %v417
    %419 = vmatprep.mubr.f32.mxu0 0.0
    %420 = vmatmul.mubr.f32.gmra.mrb[0].mxu0 %v140
    %v421 = vpop.f32.mrb[0].mxu0
    %v422 = vadd.f32 %v100, %v421
    %v423 = vpop.f32.mrb[0].mxu0
    %v424 = vadd.f32 %v104, %v423
    %425 = vdwg.mxu0
    %426 = vmatprep.subr.mxu0 %v157
    %427 = vmatpush1.msra.mxu0 %v155
    %428 = vmatprep.subr.mxu0 0.0
    %429 = vmatpush1.msra.mxu0 0.0
    %430 = vmatprep.subr.mxu0 0.0
    %431 = vmatpush1.msra.mxu0 0.0
    %432 = vmatprep.subr.mxu0 0.0
    %433 = vmatpush1.msra.mxu0 0.0
    %434 = vmatprep.subr.mxu0 0.0
    %435 = vmatpush1.msra.mxu0 0.0
    %436 = vmatprep.subr.mxu0 0.0
    %437 = vmatpush1.msra.mxu0 0.0
    %438 = vmatprep.subr.mxu0 0.0
    %439 = vmatpush1.msra.mxu0 0.0
    %440 = vmatprep.subr.mxu0 0.0
    %441 = vmatpush1.msra.mxu0 0.0
    %442 = vmatprep.subr.mxu0 0.0
    %443 = vmatpush1.msra.mxu0 0.0
    %444 = vmatprep.subr.mxu0 0.0
    %445 = vmatpush1.msra.mxu0 0.0
    %446 = vmatprep.subr.mxu0 0.0
    %447 = vmatpush1.msra.mxu0 0.0
    %448 = vmatprep.subr.mxu0 0.0
    %449 = vmatpush1.msra.mxu0 0.0
    %450 = vmatprep.subr.mxu0 0.0
    %451 = vmatpush1.msra.mxu0 0.0
    %452 = vmatprep.subr.mxu0 0.0
    %453 = vmatpush1.msra.mxu0 0.0
    %454 = vmatprep.subr.mxu0 0.0
    %455 = vmatpush1.msra.mxu0 0.0
    %456 = vmatprep.subr.mxu0 0.0
    %457 = vmatpush1.msra.mxu0 0.0
    %458 = vmatprep.subr.mxu0 0.0
    %459 = vmatpush1.msra.mxu0 0.0
    %460 = vmatprep.subr.mxu0 0.0
    %461 = vmatpush1.msra.mxu0 0.0
    %462 = vmatprep.subr.mxu0 0.0
    %463 = vmatpush1.msra.mxu0 0.0
    %464 = vmatprep.subr.mxu0 0.0
    %465 = vmatpush1.msra.mxu0 0.0
    %466 = vmatprep.subr.mxu0 0.0
    %467 = vmatpush1.msra.mxu0 0.0
    %468 = vmatprep.subr.mxu0 0.0
    %469 = vmatpush1.msra.mxu0 0.0
    %470 = vmatprep.subr.mxu0 0.0
    %471 = vmatpush1.msra.mxu0 0.0
    %472 = vmatprep.subr.mxu0 0.0
    %473 = vmatpush1.msra.mxu0 0.0
    %474 = vmatprep.subr.mxu0 0.0
    %475 = vmatpush1.msra.mxu0 0.0
    %476 = vmatprep.subr.mxu0 0.0
    %477 = vmatpush1.msra.mxu0 0.0
    %478 = vmatprep.subr.mxu0 0.0
    %479 = vmatpush1.msra.mxu0 0.0
    %480 = vmatprep.subr.mxu0 0.0
    %481 = vmatpush1.msra.mxu0 0.0
    %482 = vmatprep.subr.mxu0 0.0
    %483 = vmatpush1.msra.mxu0 0.0
    %484 = vmatprep.subr.mxu0 0.0
    %485 = vmatpush1.msra.mxu0 0.0
    %486 = vmatprep.subr.mxu0 0.0
    %487 = vmatpush1.msra.mxu0 0.0
    %488 = vmatprep.subr.mxu0 0.0
    %489 = vmatpush1.msra.mxu0 0.0
    %490 = vmatprep.mubr.f32.mxu0 0.0
    %491 = vmatmul.mubr.f32.gmra.mrb[0].mxu0 %v131
    %v492 = vpop.f32.mrb[0].mxu0
    %v493 = vadd.f32 %v108, %v492
    %v494 = vpop.f32.mrb[0].mxu0
    %v495 = vadd.f32 %v112, %v494
    %496 = vmatprep.mubr.f32.mxu0 0.0
    %497 = vmatmul.mubr.f32.gmra.mrb[0].mxu0 %v134
    %v498 = vpop.f32.mrb[0].mxu0
    %v499 = vadd.f32 %v108, %v498
    %v500 = vpop.f32.mrb[0].mxu0
    %v501 = vadd.f32 %v112, %v500
    %502 = vmatprep.mubr.f32.mxu0 0.0
    %503 = vmatmul.mubr.f32.gmra.mrb[0].mxu0 %v137
    %v504 = vpop.f32.mrb[0].mxu0
    %v505 = vadd.f32 %v108, %v504
    %v506 = vpop.f32.mrb[0].mxu0
    %v507 = vadd.f32 %v112, %v506
    %508 = vmatprep.mubr.f32.mxu0 0.0
    %509 = vmatmul.mubr.f32.gmra.mrb[0].mxu0 %v140
    %v510 = vpop.f32.mrb[0].mxu0
    %v511 = vadd.f32 %v108, %v510
    %v512 = vpop.f32.mrb[0].mxu0
    %v513 = vadd.f32 %v112, %v512
    %514 = vdwg.mxu0
    %v515 = vmax.f32 %v226, %v232
    %v516 = vmax.f32 %v515, %v238
    %v517 = vmax.f32 %v516, %v244
    %v518 = vrot.slane %v517, 4
    %v519 = vmax.f32 %v517, %v518
    %v520 = vrot.slane %v519, 2
    %v521 = vmax.f32 %v519, %v520
    %v522 = vrot.slane %v521, 1
    %v523 = vmax.f32 %v521, %v522
    %v524 = vmax.f32 %v228, %v234
    %v525 = vmax.f32 %v524, %v240
    %v526 = vmax.f32 %v525, %v246
    %v527 = vrot.slane %v526, 4
    %v528 = vmax.f32 %v526, %v527
    %v529 = vrot.slane %v528, 2
    %v530 = vmax.f32 %v528, %v529
    %v531 = vrot.slane %v530, 1
    %v532 = vmax.f32 %v530, %v531
    %v533 = vmax.f32 %v315, %v321
    %v534 = vmax.f32 %v533, %v327
    %v535 = vmax.f32 %v534, %v333
    %v536 = vrot.slane %v535, 4
    %v537 = vmax.f32 %v535, %v536
    %v538 = vrot.slane %v537, 2
    %v539 = vmax.f32 %v537, %v538
    %v540 = vrot.slane %v539, 1
    %v541 = vmax.f32 %v539, %v540
    %v542 = vmax.f32 %v317, %v323
    %v543 = vmax.f32 %v542, %v329
    %v544 = vmax.f32 %v543, %v335
    %v545 = vrot.slane %v544, 4
    %v546 = vmax.f32 %v544, %v545
    %v547 = vrot.slane %v546, 2
    %v548 = vmax.f32 %v546, %v547
    %v549 = vrot.slane %v548, 1
    %v550 = vmax.f32 %v548, %v549
    %v551 = vmax.f32 %v404, %v410
    %v552 = vmax.f32 %v551, %v416
    %v553 = vmax.f32 %v552, %v422
    %v554 = vrot.slane %v553, 4
    %v555 = vmax.f32 %v553, %v554
    %v556 = vrot.slane %v555, 2
    %v557 = vmax.f32 %v555, %v556
    %v558 = vrot.slane %v557, 1
    %v559 = vmax.f32 %v557, %v558
    %v560 = vmax.f32 %v406, %v412
    %v561 = vmax.f32 %v560, %v418
    %v562 = vmax.f32 %v561, %v424
    %v563 = vrot.slane %v562, 4
    %v564 = vmax.f32 %v562, %v563
    %v565 = vrot.slane %v564, 2
    %v566 = vmax.f32 %v564, %v565
    %v567 = vrot.slane %v566, 1
    %v568 = vmax.f32 %v566, %v567
    %v569 = vmax.f32 %v493, %v499
    %v570 = vmax.f32 %v569, %v505
    %v571 = vmax.f32 %v570, %v511
    %v572 = vrot.slane %v571, 4
    %v573 = vmax.f32 %v571, %v572
    %v574 = vrot.slane %v573, 2
    %v575 = vmax.f32 %v573, %v574
    %v576 = vrot.slane %v575, 1
    %v577 = vmax.f32 %v575, %v576
    %v578 = vmax.f32 %v495, %v501
    %v579 = vmax.f32 %v578, %v507
    %v580 = vmax.f32 %v579, %v513
    %v581 = vrot.slane %v580, 4
    %v582 = vmax.f32 %v580, %v581
    %v583 = vrot.slane %v582, 2
    %v584 = vmax.f32 %v582, %v583
    %v585 = vrot.slane %v584, 1
    %v586 = vmax.f32 %v584, %v585
    %v587 = vld [vmem:[%s5] sm:$0xff]
    %v588 = vld [vmem:[%s5 + $0x8] sm:$0xff]
    %v589 = vld [vmem:[%s5 + $0x10] sm:$0xff]
    %v590 = vld [vmem:[%s5 + $0x18] sm:$0xff]
    %v591 = vld [vmem:[%s5 + $0x20] sm:$0xff]
    %v592 = vld [vmem:[%s5 + $0x28] sm:$0xff]
    %v593 = vld [vmem:[%s5 + $0x30] sm:$0xff]
    %v594 = vld [vmem:[%s5 + $0x38] sm:$0xff]
    %v595 = vld [vmem:[%s5 + $0x40] sm:$0xff]
    %v596 = vld [vmem:[%s5 + $0x48] sm:$0xff]
    %v597 = vld [vmem:[%s5 + $0x50] sm:$0xff]
    %v598 = vld [vmem:[%s5 + $0x58] sm:$0xff]
    %v599 = vld [vmem:[%s5 + $0x60] sm:$0xff]
    %v600 = vld [vmem:[%s5 + $0x68] sm:$0xff]
    %v601 = vld [vmem:[%s5 + $0x70] sm:$0xff]
    %v602 = vld [vmem:[%s5 + $0x78] sm:$0xff]
    %v603 = vld [vmem:[%s5 + $0x80] sm:$0xff]
    %v604 = vld [vmem:[%s5 + $0x88] sm:$0xff]
    %v605 = vld [vmem:[%s5 + $0x90] sm:$0xff]
    %v606 = vld [vmem:[%s5 + $0x98] sm:$0xff]
    %v607 = vld [vmem:[%s5 + $0xa0] sm:$0xff]
    %v608 = vld [vmem:[%s5 + $0xa8] sm:$0xff]
    %v609 = vld [vmem:[%s5 + $0xb0] sm:$0xff]
    %v610 = vld [vmem:[%s5 + $0xb8] sm:$0xff]
    %v611 = vld [vmem:[%s5 + $0xc0] sm:$0xff]
    %v612 = vld [vmem:[%s5 + $0xc8] sm:$0xff]
    %v613 = vld [vmem:[%s5 + $0xd0] sm:$0xff]
    %v614 = vld [vmem:[%s5 + $0xd8] sm:$0xff]
    %v615 = vld [vmem:[%s5 + $0xe0] sm:$0xff]
    %v616 = vld [vmem:[%s5 + $0xe8] sm:$0xff]
    %v617 = vld [vmem:[%s5 + $0xf0] sm:$0xff]
    %v618 = vld [vmem:[%s5 + $0xf8] sm:$0xff]
    %v619 = vld [vmem:[%s5 + $0x100] sm:$0xff]
    %v620 = vld [vmem:[%s5 + $0x108] sm:$0xff]
    %v621 = vld [vmem:[%s5 + $0x110] sm:$0xff]
    %v622 = vld [vmem:[%s5 + $0x118] sm:$0xff]
    %v623 = vld [vmem:[%s5 + $0x120] sm:$0xff]
    %v624 = vld [vmem:[%s5 + $0x128] sm:$0xff]
    %v625 = vld [vmem:[%s5 + $0x130] sm:$0xff]
    %v626 = vld [vmem:[%s5 + $0x138] sm:$0xff]
    %v627 = vld [vmem:[%s5 + $0x140] sm:$0xff]
    %v628 = vld [vmem:[%s5 + $0x148] sm:$0xff]
    %v629 = vld [vmem:[%s5 + $0x150] sm:$0xff]
    %v630 = vld [vmem:[%s5 + $0x158] sm:$0xff]
    %v631 = vld [vmem:[%s5 + $0x160] sm:$0xff]
    %v632 = vld [vmem:[%s5 + $0x168] sm:$0xff]
    %v633 = vld [vmem:[%s5 + $0x170] sm:$0xff]
    %v634 = vld [vmem:[%s5 + $0x178] sm:$0xff]
    %v635 = vld [vmem:[%s5 + $0x180] sm:$0xff]
    %v636 = vld [vmem:[%s5 + $0x188] sm:$0xff]
    %v637 = vld [vmem:[%s5 + $0x190] sm:$0xff]
    %v638 = vld [vmem:[%s5 + $0x198] sm:$0xff]
    %v639 = vld [vmem:[%s5 + $0x1a0] sm:$0xff]
    %v640 = vld [vmem:[%s5 + $0x1a8] sm:$0xff]
    %v641 = vld [vmem:[%s5 + $0x1b0] sm:$0xff]
    %v642 = vld [vmem:[%s5 + $0x1b8] sm:$0xff]
    %v643 = vld [vmem:[%s5 + $0x1c0] sm:$0xff]
    %v644 = vld [vmem:[%s5 + $0x1c8] sm:$0xff]
    %v645 = vld [vmem:[%s5 + $0x1d0] sm:$0xff]
    %v646 = vld [vmem:[%s5 + $0x1d8] sm:$0xff]
    %v647 = vld [vmem:[%s5 + $0x1e0] sm:$0xff]
    %v648 = vld [vmem:[%s5 + $0x1e8] sm:$0xff]
    %v649 = vld [vmem:[%s5 + $0x1f0] sm:$0xff]
    %v650 = vld [vmem:[%s5 + $0x1f8] sm:$0xff]
    %v651 = vld [vmem:[%s5 + $0x200] sm:$0xff]
    %v652 = vld [vmem:[%s5 + $0x208] sm:$0xff]
    %v653 = vld [vmem:[%s5 + $0x210] sm:$0xff]
    %v654 = vld [vmem:[%s5 + $0x218] sm:$0xff]
    %v655 = vld [vmem:[%s5 + $0x220] sm:$0xff]
    %v656 = vld [vmem:[%s5 + $0x228] sm:$0xff]
    %v657 = vld [vmem:[%s5 + $0x230] sm:$0xff]
    %v658 = vld [vmem:[%s5 + $0x238] sm:$0xff]
    %v659 = vld [vmem:[%s5 + $0x240] sm:$0xff]
    %v660 = vld [vmem:[%s5 + $0x248] sm:$0xff]
    %v661 = vld [vmem:[%s5 + $0x250] sm:$0xff]
    %v662 = vld [vmem:[%s5 + $0x258] sm:$0xff]
    %v663 = vld [vmem:[%s5 + $0x260] sm:$0xff]
    %v664 = vld [vmem:[%s5 + $0x268] sm:$0xff]
    %v665 = vld [vmem:[%s5 + $0x270] sm:$0xff]
    %v666 = vld [vmem:[%s5 + $0x278] sm:$0xff]
    %v667 = vld [vmem:[%s5 + $0x280] sm:$0xff]
    %v668 = vld [vmem:[%s5 + $0x288] sm:$0xff]
    %v669 = vld [vmem:[%s5 + $0x290] sm:$0xff]
    %v670 = vld [vmem:[%s5 + $0x298] sm:$0xff]
    %v671 = vld [vmem:[%s5 + $0x2a0] sm:$0xff]
    %v672 = vld [vmem:[%s5 + $0x2a8] sm:$0xff]
    %v673 = vld [vmem:[%s5 + $0x2b0] sm:$0xff]
    %v674 = vld [vmem:[%s5 + $0x2b8] sm:$0xff]
    %v675 = vld [vmem:[%s5 + $0x2c0] sm:$0xff]
    %v676 = vld [vmem:[%s5 + $0x2c8] sm:$0xff]
    %v677 = vld [vmem:[%s5 + $0x2d0] sm:$0xff]
    %v678 = vld [vmem:[%s5 + $0x2d8] sm:$0xff]
    %v679 = vld [vmem:[%s5 + $0x2e0] sm:$0xff]
    %v680 = vld [vmem:[%s5 + $0x2e8] sm:$0xff]
    %v681 = vld [vmem:[%s5 + $0x2f0] sm:$0xff]
    %v682 = vld [vmem:[%s5 + $0x2f8] sm:$0xff]
    %v683 = vld [vmem:[%s5 + $0x300] sm:$0xff]
    %v684 = vld [vmem:[%s5 + $0x308] sm:$0xff]
    %v685 = vld [vmem:[%s5 + $0x310] sm:$0xff]
    %v686 = vld [vmem:[%s5 + $0x318] sm:$0xff]
    %v687 = vld [vmem:[%s5 + $0x320] sm:$0xff]
    %v688 = vld [vmem:[%s5 + $0x328] sm:$0xff]
    %v689 = vld [vmem:[%s5 + $0x330] sm:$0xff]
    %v690 = vld [vmem:[%s5 + $0x338] sm:$0xff]
    %v691 = vld [vmem:[%s5 + $0x340] sm:$0xff]
    %v692 = vld [vmem:[%s5 + $0x348] sm:$0xff]
    %v693 = vld [vmem:[%s5 + $0x350] sm:$0xff]
    %v694 = vld [vmem:[%s5 + $0x358] sm:$0xff]
    %v695 = vld [vmem:[%s5 + $0x360] sm:$0xff]
    %v696 = vld [vmem:[%s5 + $0x368] sm:$0xff]
    %v697 = vld [vmem:[%s5 + $0x370] sm:$0xff]
    %v698 = vld [vmem:[%s5 + $0x378] sm:$0xff]
    %v699 = vld [vmem:[%s5 + $0x380] sm:$0xff]
    %v700 = vld [vmem:[%s5 + $0x388] sm:$0xff]
    %v701 = vld [vmem:[%s5 + $0x390] sm:$0xff]
    %v702 = vld [vmem:[%s5 + $0x398] sm:$0xff]
    %v703 = vld [vmem:[%s5 + $0x3a0] sm:$0xff]
    %v704 = vld [vmem:[%s5 + $0x3a8] sm:$0xff]
    %v705 = vld [vmem:[%s5 + $0x3b0] sm:$0xff]
    %v706 = vld [vmem:[%s5 + $0x3b8] sm:$0xff]
    %v707 = vld [vmem:[%s5 + $0x3c0] sm:$0xff]
    %v708 = vld [vmem:[%s5 + $0x3c8] sm:$0xff]
    %v709 = vld [vmem:[%s5 + $0x3d0] sm:$0xff]
    %v710 = vld [vmem:[%s5 + $0x3d8] sm:$0xff]
    %v711 = vld [vmem:[%s5 + $0x3e0] sm:$0xff]
    %v712 = vld [vmem:[%s5 + $0x3e8] sm:$0xff]
    %v713 = vld [vmem:[%s5 + $0x3f0] sm:$0xff]
    %v714 = vld [vmem:[%s5 + $0x3f8] sm:$0xff]
    %v715 = vld [vmem:[%s6] sm:$0x1]
    %716 = vmatprep.subr.mxu0 0.0
    %717 = vmatpush1.msra.mxu0 %v587
    %718 = vmatprep.subr.mxu0 0.0
    %719 = vmatpush1.msra.mxu0 %v588
    %720 = vmatprep.subr.mxu0 0.0
    %721 = vmatpush1.msra.mxu0 %v589
    %722 = vmatprep.subr.mxu0 0.0
    %723 = vmatpush1.msra.mxu0 %v590
    %724 = vmatprep.subr.mxu0 0.0
    %725 = vmatpush1.msra.mxu0 %v591
    %726 = vmatprep.subr.mxu0 0.0
    %727 = vmatpush1.msra.mxu0 %v592
    %728 = vmatprep.subr.mxu0 0.0
    %729 = vmatpush1.msra.mxu0 %v593
    %730 = vmatprep.subr.mxu0 0.0
    %731 = vmatpush1.msra.mxu0 %v594
    %732 = vmatprep.subr.mxu0 0.0
    %733 = vmatpush1.msra.mxu0 %v595
    %734 = vmatprep.subr.mxu0 0.0
    %735 = vmatpush1.msra.mxu0 %v596
    %736 = vmatprep.subr.mxu0 0.0
    %737 = vmatpush1.msra.mxu0 %v597
    %738 = vmatprep.subr.mxu0 0.0
    %739 = vmatpush1.msra.mxu0 %v598
    %740 = vmatprep.subr.mxu0 0.0
    %741 = vmatpush1.msra.mxu0 %v599
    %742 = vmatprep.subr.mxu0 0.0
    %743 = vmatpush1.msra.mxu0 %v600
    %744 = vmatprep.subr.mxu0 0.0
    %745 = vmatpush1.msra.mxu0 %v601
    %746 = vmatprep.subr.mxu0 0.0
    %747 = vmatpush1.msra.mxu0 %v602
    %748 = vmatprep.subr.mxu0 0.0
    %749 = vmatpush1.msra.mxu0 %v603
    %750 = vmatprep.subr.mxu0 0.0
    %751 = vmatpush1.msra.mxu0 %v604
    %752 = vmatprep.subr.mxu0 0.0
    %753 = vmatpush1.msra.mxu0 %v605
    %754 = vmatprep.subr.mxu0 0.0
    %755 = vmatpush1.msra.mxu0 %v606
    %756 = vmatprep.subr.mxu0 0.0
    %757 = vmatpush1.msra.mxu0 %v607
    %758 = vmatprep.subr.mxu0 0.0
    %759 = vmatpush1.msra.mxu0 %v608
    %760 = vmatprep.subr.mxu0 0.0
    %761 = vmatpush1.msra.mxu0 %v609
    %762 = vmatprep.subr.mxu0 0.0
    %763 = vmatpush1.msra.mxu0 %v610
    %764 = vmatprep.subr.mxu0 0.0
    %765 = vmatpush1.msra.mxu0 %v611
    %766 = vmatprep.subr.mxu0 0.0
    %767 = vmatpush1.msra.mxu0 %v612
    %768 = vmatprep.subr.mxu0 0.0
    %769 = vmatpush1.msra.mxu0 %v613
    %770 = vmatprep.subr.mxu0 0.0
    %771 = vmatpush1.msra.mxu0 %v614
    %772 = vmatprep.subr.mxu0 0.0
    %773 = vmatpush1.msra.mxu0 %v615
    %774 = vmatprep.subr.mxu0 0.0
    %775 = vmatpush1.msra.mxu0 %v616
    %776 = vmatprep.subr.mxu0 0.0
    %777 = vmatpush1.msra.mxu0 %v617
    %778 = vmatprep.subr.mxu0 0.0
    %779 = vmatpush1.msra.mxu0 %v618
    %780 = vmatprep.mubr.f32.mxu0 %v532
    %781 = vmatmul.mubr.f32.gmra.mrb[0].mxu0 %v523
    %v782 = vpop.f32.mrb[0].mxu0
    %v783 = vadd.f32 %v715, %v782
    %v784 = vpop.f32.mrb[0].mxu0
    %785 = vdwg.mxu0
    %786 = vmatprep.subr.mxu0 0.0
    %787 = vmatpush1.msra.mxu0 %v619
    %788 = vmatprep.subr.mxu0 0.0
    %789 = vmatpush1.msra.mxu0 %v620
    %790 = vmatprep.subr.mxu0 0.0
    %791 = vmatpush1.msra.mxu0 %v621
    %792 = vmatprep.subr.mxu0 0.0
    %793 = vmatpush1.msra.mxu0 %v622
    %794 = vmatprep.subr.mxu0 0.0
    %795 = vmatpush1.msra.mxu0 %v623
    %796 = vmatprep.subr.mxu0 0.0
    %797 = vmatpush1.msra.mxu0 %v624
    %798 = vmatprep.subr.mxu0 0.0
    %799 = vmatpush1.msra.mxu0 %v625
    %800 = vmatprep.subr.mxu0 0.0
    %801 = vmatpush1.msra.mxu0 %v626
    %802 = vmatprep.subr.mxu0 0.0
    %803 = vmatpush1.msra.mxu0 %v627
    %804 = vmatprep.subr.mxu0 0.0
    %805 = vmatpush1.msra.mxu0 %v628
    %806 = vmatprep.subr.mxu0 0.0
    %807 = vmatpush1.msra.mxu0 %v629
    %808 = vmatprep.subr.mxu0 0.0
    %809 = vmatpush1.msra.mxu0 %v630
    %810 = vmatprep.subr.mxu0 0.0
    %811 = vmatpush1.msra.mxu0 %v631
    %812 = vmatprep.subr.mxu0 0.0
    %813 = vmatpush1.msra.mxu0 %v632
    %814 = vmatprep.subr.mxu0 0.0
    %815 = vmatpush1.msra.mxu0 %v633
    %816 = vmatprep.subr.mxu0 0.0
    %817 = vmatpush1.msra.mxu0 %v634
    %818 = vmatprep.subr.mxu0 0.0
    %819 = vmatpush1.msra.mxu0 %v635
    %820 = vmatprep.subr.mxu0 0.0
    %821 = vmatpush1.msra.mxu0 %v636
    %822 = vmatprep.subr.mxu0 0.0
    %823 = vmatpush1.msra.mxu0 %v637
    %824 = vmatprep.subr.mxu0 0.0
    %825 = vmatpush1.msra.mxu0 %v638
    %826 = vmatprep.subr.mxu0 0.0
    %827 = vmatpush1.msra.mxu0 %v639
    %828 = vmatprep.subr.mxu0 0.0
    %829 = vmatpush1.msra.mxu0 %v640
    %830 = vmatprep.subr.mxu0 0.0
    %831 = vmatpush1.msra.mxu0 %v641
    %832 = vmatprep.subr.mxu0 0.0
    %833 = vmatpush1.msra.mxu0 %v642
    %834 = vmatprep.subr.mxu0 0.0
    %835 = vmatpush1.msra.mxu0 %v643
    %836 = vmatprep.subr.mxu0 0.0
    %837 = vmatpush1.msra.mxu0 %v644
    %838 = vmatprep.subr.mxu0 0.0
    %839 = vmatpush1.msra.mxu0 %v645
    %840 = vmatprep.subr.mxu0 0.0
    %841 = vmatpush1.msra.mxu0 %v646
    %842 = vmatprep.subr.mxu0 0.0
    %843 = vmatpush1.msra.mxu0 %v647
    %844 = vmatprep.subr.mxu0 0.0
    %845 = vmatpush1.msra.mxu0 %v648
    %846 = vmatprep.subr.mxu0 0.0
    %847 = vmatpush1.msra.mxu0 %v649
    %848 = vmatprep.subr.mxu0 0.0
    %849 = vmatpush1.msra.mxu0 %v650
    %850 = vmatprep.mubr.f32.mxu0 %v550
    %851 = vmatmul.mubr.f32.gmra.mrb[0].mxu0 %v541
    %v852 = vpop.f32.mrb[0].mxu0
    %v853 = vadd.f32 %v783, %v852
    %v854 = vpop.f32.mrb[0].mxu0
    %855 = vdwg.mxu0
    %856 = vmatprep.subr.mxu0 0.0
    %857 = vmatpush1.msra.mxu0 %v651
    %858 = vmatprep.subr.mxu0 0.0
    %859 = vmatpush1.msra.mxu0 %v652
    %860 = vmatprep.subr.mxu0 0.0
    %861 = vmatpush1.msra.mxu0 %v653
    %862 = vmatprep.subr.mxu0 0.0
    %863 = vmatpush1.msra.mxu0 %v654
    %864 = vmatprep.subr.mxu0 0.0
    %865 = vmatpush1.msra.mxu0 %v655
    %866 = vmatprep.subr.mxu0 0.0
    %867 = vmatpush1.msra.mxu0 %v656
    %868 = vmatprep.subr.mxu0 0.0
    %869 = vmatpush1.msra.mxu0 %v657
    %870 = vmatprep.subr.mxu0 0.0
    %871 = vmatpush1.msra.mxu0 %v658
    %872 = vmatprep.subr.mxu0 0.0
    %873 = vmatpush1.msra.mxu0 %v659
    %874 = vmatprep.subr.mxu0 0.0
    %875 = vmatpush1.msra.mxu0 %v660
    %876 = vmatprep.subr.mxu0 0.0
    %877 = vmatpush1.msra.mxu0 %v661
    %878 = vmatprep.subr.mxu0 0.0
    %879 = vmatpush1.msra.mxu0 %v662
    %880 = vmatprep.subr.mxu0 0.0
    %881 = vmatpush1.msra.mxu0 %v663
    %882 = vmatprep.subr.mxu0 0.0
    %883 = vmatpush1.msra.mxu0 %v664
    %884 = vmatprep.subr.mxu0 0.0
    %885 = vmatpush1.msra.mxu0 %v665
    %886 = vmatprep.subr.mxu0 0.0
    %887 = vmatpush1.msra.mxu0 %v666
    %888 = vmatprep.subr.mxu0 0.0
    %889 = vmatpush1.msra.mxu0 %v667
    %890 = vmatprep.subr.mxu0 0.0
    %891 = vmatpush1.msra.mxu0 %v668
    %892 = vmatprep.subr.mxu0 0.0
    %893 = vmatpush1.msra.mxu0 %v669
    %894 = vmatprep.subr.mxu0 0.0
    %895 = vmatpush1.msra.mxu0 %v670
    %896 = vmatprep.subr.mxu0 0.0
    %897 = vmatpush1.msra.mxu0 %v671
    %898 = vmatprep.subr.mxu0 0.0
    %899 = vmatpush1.msra.mxu0 %v672
    %900 = vmatprep.subr.mxu0 0.0
    %901 = vmatpush1.msra.mxu0 %v673
    %902 = vmatprep.subr.mxu0 0.0
    %903 = vmatpush1.msra.mxu0 %v674
    %904 = vmatprep.subr.mxu0 0.0
    %905 = vmatpush1.msra.mxu0 %v675
    %906 = vmatprep.subr.mxu0 0.0
    %907 = vmatpush1.msra.mxu0 %v676
    %908 = vmatprep.subr.mxu0 0.0
    %909 = vmatpush1.msra.mxu0 %v677
    %910 = vmatprep.subr.mxu0 0.0
    %911 = vmatpush1.msra.mxu0 %v678
    %912 = vmatprep.subr.mxu0 0.0
    %913 = vmatpush1.msra.mxu0 %v679
    %914 = vmatprep.subr.mxu0 0.0
    %915 = vmatpush1.msra.mxu0 %v680
    %916 = vmatprep.subr.mxu0 0.0
    %917 = vmatpush1.msra.mxu0 %v681
    %918 = vmatprep.subr.mxu0 0.0
    %919 = vmatpush1.msra.mxu0 %v682
    %920 = vmatprep.mubr.f32.mxu0 %v568
    %921 = vmatmul.mubr.f32.gmra.mrb[0].mxu0 %v559
    %v922 = vpop.f32.mrb[0].mxu0
    %v923 = vadd.f32 %v853, %v922
    %v924 = vpop.f32.mrb[0].mxu0
    %925 = vdwg.mxu0
    %926 = vmatprep.subr.mxu0 0.0
    %927 = vmatpush1.msra.mxu0 %v683
    %928 = vmatprep.subr.mxu0 0.0
    %929 = vmatpush1.msra.mxu0 %v684
    %930 = vmatprep.subr.mxu0 0.0
    %931 = vmatpush1.msra.mxu0 %v685
    %932 = vmatprep.subr.mxu0 0.0
    %933 = vmatpush1.msra.mxu0 %v686
    %934 = vmatprep.subr.mxu0 0.0
    %935 = vmatpush1.msra.mxu0 %v687
    %936 = vmatprep.subr.mxu0 0.0
    %937 = vmatpush1.msra.mxu0 %v688
    %938 = vmatprep.subr.mxu0 0.0
    %939 = vmatpush1.msra.mxu0 %v689
    %940 = vmatprep.subr.mxu0 0.0
    %941 = vmatpush1.msra.mxu0 %v690
    %942 = vmatprep.subr.mxu0 0.0
    %943 = vmatpush1.msra.mxu0 %v691
    %944 = vmatprep.subr.mxu0 0.0
    %945 = vmatpush1.msra.mxu0 %v692
    %946 = vmatprep.subr.mxu0 0.0
    %947 = vmatpush1.msra.mxu0 %v693
    %948 = vmatprep.subr.mxu0 0.0
    %949 = vmatpush1.msra.mxu0 %v694
    %950 = vmatprep.subr.mxu0 0.0
    %951 = vmatpush1.msra.mxu0 %v695
    %952 = vmatprep.subr.mxu0 0.0
    %953 = vmatpush1.msra.mxu0 %v696
    %954 = vmatprep.subr.mxu0 0.0
    %955 = vmatpush1.msra.mxu0 %v697
    %956 = vmatprep.subr.mxu0 0.0
    %957 = vmatpush1.msra.mxu0 %v698
    %958 = vmatprep.subr.mxu0 0.0
    %959 = vmatpush1.msra.mxu0 %v699
    %960 = vmatprep.subr.mxu0 0.0
    %961 = vmatpush1.msra.mxu0 %v700
    %962 = vmatprep.subr.mxu0 0.0
    %963 = vmatpush1.msra.mxu0 %v701
    %964 = vmatprep.subr.mxu0 0.0
    %965 = vmatpush1.msra.mxu0 %v702
    %966 = vmatprep.subr.mxu0 0.0
    %967 = vmatpush1.msra.mxu0 %v703
    %968 = vmatprep.subr.mxu0 0.0
    %969 = vmatpush1.msra.mxu0 %v704
    %970 = vmatprep.subr.mxu0 0.0
    %971 = vmatpush1.msra.mxu0 %v705
    %972 = vmatprep.subr.mxu0 0.0
    %973 = vmatpush1.msra.mxu0 %v706
    %974 = vmatprep.subr.mxu0 0.0
    %975 = vmatpush1.msra.mxu0 %v707
    %976 = vmatprep.subr.mxu0 0.0
    %977 = vmatpush1.msra.mxu0 %v708
    %978 = vmatprep.subr.mxu0 0.0
    %979 = vmatpush1.msra.mxu0 %v709
    %980 = vmatprep.subr.mxu0 0.0
    %981 = vmatpush1.msra.mxu0 %v710
    %982 = vmatprep.subr.mxu0 0.0
    %983 = vmatpush1.msra.mxu0 %v711
    %984 = vmatprep.subr.mxu0 0.0
    %985 = vmatpush1.msra.mxu0 %v712
    %986 = vmatprep.subr.mxu0 0.0
    %987 = vmatpush1.msra.mxu0 %v713
    %988 = vmatprep.subr.mxu0 0.0
    %989 = vmatpush1.msra.mxu0 %v714
    %990 = vmatprep.mubr.f32.mxu0 %v586
    %991 = vmatmul.mubr.f32.gmra.mrb[0].mxu0 %v577
    %v992 = vpop.f32.mrb[0].mxu0
    %v993 = vadd.f32 %v923, %v992
    %v994 = vpop.f32.mrb[0].mxu0
    %995 = vdwg.mxu0
    %v996 = vld [vmem:[%s1] sm:$0xff]
    %v997 = vld [vmem:[%s1 + $0x8] sm:$0xff]
    %v998 = vld [vmem:[%s1 + $0x10] sm:$0xff]
    %v999 = vld [vmem:[%s1 + $0x18] sm:$0xff]
    %s1001 = vtos %v993
    %v1002 = vstv %s1001
    %v1004 = vmul.f32 %v1002, %v996
    %v1005 = vmul.f32 %v1002, %v997
    %v1006 = vmul.f32 %v1002, %v998
    %v1007 = vmul.f32 %v1002, %v999
    %1008 = vrot.lane.b32.xlu0 %v993, 127
    %v1009 = vpop.permute.xlu0 %1008
    %s1010 = vtos %v1009
    %v1011 = vstv %s1010
    %v1013 = vmul.f32 %v1011, %v996
    %v1014 = vmul.f32 %v1011, %v997
    %v1015 = vmul.f32 %v1011, %v998
    %v1016 = vmul.f32 %v1011, %v999
    %1021 = vrot.lane.b32.xlu0 %v1013, 125
    %v1022 = vpop.permute.xlu0 %1021
    %1023 = vrot.lane.b32.xlu0 %v1014, 125
    %v1024 = vpop.permute.xlu0 %1023
    %1025 = vrot.lane.b32.xlu0 %v1015, 125
    %v1026 = vpop.permute.xlu0 %1025
    %1027 = vrot.lane.b32.xlu0 %v1016, 125
    %v1028 = vpop.permute.xlu0 %1027
    %v1033 = vadd.f32 %v1004, %v1022
    %v1034 = vadd.f32 %v1005, %v1024
    %v1035 = vadd.f32 %v1006, %v1026
    %v1036 = vadd.f32 %v1007, %v1028
    %1037 = vrot.lane.b32.xlu0 %v993, 126
    %v1038 = vpop.permute.xlu0 %1037
    %s1039 = vtos %v1038
    %v1040 = vstv %s1039
    %v1042 = vmul.f32 %v1040, %v996
    %v1043 = vmul.f32 %v1040, %v997
    %v1044 = vmul.f32 %v1040, %v998
    %v1045 = vmul.f32 %v1040, %v999
    %1050 = vrot.lane.b32.xlu0 %v1042, 122
    %v1051 = vpop.permute.xlu0 %1050
    %1052 = vrot.lane.b32.xlu0 %v1043, 122
    %v1053 = vpop.permute.xlu0 %1052
    %1054 = vrot.lane.b32.xlu0 %v1044, 122
    %v1055 = vpop.permute.xlu0 %1054
    %1056 = vrot.lane.b32.xlu0 %v1045, 122
    %v1057 = vpop.permute.xlu0 %1056
    %v1062 = vadd.f32 %v1033, %v1051
    %v1063 = vadd.f32 %v1034, %v1053
    %v1064 = vadd.f32 %v1035, %v1055
    %v1065 = vadd.f32 %v1036, %v1057
    %1066 = vrot.lane.b32.xlu0 %v993, 125
    %v1067 = vpop.permute.xlu0 %1066
    %s1068 = vtos %v1067
    %v1069 = vstv %s1068
    %v1071 = vmul.f32 %v1069, %v996
    %v1072 = vmul.f32 %v1069, %v997
    %v1073 = vmul.f32 %v1069, %v998
    %v1074 = vmul.f32 %v1069, %v999
    %1079 = vrot.lane.b32.xlu0 %v1071, 119
    %v1080 = vpop.permute.xlu0 %1079
    %1081 = vrot.lane.b32.xlu0 %v1072, 119
    %v1082 = vpop.permute.xlu0 %1081
    %1083 = vrot.lane.b32.xlu0 %v1073, 119
    %v1084 = vpop.permute.xlu0 %1083
    %1085 = vrot.lane.b32.xlu0 %v1074, 119
    %v1086 = vpop.permute.xlu0 %1085
    %v1091 = vadd.f32 %v1062, %v1080
    %v1092 = vadd.f32 %v1063, %v1082
    %v1093 = vadd.f32 %v1064, %v1084
    %v1094 = vadd.f32 %v1065, %v1086
    %1095 = vrot.lane.b32.xlu0 %v993, 124
    %v1096 = vpop.permute.xlu0 %1095
    %s1097 = vtos %v1096
    %v1098 = vstv %s1097
    %v1100 = vmul.f32 %v1098, %v996
    %v1101 = vmul.f32 %v1098, %v997
    %v1102 = vmul.f32 %v1098, %v998
    %v1103 = vmul.f32 %v1098, %v999
    %1108 = vrot.lane.b32.xlu0 %v1100, 116
    %v1109 = vpop.permute.xlu0 %1108
    %1110 = vrot.lane.b32.xlu0 %v1101, 116
    %v1111 = vpop.permute.xlu0 %1110
    %1112 = vrot.lane.b32.xlu0 %v1102, 116
    %v1113 = vpop.permute.xlu0 %1112
    %1114 = vrot.lane.b32.xlu0 %v1103, 116
    %v1115 = vpop.permute.xlu0 %1114
    %v1120 = vadd.f32 %v1091, %v1109
    %v1121 = vadd.f32 %v1092, %v1111
    %v1122 = vadd.f32 %v1093, %v1113
    %v1123 = vadd.f32 %v1094, %v1115
    %1124 = vrot.lane.b32.xlu0 %v993, 123
    %v1125 = vpop.permute.xlu0 %1124
    %s1126 = vtos %v1125
    %v1127 = vstv %s1126
    %v1129 = vmul.f32 %v1127, %v996
    %v1130 = vmul.f32 %v1127, %v997
    %v1131 = vmul.f32 %v1127, %v998
    %v1132 = vmul.f32 %v1127, %v999
    %1137 = vrot.lane.b32.xlu0 %v1129, 113
    %v1138 = vpop.permute.xlu0 %1137
    %1139 = vrot.lane.b32.xlu0 %v1130, 113
    %v1140 = vpop.permute.xlu0 %1139
    %1141 = vrot.lane.b32.xlu0 %v1131, 113
    %v1142 = vpop.permute.xlu0 %1141
    %1143 = vrot.lane.b32.xlu0 %v1132, 113
    %v1144 = vpop.permute.xlu0 %1143
    %v1149 = vadd.f32 %v1120, %v1138
    %v1150 = vadd.f32 %v1121, %v1140
    %v1151 = vadd.f32 %v1122, %v1142
    %v1152 = vadd.f32 %v1123, %v1144
    %1153 = vrot.lane.b32.xlu0 %v993, 122
    %v1154 = vpop.permute.xlu0 %1153
    %s1155 = vtos %v1154
    %v1156 = vstv %s1155
    %v1158 = vmul.f32 %v1156, %v996
    %v1159 = vmul.f32 %v1156, %v997
    %v1160 = vmul.f32 %v1156, %v998
    %v1161 = vmul.f32 %v1156, %v999
    %1166 = vrot.lane.b32.xlu0 %v1158, 110
    %v1167 = vpop.permute.xlu0 %1166
    %1168 = vrot.lane.b32.xlu0 %v1159, 110
    %v1169 = vpop.permute.xlu0 %1168
    %1170 = vrot.lane.b32.xlu0 %v1160, 110
    %v1171 = vpop.permute.xlu0 %1170
    %1172 = vrot.lane.b32.xlu0 %v1161, 110
    %v1173 = vpop.permute.xlu0 %1172
    %v1178 = vadd.f32 %v1149, %v1167
    %v1179 = vadd.f32 %v1150, %v1169
    %v1180 = vadd.f32 %v1151, %v1171
    %v1181 = vadd.f32 %v1152, %v1173
    %1182 = vrot.lane.b32.xlu0 %v993, 121
    %v1183 = vpop.permute.xlu0 %1182
    %s1184 = vtos %v1183
    %v1185 = vstv %s1184
    %v1187 = vmul.f32 %v1185, %v996
    %v1188 = vmul.f32 %v1185, %v997
    %v1189 = vmul.f32 %v1185, %v998
    %v1190 = vmul.f32 %v1185, %v999
    %1195 = vrot.lane.b32.xlu0 %v1187, 107
    %v1196 = vpop.permute.xlu0 %1195
    %1197 = vrot.lane.b32.xlu0 %v1188, 107
    %v1198 = vpop.permute.xlu0 %1197
    %1199 = vrot.lane.b32.xlu0 %v1189, 107
    %v1200 = vpop.permute.xlu0 %1199
    %1201 = vrot.lane.b32.xlu0 %v1190, 107
    %v1202 = vpop.permute.xlu0 %1201
    %v1207 = vadd.f32 %v1178, %v1196
    %v1208 = vadd.f32 %v1179, %v1198
    %v1209 = vadd.f32 %v1180, %v1200
    %v1210 = vadd.f32 %v1181, %v1202
    %1211 = vrot.lane.b32.xlu0 %v993, 120
    %v1212 = vpop.permute.xlu0 %1211
    %s1213 = vtos %v1212
    %v1214 = vstv %s1213
    %v1216 = vmul.f32 %v1214, %v996
    %v1217 = vmul.f32 %v1214, %v997
    %v1218 = vmul.f32 %v1214, %v998
    %v1219 = vmul.f32 %v1214, %v999
    %1224 = vrot.lane.b32.xlu0 %v1216, 104
    %v1225 = vpop.permute.xlu0 %1224
    %1226 = vrot.lane.b32.xlu0 %v1217, 104
    %v1227 = vpop.permute.xlu0 %1226
    %1228 = vrot.lane.b32.xlu0 %v1218, 104
    %v1229 = vpop.permute.xlu0 %1228
    %1230 = vrot.lane.b32.xlu0 %v1219, 104
    %v1231 = vpop.permute.xlu0 %1230
    %v1236 = vadd.f32 %v1207, %v1225
    %v1237 = vadd.f32 %v1208, %v1227
    %v1238 = vadd.f32 %v1209, %v1229
    %v1239 = vadd.f32 %v1210, %v1231
    %v1240 = vld [vmem:[%s2] sm:$0xff]
    %v1241 = vld [vmem:[%s2 + $0x8] sm:$0xff]
    %v1242 = vld [vmem:[%s2 + $0x10] sm:$0xff]
    %v1243 = vld [vmem:[%s2 + $0x18] sm:$0xff]
    %v1244 = vld [vmem:[%s7] sm:$0xff]
    %v1245 = vld [vmem:[%s7 + $0x8] sm:$0xff]
    %v1246 = vld [vmem:[%s7 + $0x10] sm:$0xff]
    %v1247 = vld [vmem:[%s7 + $0x18] sm:$0xff]
    %v1248 = vld [vmem:[%s7 + $0x20] sm:$0xff]
    %v1249 = vld [vmem:[%s7 + $0x28] sm:$0xff]
    %v1250 = vld [vmem:[%s7 + $0x30] sm:$0x3f]
    %v1251 = vld [vmem:[%s7 + $0x38] sm:$0x3f]
    %v1252 = vld [vmem:[%s8] sm:$0x3]
    %v1254 = vlaneseq
    %v1255 = vshrl.u32 %v1254, 7
    %v1256 = vsub.s32 0, %v1255
    %v1257 = vrot.slane %v1252, %v1256
    %v1258 = vlaneseq
    %v1259 = vshrl.u32 %v1258, 7
    %v1260 = vsub.s32 1, %v1259
    %v1261 = vrot.slane %v1252, %v1260
    %vm1264 = vcmask 244736
    %v1266 = vsel %vm1264, %v1240, 0
    %v1269 = vsel %vm1264, %v1241, 0
    %v1272 = vsel %vm1264, %v1242, 0
    %v1275 = vsel %vm1264, %v1243, 0
    %vm1277 = vcmask 1045504
    %v1279 = vsel %vm1277, %v1250, 0
    %v1282 = vsel %vm1277, %v1251, 0
    %1284 = vmatprep.subr.mxu0 %v1245
    %1285 = vmatpush1.msra.mxu0 %v1244
    %1286 = vmatprep.subr.mxu0 %v1247
    %1287 = vmatpush1.msra.mxu0 %v1246
    %1288 = vmatprep.subr.mxu0 %v1249
    %1289 = vmatpush1.msra.mxu0 %v1248
    %1290 = vmatprep.subr.mxu0 %v1282
    %1291 = vmatpush1.msra.mxu0 %v1279
    %1292 = vmatprep.subr.mxu0 0.0
    %1293 = vmatpush1.msra.mxu0 0.0
    %1294 = vmatprep.subr.mxu0 0.0
    %1295 = vmatpush1.msra.mxu0 0.0
    %1296 = vmatprep.subr.mxu0 0.0
    %1297 = vmatpush1.msra.mxu0 0.0
    %1298 = vmatprep.subr.mxu0 0.0
    %1299 = vmatpush1.msra.mxu0 0.0
    %1300 = vmatprep.subr.mxu0 0.0
    %1301 = vmatpush1.msra.mxu0 0.0
    %1302 = vmatprep.subr.mxu0 0.0
    %1303 = vmatpush1.msra.mxu0 0.0
    %1304 = vmatprep.subr.mxu0 0.0
    %1305 = vmatpush1.msra.mxu0 0.0
    %1306 = vmatprep.subr.mxu0 0.0
    %1307 = vmatpush1.msra.mxu0 0.0
    %1308 = vmatprep.subr.mxu0 0.0
    %1309 = vmatpush1.msra.mxu0 0.0
    %1310 = vmatprep.subr.mxu0 0.0
    %1311 = vmatpush1.msra.mxu0 0.0
    %1312 = vmatprep.subr.mxu0 0.0
    %1313 = vmatpush1.msra.mxu0 0.0
    %1314 = vmatprep.subr.mxu0 0.0
    %1315 = vmatpush1.msra.mxu0 0.0
    %1316 = vmatprep.subr.mxu0 0.0
    %1317 = vmatpush1.msra.mxu0 0.0
    %1318 = vmatprep.subr.mxu0 0.0
    %1319 = vmatpush1.msra.mxu0 0.0
    %1320 = vmatprep.subr.mxu0 0.0
    %1321 = vmatpush1.msra.mxu0 0.0
    %1322 = vmatprep.subr.mxu0 0.0
    %1323 = vmatpush1.msra.mxu0 0.0
    %1324 = vmatprep.subr.mxu0 0.0
    %1325 = vmatpush1.msra.mxu0 0.0
    %1326 = vmatprep.subr.mxu0 0.0
    %1327 = vmatpush1.msra.mxu0 0.0
    %1328 = vmatprep.subr.mxu0 0.0
    %1329 = vmatpush1.msra.mxu0 0.0
    %1330 = vmatprep.subr.mxu0 0.0
    %1331 = vmatpush1.msra.mxu0 0.0
    %1332 = vmatprep.subr.mxu0 0.0
    %1333 = vmatpush1.msra.mxu0 0.0
    %1334 = vmatprep.subr.mxu0 0.0
    %1335 = vmatpush1.msra.mxu0 0.0
    %1336 = vmatprep.subr.mxu0 0.0
    %1337 = vmatpush1.msra.mxu0 0.0
    %1338 = vmatprep.subr.mxu0 0.0
    %1339 = vmatpush1.msra.mxu0 0.0
    %1340 = vmatprep.subr.mxu0 0.0
    %1341 = vmatpush1.msra.mxu0 0.0
    %1342 = vmatprep.subr.mxu0 0.0
    %1343 = vmatpush1.msra.mxu0 0.0
    %1344 = vmatprep.subr.mxu0 0.0
    %1345 = vmatpush1.msra.mxu0 0.0
    %1346 = vmatprep.subr.mxu0 0.0
    %1347 = vmatpush1.msra.mxu0 0.0
    %1348 = vmatprep.mubr.f32.mxu0 0.0
    %1349 = vmatmul.mubr.f32.gmra.mrb[0].mxu0 %v1266
    %v1350 = vpop.f32.mrb[0].mxu0
    %v1351 = vadd.f32 %v1257, %v1350
    %v1352 = vpop.f32.mrb[0].mxu0
    %v1353 = vadd.f32 %v1261, %v1352
    %1354 = vmatprep.mubr.f32.mxu0 0.0
    %1355 = vmatmul.mubr.f32.gmra.mrb[0].mxu0 %v1269
    %v1356 = vpop.f32.mrb[0].mxu0
    %v1357 = vadd.f32 %v1257, %v1356
    %v1358 = vpop.f32.mrb[0].mxu0
    %v1359 = vadd.f32 %v1261, %v1358
    %1360 = vmatprep.mubr.f32.mxu0 0.0
    %1361 = vmatmul.mubr.f32.gmra.mrb[0].mxu0 %v1272
    %v1362 = vpop.f32.mrb[0].mxu0
    %v1363 = vadd.f32 %v1257, %v1362
    %v1364 = vpop.f32.mrb[0].mxu0
    %v1365 = vadd.f32 %v1261, %v1364
    %1366 = vmatprep.mubr.f32.mxu0 0.0
    %1367 = vmatmul.mubr.f32.gmra.mrb[0].mxu0 %v1275
    %v1368 = vpop.f32.mrb[0].mxu0
    %v1369 = vadd.f32 %v1257, %v1368
    %v1370 = vpop.f32.mrb[0].mxu0
    %v1371 = vadd.f32 %v1261, %v1370
    %1372 = vdwg.mxu0
    %v1373 = vld [vmem:[%s9] sm:$0xff]
    %v1374 = vld [vmem:[%s9 + $0x8] sm:$0xff]
    %v1375 = vld [vmem:[%s9 + $0x10] sm:$0xff]
    %v1376 = vld [vmem:[%s9 + $0x18] sm:$0x3f]
    %v1377 = vld [vmem:[%s10] sm:$0x1]
    %v1379 = vlaneseq
    %v1380 = vshrl.u32 %v1379, 7
    %v1381 = vsub.s32 0, %v1380
    %v1382 = vrot.slane %v1377, %v1381
    %v1385 = vsel %vm1277, %v1376, 0
    %1387 = vmatprep.subr.mxu0 0.0
    %1388 = vmatpush1.msra.mxu0 %v1373
    %1389 = vmatprep.subr.mxu0 0.0
    %1390 = vmatpush1.msra.mxu0 %v1374
    %1391 = vmatprep.subr.mxu0 0.0
    %1392 = vmatpush1.msra.mxu0 %v1375
    %1393 = vmatprep.subr.mxu0 0.0
    %1394 = vmatpush1.msra.mxu0 %v1385
    %1395 = vmatprep.subr.mxu0 0.0
    %1396 = vmatpush1.msra.mxu0 0.0
    %1397 = vmatprep.subr.mxu0 0.0
    %1398 = vmatpush1.msra.mxu0 0.0
    %1399 = vmatprep.subr.mxu0 0.0
    %1400 = vmatpush1.msra.mxu0 0.0
    %1401 = vmatprep.subr.mxu0 0.0
    %1402 = vmatpush1.msra.mxu0 0.0
    %1403 = vmatprep.subr.mxu0 0.0
    %1404 = vmatpush1.msra.mxu0 0.0
    %1405 = vmatprep.subr.mxu0 0.0
    %1406 = vmatpush1.msra.mxu0 0.0
    %1407 = vmatprep.subr.mxu0 0.0
    %1408 = vmatpush1.msra.mxu0 0.0
    %1409 = vmatprep.subr.mxu0 0.0
    %1410 = vmatpush1.msra.mxu0 0.0
    %1411 = vmatprep.subr.mxu0 0.0
    %1412 = vmatpush1.msra.mxu0 0.0
    %1413 = vmatprep.subr.mxu0 0.0
    %1414 = vmatpush1.msra.mxu0 0.0
    %1415 = vmatprep.subr.mxu0 0.0
    %1416 = vmatpush1.msra.mxu0 0.0
    %1417 = vmatprep.subr.mxu0 0.0
    %1418 = vmatpush1.msra.mxu0 0.0
    %1419 = vmatprep.subr.mxu0 0.0
    %1420 = vmatpush1.msra.mxu0 0.0
    %1421 = vmatprep.subr.mxu0 0.0
    %1422 = vmatpush1.msra.mxu0 0.0
    %1423 = vmatprep.subr.mxu0 0.0
    %1424 = vmatpush1.msra.mxu0 0.0
    %1425 = vmatprep.subr.mxu0 0.0
    %1426 = vmatpush1.msra.mxu0 0.0
    %1427 = vmatprep.subr.mxu0 0.0
    %1428 = vmatpush1.msra.mxu0 0.0
    %1429 = vmatprep.subr.mxu0 0.0
    %1430 = vmatpush1.msra.mxu0 0.0
    %1431 = vmatprep.subr.mxu0 0.0
    %1432 = vmatpush1.msra.mxu0 0.0
    %1433 = vmatprep.subr.mxu0 0.0
    %1434 = vmatpush1.msra.mxu0 0.0
    %1435 = vmatprep.subr.mxu0 0.0
    %1436 = vmatpush1.msra.mxu0 0.0
    %1437 = vmatprep.subr.mxu0 0.0
    %1438 = vmatpush1.msra.mxu0 0.0
    %1439 = vmatprep.subr.mxu0 0.0
    %1440 = vmatpush1.msra.mxu0 0.0
    %1441 = vmatprep.subr.mxu0 0.0
    %1442 = vmatpush1.msra.mxu0 0.0
    %1443 = vmatprep.subr.mxu0 0.0
    %1444 = vmatpush1.msra.mxu0 0.0
    %1445 = vmatprep.subr.mxu0 0.0
    %1446 = vmatpush1.msra.mxu0 0.0
    %1447 = vmatprep.subr.mxu0 0.0
    %1448 = vmatpush1.msra.mxu0 0.0
    %1449 = vmatprep.subr.mxu0 0.0
    %1450 = vmatpush1.msra.mxu0 0.0
    %1451 = vmatprep.mubr.f32.mxu0 0.0
    %1452 = vmatmul.mubr.f32.gmra.mrb[0].mxu0 %v1266
    %v1453 = vpop.f32.mrb[0].mxu0
    %v1454 = vadd.f32 %v1382, %v1453
    %v1455 = vpop.f32.mrb[0].mxu0
    %1456 = vmatprep.mubr.f32.mxu0 0.0
    %1457 = vmatmul.mubr.f32.gmra.mrb[0].mxu0 %v1269
    %v1458 = vpop.f32.mrb[0].mxu0
    %v1459 = vadd.f32 %v1382, %v1458
    %v1460 = vpop.f32.mrb[0].mxu0
    %1461 = vmatprep.mubr.f32.mxu0 0.0
    %1462 = vmatmul.mubr.f32.gmra.mrb[0].mxu0 %v1272
    %v1463 = vpop.f32.mrb[0].mxu0
    %v1464 = vadd.f32 %v1382, %v1463
    %v1465 = vpop.f32.mrb[0].mxu0
    %1466 = vmatprep.mubr.f32.mxu0 0.0
    %1467 = vmatmul.mubr.f32.gmra.mrb[0].mxu0 %v1275
    %v1468 = vpop.f32.mrb[0].mxu0
    %v1469 = vadd.f32 %v1382, %v1468
    %v1470 = vpop.f32.mrb[0].mxu0
    %1471 = vdwg.mxu0
    %v1472 = vld [vmem:[%s11] sm:$0x1]
    %v1474 = vlaneseq
    %v1475 = vshrl.u32 %v1474, 7
    %v1476 = vsub.s32 0, %v1475
    %v1477 = vrot.slane %v1472, %v1476
    %v1479 = vmul.f32 %v1477, %v1236
    %v1480 = vmul.f32 %v1477, %v1237
    %v1481 = vmul.f32 %v1477, %v1238
    %v1482 = vmul.f32 %v1477, %v1239
    %1487 = vrot.lane.b32.xlu0 %v1479, 127
    %v1488 = vpop.permute.xlu0 %1487
    %1489 = vrot.lane.b32.xlu0 %v1480, 127
    %v1490 = vpop.permute.xlu0 %1489
    %1491 = vrot.lane.b32.xlu0 %v1481, 127
    %v1492 = vpop.permute.xlu0 %1491
    %1493 = vrot.lane.b32.xlu0 %v1482, 127
    %v1494 = vpop.permute.xlu0 %1493
    %v1499 = vadd.f32 %v1479, %v1488
    %v1500 = vadd.f32 %v1480, %v1490
    %v1501 = vadd.f32 %v1481, %v1492
    %v1502 = vadd.f32 %v1482, %v1494
    %1503 = vrot.lane.b32.xlu0 %v1479, 126
    %v1504 = vpop.permute.xlu0 %1503
    %1505 = vrot.lane.b32.xlu0 %v1480, 126
    %v1506 = vpop.permute.xlu0 %1505
    %1507 = vrot.lane.b32.xlu0 %v1481, 126
    %v1508 = vpop.permute.xlu0 %1507
    %1509 = vrot.lane.b32.xlu0 %v1482, 126
    %v1510 = vpop.permute.xlu0 %1509
    %v1515 = vadd.f32 %v1499, %v1504
    %v1516 = vadd.f32 %v1500, %v1506
    %v1517 = vadd.f32 %v1501, %v1508
    %v1518 = vadd.f32 %v1502, %v1510
    %v1519 = vld [vmem:[#allocation2] sm:$0x1]
    %v1521 = vlaneseq
    %v1522 = vshrl.u32 %v1521, 7
    %v1523 = vsub.s32 0, %v1522
    %v1524 = vrot.slane %v1519, %v1523
    %v1526 = vadd.f32 %v1515, %v1524
    %v1527 = vadd.f32 %v1516, %v1524
    %v1528 = vadd.f32 %v1517, %v1524
    %v1529 = vadd.f32 %v1518, %v1524
    %1531 = vset.pattern.permute.xlu0 0
    %1532 = vperm.xlu0 %1531, %v1526
    %v1533 = vpop.permute.xlu0 %1532
    %1536 = vset.pattern.permute.xlu0 0
    %1537 = vperm.xlu0 %1536, %v1527
    %v1538 = vpop.permute.xlu0 %1537
    %1541 = vset.pattern.permute.xlu0 0
    %1542 = vperm.xlu0 %1541, %v1528
    %v1543 = vpop.permute.xlu0 %1542
    %1546 = vset.pattern.permute.xlu0 0
    %1547 = vperm.xlu0 %1546, %v1529
    %v1548 = vpop.permute.xlu0 %1547
    %v1550 = vadd.f32 %v1454, %v1533
    %v1551 = vadd.f32 %v1459, %v1538
    %v1552 = vadd.f32 %v1464, %v1543
    %v1553 = vadd.f32 %v1469, %v1548
    %vm1554 = vcmask 80896
    %v1555 = vsel %vm1554, %v1550, -inf
    %v1556 = vsel %vm1554, %v1551, -inf
    %v1557 = vsel %vm1554, %v1552, -inf
    %v1558 = vsel %vm1554, %v1553, -inf
    %v1559 = vmax.f32 %v1555, %v1556
    %v1560 = vmax.f32 %v1557, %v1558
    %v1561 = vmax.f32 %v1559, %v1560
    %v1562 = vrot.slane %v1561, 4
    %v1563 = vmax.f32 %v1561, %v1562
    %v1564 = vrot.slane %v1563, 2
    %v1565 = vmax.f32 %v1563, %v1564
    %v1566 = vrot.slane %v1565, 1
    %v1567 = vmax.f32 %v1565, %v1566
    %v1568 = vsub.f32 %v1550, %v1567
    %v1569 = vsub.f32 %v1551, %v1567
    %v1570 = vsub.f32 %v1552, %v1567
    %v1571 = vsub.f32 %v1553, %v1567
    %v1572 = vmul.f32 %v1568, 1.442695
    %v1573 = vpow.pop %v1572
    %v1574 = vmul.f32 %v1569, 1.442695
    %v1575 = vpow.pop %v1574
    %v1576 = vmul.f32 %v1570, 1.442695
    %v1577 = vpow.pop %v1576
    %v1578 = vmul.f32 %v1571, 1.442695
    %v1579 = vpow.pop %v1578
    %v1580 = vsel %vm1554, %v1573, 0.0
    %v1581 = vsel %vm1554, %v1575, 0.0
    %v1582 = vadd.f32 %v1580, %v1581
    %v1583 = vsel %vm1554, %v1577, 0.0
    %v1584 = vadd.f32 %v1582, %v1583
    %v1585 = vsel %vm1554, %v1579, 0.0
    %v1586 = vadd.f32 %v1584, %v1585
    %v1587 = vrot.slane %v1586, 4
    %v1588 = vadd.f32 %v1586, %v1587
    %v1589 = vrot.slane %v1588, 2
    %v1590 = vadd.f32 %v1588, %v1589
    %v1591 = vrot.slane %v1590, 1
    %v1592 = vadd.f32 %v1590, %v1591
    %v1593 = vrcp.pop %v1592
    %v1594 = vmul.f32 %v1573, %v1593
    %v1595 = vmul.f32 %v1575, %v1593
    %v1596 = vmul.f32 %v1577, %v1593
    %v1597 = vmul.f32 %v1579, %v1593
    %1599 = vset.pattern.permute.xlu0 0
    %1600 = vperm.xlu0 %1599, %v1594
    %v1601 = vpop.permute.xlu0 %1600
    %1604 = vset.pattern.permute.xlu0 0
    %1605 = vperm.xlu0 %1604, %v1595
    %v1606 = vpop.permute.xlu0 %1605
    %1609 = vset.pattern.permute.xlu0 0
    %1610 = vperm.xlu0 %1609, %v1596
    %v1611 = vpop.permute.xlu0 %1610
    %1614 = vset.pattern.permute.xlu0 0
    %1615 = vperm.xlu0 %1614, %v1597
    %v1616 = vpop.permute.xlu0 %1615
    %v1618 = vmul.f32 %v1601, %v1351
    %v1619 = vmul.f32 %v1606, %v1357
    %v1620 = vmul.f32 %v1611, %v1363
    %v1621 = vmul.f32 %v1616, %v1369
    %1622 = vset.pattern.permute.xlu0 1
    %1623 = vperm.xlu0 %1622, %v1594
    %v1624 = vpop.permute.xlu0 %1623
    %1626 = vset.pattern.permute.xlu0 1
    %1627 = vperm.xlu0 %1626, %v1595
    %v1628 = vpop.permute.xlu0 %1627
    %1630 = vset.pattern.permute.xlu0 1
    %1631 = vperm.xlu0 %1630, %v1596
    %v1632 = vpop.permute.xlu0 %1631
    %1634 = vset.pattern.permute.xlu0 1
    %1635 = vperm.xlu0 %1634, %v1597
    %v1636 = vpop.permute.xlu0 %1635
    %v1638 = vmul.f32 %v1624, %v1351
    %v1639 = vmul.f32 %v1628, %v1357
    %v1640 = vmul.f32 %v1632, %v1363
    %v1641 = vmul.f32 %v1636, %v1369
    %1646 = vrot.lane.b32.xlu0 %v1638, 112
    %v1647 = vpop.permute.xlu0 %1646
    %1648 = vrot.lane.b32.xlu0 %v1639, 112
    %v1649 = vpop.permute.xlu0 %1648
    %1650 = vrot.lane.b32.xlu0 %v1640, 112
    %v1651 = vpop.permute.xlu0 %1650
    %1652 = vrot.lane.b32.xlu0 %v1641, 112
    %v1653 = vpop.permute.xlu0 %1652
    %v1658 = vadd.f32 %v1618, %v1647
    %v1659 = vadd.f32 %v1619, %v1649
    %v1660 = vadd.f32 %v1620, %v1651
    %v1661 = vadd.f32 %v1621, %v1653
    %1666 = vrot.lane.b32.xlu0 %v1351, 112
    %v1667 = vpop.permute.xlu0 %1666
    %1668 = vrot.lane.b32.xlu0 %v1357, 112
    %v1669 = vpop.permute.xlu0 %1668
    %1670 = vrot.lane.b32.xlu0 %v1363, 112
    %v1671 = vpop.permute.xlu0 %1670
    %1672 = vrot.lane.b32.xlu0 %v1369, 112
    %v1673 = vpop.permute.xlu0 %1672
    %v1678 = vmax.f32 %v1351, %v1667
    %v1679 = vmax.f32 %v1357, %v1669
    %v1680 = vmax.f32 %v1363, %v1671
    %v1681 = vmax.f32 %v1369, %v1673
    %1682 = vset.pattern.permute.xlu0 2
    %1683 = vperm.xlu0 %1682, %v1594
    %v1684 = vpop.permute.xlu0 %1683
    %1686 = vset.pattern.permute.xlu0 2
    %1687 = vperm.xlu0 %1686, %v1595
    %v1688 = vpop.permute.xlu0 %1687
    %1690 = vset.pattern.permute.xlu0 2
    %1691 = vperm.xlu0 %1690, %v1596
    %v1692 = vpop.permute.xlu0 %1691
    %1694 = vset.pattern.permute.xlu0 2
    %1695 = vperm.xlu0 %1694, %v1597
    %v1696 = vpop.permute.xlu0 %1695
    %v1698 = vmul.f32 %v1684, %v1351
    %v1699 = vmul.f32 %v1688, %v1357
    %v1700 = vmul.f32 %v1692, %v1363
    %v1701 = vmul.f32 %v1696, %v1369
    %1706 = vrot.lane.b32.xlu0 %v1698, 96
    %v1707 = vpop.permute.xlu0 %1706
    %1708 = vrot.lane.b32.xlu0 %v1699, 96
    %v1709 = vpop.permute.xlu0 %1708
    %1710 = vrot.lane.b32.xlu0 %v1700, 96
    %v1711 = vpop.permute.xlu0 %1710
    %1712 = vrot.lane.b32.xlu0 %v1701, 96
    %v1713 = vpop.permute.xlu0 %1712
    %v1718 = vadd.f32 %v1658, %v1707
    %v1719 = vadd.f32 %v1659, %v1709
    %v1720 = vadd.f32 %v1660, %v1711
    %v1721 = vadd.f32 %v1661, %v1713
    %1722 = vrot.lane.b32.xlu0 %v1351, 96
    %v1723 = vpop.permute.xlu0 %1722
    %1724 = vrot.lane.b32.xlu0 %v1357, 96
    %v1725 = vpop.permute.xlu0 %1724
    %1726 = vrot.lane.b32.xlu0 %v1363, 96
    %v1727 = vpop.permute.xlu0 %1726
    %1728 = vrot.lane.b32.xlu0 %v1369, 96
    %v1729 = vpop.permute.xlu0 %1728
    %v1734 = vmax.f32 %v1678, %v1723
    %v1735 = vmax.f32 %v1679, %v1725
    %v1736 = vmax.f32 %v1680, %v1727
    %v1737 = vmax.f32 %v1681, %v1729
    %1738 = vset.pattern.permute.xlu0 3
    %1739 = vperm.xlu0 %1738, %v1594
    %v1740 = vpop.permute.xlu0 %1739
    %1742 = vset.pattern.permute.xlu0 3
    %1743 = vperm.xlu0 %1742, %v1595
    %v1744 = vpop.permute.xlu0 %1743
    %1746 = vset.pattern.permute.xlu0 3
    %1747 = vperm.xlu0 %1746, %v1596
    %v1748 = vpop.permute.xlu0 %1747
    %1750 = vset.pattern.permute.xlu0 3
    %1751 = vperm.xlu0 %1750, %v1597
    %v1752 = vpop.permute.xlu0 %1751
    %v1754 = vmul.f32 %v1740, %v1351
    %v1755 = vmul.f32 %v1744, %v1357
    %v1756 = vmul.f32 %v1748, %v1363
    %v1757 = vmul.f32 %v1752, %v1369
    %1762 = vrot.lane.b32.xlu0 %v1754, 80
    %v1763 = vpop.permute.xlu0 %1762
    %1764 = vrot.lane.b32.xlu0 %v1755, 80
    %v1765 = vpop.permute.xlu0 %1764
    %1766 = vrot.lane.b32.xlu0 %v1756, 80
    %v1767 = vpop.permute.xlu0 %1766
    %1768 = vrot.lane.b32.xlu0 %v1757, 80
    %v1769 = vpop.permute.xlu0 %1768
    %v1774 = vadd.f32 %v1718, %v1763
    %v1775 = vadd.f32 %v1719, %v1765
    %v1776 = vadd.f32 %v1720, %v1767
    %v1777 = vadd.f32 %v1721, %v1769
    %1778 = vrot.lane.b32.xlu0 %v1351, 80
    %v1779 = vpop.permute.xlu0 %1778
    %1780 = vrot.lane.b32.xlu0 %v1357, 80
    %v1781 = vpop.permute.xlu0 %1780
    %1782 = vrot.lane.b32.xlu0 %v1363, 80
    %v1783 = vpop.permute.xlu0 %1782
    %1784 = vrot.lane.b32.xlu0 %v1369, 80
    %v1785 = vpop.permute.xlu0 %1784
    %v1790 = vmax.f32 %v1734, %v1779
    %v1791 = vmax.f32 %v1735, %v1781
    %v1792 = vmax.f32 %v1736, %v1783
    %v1793 = vmax.f32 %v1737, %v1785
    %1794 = vset.pattern.permute.xlu0 4
    %1795 = vperm.xlu0 %1794, %v1594
    %v1796 = vpop.permute.xlu0 %1795
    %1798 = vset.pattern.permute.xlu0 4
    %1799 = vperm.xlu0 %1798, %v1595
    %v1800 = vpop.permute.xlu0 %1799
    %1802 = vset.pattern.permute.xlu0 4
    %1803 = vperm.xlu0 %1802, %v1596
    %v1804 = vpop.permute.xlu0 %1803
    %1806 = vset.pattern.permute.xlu0 4
    %1807 = vperm.xlu0 %1806, %v1597
    %v1808 = vpop.permute.xlu0 %1807
    %v1810 = vmul.f32 %v1796, %v1351
    %v1811 = vmul.f32 %v1800, %v1357
    %v1812 = vmul.f32 %v1804, %v1363
    %v1813 = vmul.f32 %v1808, %v1369
    %1818 = vrot.lane.b32.xlu0 %v1810, 64
    %v1819 = vpop.permute.xlu0 %1818
    %1820 = vrot.lane.b32.xlu0 %v1811, 64
    %v1821 = vpop.permute.xlu0 %1820
    %1822 = vrot.lane.b32.xlu0 %v1812, 64
    %v1823 = vpop.permute.xlu0 %1822
    %1824 = vrot.lane.b32.xlu0 %v1813, 64
    %v1825 = vpop.permute.xlu0 %1824
    %v1830 = vadd.f32 %v1774, %v1819
    %v1831 = vadd.f32 %v1775, %v1821
    %v1832 = vadd.f32 %v1776, %v1823
    %v1833 = vadd.f32 %v1777, %v1825
    %1834 = vrot.lane.b32.xlu0 %v1351, 64
    %v1835 = vpop.permute.xlu0 %1834
    %1836 = vrot.lane.b32.xlu0 %v1357, 64
    %v1837 = vpop.permute.xlu0 %1836
    %1838 = vrot.lane.b32.xlu0 %v1363, 64
    %v1839 = vpop.permute.xlu0 %1838
    %1840 = vrot.lane.b32.xlu0 %v1369, 64
    %v1841 = vpop.permute.xlu0 %1840
    %v1846 = vmax.f32 %v1790, %v1835
    %v1847 = vmax.f32 %v1791, %v1837
    %v1848 = vmax.f32 %v1792, %v1839
    %v1849 = vmax.f32 %v1793, %v1841
    %1850 = vset.pattern.permute.xlu0 5
    %1851 = vperm.xlu0 %1850, %v1594
    %v1852 = vpop.permute.xlu0 %1851
    %1854 = vset.pattern.permute.xlu0 5
    %1855 = vperm.xlu0 %1854, %v1595
    %v1856 = vpop.permute.xlu0 %1855
    %1858 = vset.pattern.permute.xlu0 5
    %1859 = vperm.xlu0 %1858, %v1596
    %v1860 = vpop.permute.xlu0 %1859
    %1862 = vset.pattern.permute.xlu0 5
    %1863 = vperm.xlu0 %1862, %v1597
    %v1864 = vpop.permute.xlu0 %1863
    %v1866 = vmul.f32 %v1852, %v1351
    %v1867 = vmul.f32 %v1856, %v1357
    %v1868 = vmul.f32 %v1860, %v1363
    %v1869 = vmul.f32 %v1864, %v1369
    %1874 = vrot.lane.b32.xlu0 %v1866, 48
    %v1875 = vpop.permute.xlu0 %1874
    %1876 = vrot.lane.b32.xlu0 %v1867, 48
    %v1877 = vpop.permute.xlu0 %1876
    %1878 = vrot.lane.b32.xlu0 %v1868, 48
    %v1879 = vpop.permute.xlu0 %1878
    %1880 = vrot.lane.b32.xlu0 %v1869, 48
    %v1881 = vpop.permute.xlu0 %1880
    %v1886 = vadd.f32 %v1830, %v1875
    %v1887 = vadd.f32 %v1831, %v1877
    %v1888 = vadd.f32 %v1832, %v1879
    %v1889 = vadd.f32 %v1833, %v1881
    %1890 = vrot.lane.b32.xlu0 %v1351, 48
    %v1891 = vpop.permute.xlu0 %1890
    %1892 = vrot.lane.b32.xlu0 %v1357, 48
    %v1893 = vpop.permute.xlu0 %1892
    %1894 = vrot.lane.b32.xlu0 %v1363, 48
    %v1895 = vpop.permute.xlu0 %1894
    %1896 = vrot.lane.b32.xlu0 %v1369, 48
    %v1897 = vpop.permute.xlu0 %1896
    %v1902 = vmax.f32 %v1846, %v1891
    %v1903 = vmax.f32 %v1847, %v1893
    %v1904 = vmax.f32 %v1848, %v1895
    %v1905 = vmax.f32 %v1849, %v1897
    %1906 = vset.pattern.permute.xlu0 6
    %1907 = vperm.xlu0 %1906, %v1594
    %v1908 = vpop.permute.xlu0 %1907
    %1910 = vset.pattern.permute.xlu0 6
    %1911 = vperm.xlu0 %1910, %v1595
    %v1912 = vpop.permute.xlu0 %1911
    %1914 = vset.pattern.permute.xlu0 6
    %1915 = vperm.xlu0 %1914, %v1596
    %v1916 = vpop.permute.xlu0 %1915
    %1918 = vset.pattern.permute.xlu0 6
    %1919 = vperm.xlu0 %1918, %v1597
    %v1920 = vpop.permute.xlu0 %1919
    %v1922 = vmul.f32 %v1908, %v1351
    %v1923 = vmul.f32 %v1912, %v1357
    %v1924 = vmul.f32 %v1916, %v1363
    %v1925 = vmul.f32 %v1920, %v1369
    %1930 = vrot.lane.b32.xlu0 %v1922, 32
    %v1931 = vpop.permute.xlu0 %1930
    %1932 = vrot.lane.b32.xlu0 %v1923, 32
    %v1933 = vpop.permute.xlu0 %1932
    %1934 = vrot.lane.b32.xlu0 %v1924, 32
    %v1935 = vpop.permute.xlu0 %1934
    %1936 = vrot.lane.b32.xlu0 %v1925, 32
    %v1937 = vpop.permute.xlu0 %1936
    %v1942 = vadd.f32 %v1886, %v1931
    %v1943 = vadd.f32 %v1887, %v1933
    %v1944 = vadd.f32 %v1888, %v1935
    %v1945 = vadd.f32 %v1889, %v1937
    %1946 = vrot.lane.b32.xlu0 %v1351, 32
    %v1947 = vpop.permute.xlu0 %1946
    %1948 = vrot.lane.b32.xlu0 %v1357, 32
    %v1949 = vpop.permute.xlu0 %1948
    %1950 = vrot.lane.b32.xlu0 %v1363, 32
    %v1951 = vpop.permute.xlu0 %1950
    %1952 = vrot.lane.b32.xlu0 %v1369, 32
    %v1953 = vpop.permute.xlu0 %1952
    %v1958 = vmax.f32 %v1902, %v1947
    %v1959 = vmax.f32 %v1903, %v1949
    %v1960 = vmax.f32 %v1904, %v1951
    %v1961 = vmax.f32 %v1905, %v1953
    %1962 = vset.pattern.permute.xlu0 7
    %1963 = vperm.xlu0 %1962, %v1594
    %v1964 = vpop.permute.xlu0 %1963
    %1966 = vset.pattern.permute.xlu0 7
    %1967 = vperm.xlu0 %1966, %v1595
    %v1968 = vpop.permute.xlu0 %1967
    %1970 = vset.pattern.permute.xlu0 7
    %1971 = vperm.xlu0 %1970, %v1596
    %v1972 = vpop.permute.xlu0 %1971
    %1974 = vset.pattern.permute.xlu0 7
    %1975 = vperm.xlu0 %1974, %v1597
    %v1976 = vpop.permute.xlu0 %1975
    %v1978 = vmul.f32 %v1964, %v1351
    %v1979 = vmul.f32 %v1968, %v1357
    %v1980 = vmul.f32 %v1972, %v1363
    %v1981 = vmul.f32 %v1976, %v1369
    %1986 = vrot.lane.b32.xlu0 %v1978, 16
    %v1987 = vpop.permute.xlu0 %1986
    %1988 = vrot.lane.b32.xlu0 %v1979, 16
    %v1989 = vpop.permute.xlu0 %1988
    %1990 = vrot.lane.b32.xlu0 %v1980, 16
    %v1991 = vpop.permute.xlu0 %1990
    %1992 = vrot.lane.b32.xlu0 %v1981, 16
    %v1993 = vpop.permute.xlu0 %1992
    %v1998 = vadd.f32 %v1942, %v1987
    %v1999 = vadd.f32 %v1943, %v1989
    %v2000 = vadd.f32 %v1944, %v1991
    %v2001 = vadd.f32 %v1945, %v1993
    %2002 = vrot.lane.b32.xlu0 %v1351, 16
    %v2003 = vpop.permute.xlu0 %2002
    %2004 = vrot.lane.b32.xlu0 %v1357, 16
    %v2005 = vpop.permute.xlu0 %2004
    %2006 = vrot.lane.b32.xlu0 %v1363, 16
    %v2007 = vpop.permute.xlu0 %2006
    %2008 = vrot.lane.b32.xlu0 %v1369, 16
    %v2009 = vpop.permute.xlu0 %2008
    %v2014 = vmax.f32 %v1958, %v2003
    %v2015 = vmax.f32 %v1959, %v2005
    %v2016 = vmax.f32 %v1960, %v2007
    %v2017 = vmax.f32 %v1961, %v2009
    %2018 = vset.pattern.permute.xlu0 8
    %2019 = vperm.xlu0 %2018, %v1594
    %v2020 = vpop.permute.xlu0 %2019
    %2022 = vset.pattern.permute.xlu0 8
    %2023 = vperm.xlu0 %2022, %v1595
    %v2024 = vpop.permute.xlu0 %2023
    %2026 = vset.pattern.permute.xlu0 8
    %2027 = vperm.xlu0 %2026, %v1596
    %v2028 = vpop.permute.xlu0 %2027
    %2030 = vset.pattern.permute.xlu0 8
    %2031 = vperm.xlu0 %2030, %v1597
    %v2032 = vpop.permute.xlu0 %2031
    %v2034 = vmul.f32 %v2020, %v1353
    %v2035 = vmul.f32 %v2024, %v1359
    %v2036 = vmul.f32 %v2028, %v1365
    %v2037 = vmul.f32 %v2032, %v1371
    %v2038 = vadd.f32 %v1998, %v2034
    %v2039 = vadd.f32 %v1999, %v2035
    %v2040 = vadd.f32 %v2000, %v2036
    %v2041 = vadd.f32 %v2001, %v2037
    %v2042 = vmax.f32 %v2014, %v1353
    %v2043 = vmax.f32 %v2015, %v1359
    %v2044 = vmax.f32 %v2016, %v1365
    %v2045 = vmax.f32 %v2017, %v1371
    %2046 = vset.pattern.permute.xlu0 9
    %2047 = vperm.xlu0 %2046, %v1594
    %v2048 = vpop.permute.xlu0 %2047
    %2050 = vset.pattern.permute.xlu0 9
    %2051 = vperm.xlu0 %2050, %v1595
    %v2052 = vpop.permute.xlu0 %2051
    %2054 = vset.pattern.permute.xlu0 9
    %2055 = vperm.xlu0 %2054, %v1596
    %v2056 = vpop.permute.xlu0 %2055
    %2058 = vset.pattern.permute.xlu0 9
    %2059 = vperm.xlu0 %2058, %v1597
    %v2060 = vpop.permute.xlu0 %2059
    %v2062 = vmul.f32 %v2048, %v1353
    %v2063 = vmul.f32 %v2052, %v1359
    %v2064 = vmul.f32 %v2056, %v1365
    %v2065 = vmul.f32 %v2060, %v1371
    %2070 = vrot.lane.b32.xlu0 %v2062, 112
    %v2071 = vpop.permute.xlu0 %2070
    %2072 = vrot.lane.b32.xlu0 %v2063, 112
    %v2073 = vpop.permute.xlu0 %2072
    %2074 = vrot.lane.b32.xlu0 %v2064, 112
    %v2075 = vpop.permute.xlu0 %2074
    %2076 = vrot.lane.b32.xlu0 %v2065, 112
    %v2077 = vpop.permute.xlu0 %2076
    %v2082 = vadd.f32 %v2038, %v2071
    %v2083 = vadd.f32 %v2039, %v2073
    %v2084 = vadd.f32 %v2040, %v2075
    %v2085 = vadd.f32 %v2041, %v2077
    %2090 = vrot.lane.b32.xlu0 %v1353, 112
    %v2091 = vpop.permute.xlu0 %2090
    %2092 = vrot.lane.b32.xlu0 %v1359, 112
    %v2093 = vpop.permute.xlu0 %2092
    %2094 = vrot.lane.b32.xlu0 %v1365, 112
    %v2095 = vpop.permute.xlu0 %2094
    %2096 = vrot.lane.b32.xlu0 %v1371, 112
    %v2097 = vpop.permute.xlu0 %2096
    %v2102 = vmax.f32 %v2042, %v2091
    %v2103 = vmax.f32 %v2043, %v2093
    %v2104 = vmax.f32 %v2044, %v2095
    %v2105 = vmax.f32 %v2045, %v2097
    %v2106 = vld [vmem:[%s13] sm:$0x7]
    %v2107 = vld [vmem:[%s14] sm:$0xff]
    %v2108 = vld [vmem:[%s14 + $0x8] sm:$0xff]
    %vm2109 = vcmask 130048
    %v2111 = vsel %vm2109, %v2082, 0
    %v2114 = vsel %vm2109, %v2083, 0
    %v2117 = vsel %vm2109, %v2084, 0
    %v2120 = vsel %vm2109, %v2085, 0
    %2122 = vmatprep.subr.mxu0 0.0
    %2123 = vmatpush1.msra.mxu0 %v2107
    %2124 = vmatprep.subr.mxu0 0.0
    %2125 = vmatpush1.msra.mxu0 %v2108
    %2126 = vmatprep.subr.mxu0 0.0
    %2127 = vmatpush1.msra.mxu0 0.0
    %2128 = vmatprep.subr.mxu0 0.0
    %2129 = vmatpush1.msra.mxu0 0.0
    %2130 = vmatprep.subr.mxu0 0.0
    %2131 = vmatpush1.msra.mxu0 0.0
    %2132 = vmatprep.subr.mxu0 0.0
    %2133 = vmatpush1.msra.mxu0 0.0
    %2134 = vmatprep.subr.mxu0 0.0
    %2135 = vmatpush1.msra.mxu0 0.0
    %2136 = vmatprep.subr.mxu0 0.0
    %2137 = vmatpush1.msra.mxu0 0.0
    %2138 = vmatprep.subr.mxu0 0.0
    %2139 = vmatpush1.msra.mxu0 0.0
    %2140 = vmatprep.subr.mxu0 0.0
    %2141 = vmatpush1.msra.mxu0 0.0
    %2142 = vmatprep.subr.mxu0 0.0
    %2143 = vmatpush1.msra.mxu0 0.0
    %2144 = vmatprep.subr.mxu0 0.0
    %2145 = vmatpush1.msra.mxu0 0.0
    %2146 = vmatprep.subr.mxu0 0.0
    %2147 = vmatpush1.msra.mxu0 0.0
    %2148 = vmatprep.subr.mxu0 0.0
    %2149 = vmatpush1.msra.mxu0 0.0
    %2150 = vmatprep.subr.mxu0 0.0
    %2151 = vmatpush1.msra.mxu0 0.0
    %2152 = vmatprep.subr.mxu0 0.0
    %2153 = vmatpush1.msra.mxu0 0.0
    %2154 = vmatprep.subr.mxu0 0.0
    %2155 = vmatpush1.msra.mxu0 0.0
    %2156 = vmatprep.subr.mxu0 0.0
    %2157 = vmatpush1.msra.mxu0 0.0
    %2158 = vmatprep.subr.mxu0 0.0
    %2159 = vmatpush1.msra.mxu0 0.0
    %2160 = vmatprep.subr.mxu0 0.0
    %2161 = vmatpush1.msra.mxu0 0.0
    %2162 = vmatprep.subr.mxu0 0.0
    %2163 = vmatpush1.msra.mxu0 0.0
    %2164 = vmatprep.subr.mxu0 0.0
    %2165 = vmatpush1.msra.mxu0 0.0
    %2166 = vmatprep.subr.mxu0 0.0
    %2167 = vmatpush1.msra.mxu0 0.0
    %2168 = vmatprep.subr.mxu0 0.0
    %2169 = vmatpush1.msra.mxu0 0.0
    %2170 = vmatprep.subr.mxu0 0.0
    %2171 = vmatpush1.msra.mxu0 0.0
    %2172 = vmatprep.subr.mxu0 0.0
    %2173 = vmatpush1.msra.mxu0 0.0
    %2174 = vmatprep.subr.mxu0 0.0
    %2175 = vmatpush1.msra.mxu0 0.0
    %2176 = vmatprep.subr.mxu0 0.0
    %2177 = vmatpush1.msra.mxu0 0.0
    %2178 = vmatprep.subr.mxu0 0.0
    %2179 = vmatpush1.msra.mxu0 0.0
    %2180 = vmatprep.subr.mxu0 0.0
    %2181 = vmatpush1.msra.mxu0 0.0
    %2182 = vmatprep.subr.mxu0 0.0
    %2183 = vmatpush1.msra.mxu0 0.0
    %2184 = vmatprep.subr.mxu0 0.0
    %2185 = vmatpush1.msra.mxu0 0.0
    %2186 = vmatprep.mubr.f32.mxu0 0.0
    %2187 = vmatmul.mubr.f32.gmra.mrb[0].mxu0 %v2111
    %v2188 = vpop.f32.mrb[0].mxu0
    %v2189 = vadd.f32 0.0, %v2188
    %v2190 = vpop.f32.mrb[0].mxu0
    %2191 = vmatprep.mubr.f32.mxu0 0.0
    %2192 = vmatmul.mubr.f32.gmra.mrb[0].mxu0 %v2114
    %v2193 = vpop.f32.mrb[0].mxu0
    %v2194 = vadd.f32 0.0, %v2193
    %v2195 = vpop.f32.mrb[0].mxu0
    %2196 = vmatprep.mubr.f32.mxu0 0.0
    %2197 = vmatmul.mubr.f32.gmra.mrb[0].mxu0 %v2117
    %v2198 = vpop.f32.mrb[0].mxu0
    %v2199 = vadd.f32 0.0, %v2198
    %v2200 = vpop.f32.mrb[0].mxu0
    %2201 = vmatprep.mubr.f32.mxu0 0.0
    %2202 = vmatmul.mubr.f32.gmra.mrb[0].mxu0 %v2120
    %v2203 = vpop.f32.mrb[0].mxu0
    %v2204 = vadd.f32 0.0, %v2203
    %v2205 = vpop.f32.mrb[0].mxu0
    %2206 = vdwg.mxu0
    %v2208 = vsel %vm129, %v1236, 0
    %v2211 = vsel %vm129, %v1237, 0
    %v2214 = vsel %vm129, %v1238, 0
    %v2217 = vsel %vm129, %v1239, 0
    %v2220 = vsel %vm142, %v2106, 0
    %2222 = vmatprep.subr.mxu0 0.0
    %2223 = vmatpush1.msra.mxu0 %v2220
    %2224 = vmatprep.subr.mxu0 0.0
    %2225 = vmatpush1.msra.mxu0 0.0
    %2226 = vmatprep.subr.mxu0 0.0
    %2227 = vmatpush1.msra.mxu0 0.0
    %2228 = vmatprep.subr.mxu0 0.0
    %2229 = vmatpush1.msra.mxu0 0.0
    %2230 = vmatprep.subr.mxu0 0.0
    %2231 = vmatpush1.msra.mxu0 0.0
    %2232 = vmatprep.subr.mxu0 0.0
    %2233 = vmatpush1.msra.mxu0 0.0
    %2234 = vmatprep.subr.mxu0 0.0
    %2235 = vmatpush1.msra.mxu0 0.0
    %2236 = vmatprep.subr.mxu0 0.0
    %2237 = vmatpush1.msra.mxu0 0.0
    %2238 = vmatprep.subr.mxu0 0.0
    %2239 = vmatpush1.msra.mxu0 0.0
    %2240 = vmatprep.subr.mxu0 0.0
    %2241 = vmatpush1.msra.mxu0 0.0
    %2242 = vmatprep.subr.mxu0 0.0
    %2243 = vmatpush1.msra.mxu0 0.0
    %2244 = vmatprep.subr.mxu0 0.0
    %2245 = vmatpush1.msra.mxu0 0.0
    %2246 = vmatprep.subr.mxu0 0.0
    %2247 = vmatpush1.msra.mxu0 0.0
    %2248 = vmatprep.subr.mxu0 0.0
    %2249 = vmatpush1.msra.mxu0 0.0
    %2250 = vmatprep.subr.mxu0 0.0
    %2251 = vmatpush1.msra.mxu0 0.0
    %2252 = vmatprep.subr.mxu0 0.0
    %2253 = vmatpush1.msra.mxu0 0.0
    %2254 = vmatprep.subr.mxu0 0.0
    %2255 = vmatpush1.msra.mxu0 0.0
    %2256 = vmatprep.subr.mxu0 0.0
    %2257 = vmatpush1.msra.mxu0 0.0
    %2258 = vmatprep.subr.mxu0 0.0
    %2259 = vmatpush1.msra.mxu0 0.0
    %2260 = vmatprep.subr.mxu0 0.0
    %2261 = vmatpush1.msra.mxu0 0.0
    %2262 = vmatprep.subr.mxu0 0.0
    %2263 = vmatpush1.msra.mxu0 0.0
    %2264 = vmatprep.subr.mxu0 0.0
    %2265 = vmatpush1.msra.mxu0 0.0
    %2266 = vmatprep.subr.mxu0 0.0
    %2267 = vmatpush1.msra.mxu0 0.0
    %2268 = vmatprep.subr.mxu0 0.0
    %2269 = vmatpush1.msra.mxu0 0.0
    %2270 = vmatprep.subr.mxu0 0.0
    %2271 = vmatpush1.msra.mxu0 0.0
    %2272 = vmatprep.subr.mxu0 0.0
    %2273 = vmatpush1.msra.mxu0 0.0
    %2274 = vmatprep.subr.mxu0 0.0
    %2275 = vmatpush1.msra.mxu0 0.0
    %2276 = vmatprep.subr.mxu0 0.0
    %2277 = vmatpush1.msra.mxu0 0.0
    %2278 = vmatprep.subr.mxu0 0.0
    %2279 = vmatpush1.msra.mxu0 0.0
    %2280 = vmatprep.subr.mxu0 0.0
    %2281 = vmatpush1.msra.mxu0 0.0
    %2282 = vmatprep.subr.mxu0 0.0
    %2283 = vmatpush1.msra.mxu0 0.0
    %2284 = vmatprep.subr.mxu0 0.0
    %2285 = vmatpush1.msra.mxu0 0.0
    %2286 = vmatprep.mubr.f32.mxu0 0.0
    %2287 = vmatmul.mubr.f32.gmra.mrb[0].mxu0 %v2208
    %v2288 = vpop.f32.mrb[0].mxu0
    %v2289 = vadd.f32 %v2189, %v2288
    %v2290 = vpop.f32.mrb[0].mxu0
    %2291 = vmatprep.mubr.f32.mxu0 0.0
    %2292 = vmatmul.mubr.f32.gmra.mrb[0].mxu0 %v2211
    %v2293 = vpop.f32.mrb[0].mxu0
    %v2294 = vadd.f32 %v2194, %v2293
    %v2295 = vpop.f32.mrb[0].mxu0
    %2296 = vmatprep.mubr.f32.mxu0 0.0
    %2297 = vmatmul.mubr.f32.gmra.mrb[0].mxu0 %v2214
    %v2298 = vpop.f32.mrb[0].mxu0
    %v2299 = vadd.f32 %v2199, %v2298
    %v2300 = vpop.f32.mrb[0].mxu0
    %2301 = vmatprep.mubr.f32.mxu0 0.0
    %2302 = vmatmul.mubr.f32.gmra.mrb[0].mxu0 %v2217
    %v2303 = vpop.f32.mrb[0].mxu0
    %v2304 = vadd.f32 %v2204, %v2303
    %v2305 = vpop.f32.mrb[0].mxu0
    %2306 = vdwg.mxu0
    %v2307 = vld [vmem:[%s15] sm:$0x1]
    %v2309 = vlaneseq
    %v2310 = vshrl.u32 %v2309, 7
    %v2311 = vsub.s32 0, %v2310
    %v2312 = vrot.slane %v2307, %v2311
    %v2314 = vadd.f32 %v2289, %v2312
    %v2315 = vadd.f32 %v2294, %v2312
    %v2316 = vadd.f32 %v2299, %v2312
    %v2317 = vadd.f32 %v2304, %v2312
    %v2318 = vld [vmem:[%s16] sm:$0xff]
    %v2319 = vld [vmem:[%s16 + $0x8] sm:$0xff]
    %v2320 = vld [vmem:[%s16 + $0x10] sm:$0xff]
    %v2321 = vld [vmem:[%s16 + $0x18] sm:$0xff]
    %v2322 = vld [vmem:[%s16 + $0x20] sm:$0xff]
    %v2323 = vld [vmem:[%s16 + $0x28] sm:$0xff]
    %v2324 = vld [vmem:[%s16 + $0x30] sm:$0xff]
    %v2325 = vld [vmem:[%s16 + $0x38] sm:$0xff]
    %v2326 = vld [vmem:[%s16 + $0x40] sm:$0xff]
    %v2327 = vld [vmem:[%s16 + $0x48] sm:$0xff]
    %v2328 = vld [vmem:[%s16 + $0x50] sm:$0xff]
    %v2329 = vld [vmem:[%s16 + $0x58] sm:$0xff]
    %v2330 = vld [vmem:[%s16 + $0x60] sm:$0xff]
    %v2331 = vld [vmem:[%s16 + $0x68] sm:$0xff]
    %v2332 = vld [vmem:[%s16 + $0x70] sm:$0xff]
    %v2333 = vld [vmem:[%s16 + $0x78] sm:$0xff]
    %v2334 = vld [vmem:[%s16 + $0x80] sm:$0xff]
    %v2335 = vld [vmem:[%s16 + $0x88] sm:$0xff]
    %v2336 = vld [vmem:[%s16 + $0x90] sm:$0xff]
    %v2337 = vld [vmem:[%s16 + $0x98] sm:$0xff]
    %v2338 = vld [vmem:[%s16 + $0xa0] sm:$0xff]
    %v2339 = vld [vmem:[%s16 + $0xa8] sm:$0xff]
    %v2340 = vld [vmem:[%s16 + $0xb0] sm:$0xff]
    %v2341 = vld [vmem:[%s16 + $0xb8] sm:$0xff]
    %v2342 = vld [vmem:[%s16 + $0xc0] sm:$0xff]
    %v2343 = vld [vmem:[%s16 + $0xc8] sm:$0xff]
    %v2344 = vld [vmem:[%s16 + $0xd0] sm:$0xff]
    %v2345 = vld [vmem:[%s16 + $0xd8] sm:$0xff]
    %v2346 = vld [vmem:[%s16 + $0xe0] sm:$0xff]
    %v2347 = vld [vmem:[%s16 + $0xe8] sm:$0xff]
    %v2348 = vld [vmem:[%s16 + $0xf0] sm:$0xff]
    %v2349 = vld [vmem:[%s16 + $0xf8] sm:$0xff]
    %v2350 = vld [vmem:[%s16 + $0x100] sm:$0xff]
    %v2351 = vld [vmem:[%s16 + $0x108] sm:$0xff]
    %v2352 = vld [vmem:[%s16 + $0x110] sm:$0xff]
    %v2353 = vld [vmem:[%s16 + $0x118] sm:$0xff]
    %v2354 = vld [vmem:[%s16 + $0x120] sm:$0xff]
    %v2355 = vld [vmem:[%s16 + $0x128] sm:$0xff]
    %v2356 = vld [vmem:[%s16 + $0x130] sm:$0xff]
    %v2357 = vld [vmem:[%s16 + $0x138] sm:$0xff]
    %v2358 = vld [vmem:[%s16 + $0x140] sm:$0xff]
    %v2359 = vld [vmem:[%s16 + $0x148] sm:$0xff]
    %v2360 = vld [vmem:[%s16 + $0x150] sm:$0xff]
    %v2361 = vld [vmem:[%s16 + $0x158] sm:$0xff]
    %v2362 = vld [vmem:[%s16 + $0x160] sm:$0xff]
    %v2363 = vld [vmem:[%s16 + $0x168] sm:$0xff]
    %v2364 = vld [vmem:[%s16 + $0x170] sm:$0xff]
    %v2365 = vld [vmem:[%s16 + $0x178] sm:$0xff]
    %v2366 = vld [vmem:[%s16 + $0x180] sm:$0xff]
    %v2367 = vld [vmem:[%s16 + $0x188] sm:$0xff]
    %v2368 = vld [vmem:[%s16 + $0x190] sm:$0xff]
    %v2369 = vld [vmem:[%s16 + $0x198] sm:$0xff]
    %v2370 = vld [vmem:[%s16 + $0x1a0] sm:$0xff]
    %v2371 = vld [vmem:[%s16 + $0x1a8] sm:$0xff]
    %v2372 = vld [vmem:[%s16 + $0x1b0] sm:$0xff]
    %v2373 = vld [vmem:[%s16 + $0x1b8] sm:$0xff]
    %v2374 = vld [vmem:[%s16 + $0x1c0] sm:$0xff]
    %v2375 = vld [vmem:[%s16 + $0x1c8] sm:$0xff]
    %v2376 = vld [vmem:[%s16 + $0x1d0] sm:$0xff]
    %v2377 = vld [vmem:[%s16 + $0x1d8] sm:$0xff]
    %v2378 = vld [vmem:[%s16 + $0x1e0] sm:$0xff]
    %v2379 = vld [vmem:[%s16 + $0x1e8] sm:$0xff]
    %v2380 = vld [vmem:[%s16 + $0x1f0] sm:$0xff]
    %v2381 = vld [vmem:[%s16 + $0x1f8] sm:$0xff]
    %v2382 = vld [vmem:[%s16 + $0x200] sm:$0xff]
    %v2383 = vld [vmem:[%s16 + $0x208] sm:$0xff]
    %v2384 = vld [vmem:[%s16 + $0x210] sm:$0xff]
    %v2385 = vld [vmem:[%s16 + $0x218] sm:$0xff]
    %v2386 = vld [vmem:[%s16 + $0x220] sm:$0xff]
    %v2387 = vld [vmem:[%s16 + $0x228] sm:$0xff]
    %v2388 = vld [vmem:[%s16 + $0x230] sm:$0xff]
    %v2389 = vld [vmem:[%s16 + $0x238] sm:$0xff]
    %v2390 = vld [vmem:[%s16 + $0x240] sm:$0xff]
    %v2391 = vld [vmem:[%s16 + $0x248] sm:$0xff]
    %v2392 = vld [vmem:[%s16 + $0x250] sm:$0xff]
    %v2393 = vld [vmem:[%s16 + $0x258] sm:$0xff]
    %v2394 = vld [vmem:[%s16 + $0x260] sm:$0xff]
    %v2395 = vld [vmem:[%s16 + $0x268] sm:$0xff]
    %v2396 = vld [vmem:[%s16 + $0x270] sm:$0xff]
    %v2397 = vld [vmem:[%s16 + $0x278] sm:$0xff]
    %v2398 = vld [vmem:[%s16 + $0x280] sm:$0xff]
    %v2399 = vld [vmem:[%s16 + $0x288] sm:$0xff]
    %v2400 = vld [vmem:[%s16 + $0x290] sm:$0xff]
    %v2401 = vld [vmem:[%s16 + $0x298] sm:$0xff]
    %v2402 = vld [vmem:[%s16 + $0x2a0] sm:$0xff]
    %v2403 = vld [vmem:[%s16 + $0x2a8] sm:$0xff]
    %v2404 = vld [vmem:[%s16 + $0x2b0] sm:$0xff]
    %v2405 = vld [vmem:[%s16 + $0x2b8] sm:$0xff]
    %v2406 = vld [vmem:[%s16 + $0x2c0] sm:$0xff]
    %v2407 = vld [vmem:[%s16 + $0x2c8] sm:$0xff]
    %v2408 = vld [vmem:[%s16 + $0x2d0] sm:$0xff]
    %v2409 = vld [vmem:[%s16 + $0x2d8] sm:$0xff]
    %v2410 = vld [vmem:[%s16 + $0x2e0] sm:$0xff]
    %v2411 = vld [vmem:[%s16 + $0x2e8] sm:$0xff]
    %v2412 = vld [vmem:[%s16 + $0x2f0] sm:$0xff]
    %v2413 = vld [vmem:[%s16 + $0x2f8] sm:$0xff]
    %v2414 = vld [vmem:[%s16 + $0x300] sm:$0xff]
    %v2415 = vld [vmem:[%s16 + $0x308] sm:$0xff]
    %v2416 = vld [vmem:[%s16 + $0x310] sm:$0xff]
    %v2417 = vld [vmem:[%s16 + $0x318] sm:$0xff]
    %v2418 = vld [vmem:[%s16 + $0x320] sm:$0xff]
    %v2419 = vld [vmem:[%s16 + $0x328] sm:$0xff]
    %v2420 = vld [vmem:[%s16 + $0x330] sm:$0xff]
    %v2421 = vld [vmem:[%s16 + $0x338] sm:$0xff]
    %v2422 = vld [vmem:[%s16 + $0x340] sm:$0xff]
    %v2423 = vld [vmem:[%s16 + $0x348] sm:$0xff]
    %v2424 = vld [vmem:[%s16 + $0x350] sm:$0xff]
    %v2425 = vld [vmem:[%s16 + $0x358] sm:$0xff]
    %v2426 = vld [vmem:[%s16 + $0x360] sm:$0xff]
    %v2427 = vld [vmem:[%s16 + $0x368] sm:$0xff]
    %v2428 = vld [vmem:[%s16 + $0x370] sm:$0xff]
    %v2429 = vld [vmem:[%s16 + $0x378] sm:$0xff]
    %v2430 = vld [vmem:[%s16 + $0x380] sm:$0xff]
    %v2431 = vld [vmem:[%s16 + $0x388] sm:$0xff]
    %v2432 = vld [vmem:[%s16 + $0x390] sm:$0xff]
    %v2433 = vld [vmem:[%s16 + $0x398] sm:$0xff]
    %v2434 = vld [vmem:[%s16 + $0x3a0] sm:$0xff]
    %v2435 = vld [vmem:[%s16 + $0x3a8] sm:$0xff]
    %v2436 = vld [vmem:[%s16 + $0x3b0] sm:$0xff]
    %v2437 = vld [vmem:[%s16 + $0x3b8] sm:$0xff]
    %v2438 = vld [vmem:[%s16 + $0x3c0] sm:$0xff]
    %v2439 = vld [vmem:[%s16 + $0x3c8] sm:$0xff]
    %v2440 = vld [vmem:[%s16 + $0x3d0] sm:$0xff]
    %v2441 = vld [vmem:[%s16 + $0x3d8] sm:$0xff]
    %v2442 = vld [vmem:[%s16 + $0x3e0] sm:$0xff]
    %v2443 = vld [vmem:[%s16 + $0x3e8] sm:$0xff]
    %v2444 = vld [vmem:[%s16 + $0x3f0] sm:$0xff]
    %v2445 = vld [vmem:[%s16 + $0x3f8] sm:$0xff]
    %v2446 = vld [vmem:[%s17] sm:$0xff]
    %v2447 = vld [vmem:[%s17 + $0x8] sm:$0xff]
    %v2448 = vld [vmem:[%s17 + $0x10] sm:$0xff]
    %v2449 = vld [vmem:[%s17 + $0x18] sm:$0xff]
    %v2450 = vld [vmem:[%s17 + $0x20] sm:$0xff]
    %v2451 = vld [vmem:[%s17 + $0x28] sm:$0xff]
    %v2452 = vld [vmem:[%s17 + $0x30] sm:$0xff]
    %v2453 = vld [vmem:[%s17 + $0x38] sm:$0xff]
    %v2454 = vld [vmem:[%s17 + $0x40] sm:$0xff]
    %v2455 = vld [vmem:[%s17 + $0x48] sm:$0xff]
    %v2456 = vld [vmem:[%s17 + $0x50] sm:$0xff]
    %v2457 = vld [vmem:[%s17 + $0x58] sm:$0xff]
    %v2458 = vld [vmem:[%s17 + $0x60] sm:$0xff]
    %v2459 = vld [vmem:[%s17 + $0x68] sm:$0xff]
    %v2460 = vld [vmem:[%s17 + $0x70] sm:$0xff]
    %v2461 = vld [vmem:[%s17 + $0x78] sm:$0xff]
    %v2463 = vsel %vm2109, %v2102, 0
    %v2466 = vsel %vm2109, %v2103, 0
    %v2469 = vsel %vm2109, %v2104, 0
    %v2472 = vsel %vm2109, %v2105, 0
    %2474 = vmatprep.subr.mxu0 %v2447
    %2475 = vmatpush1.msra.mxu0 %v2446
    %2476 = vmatprep.subr.mxu0 %v2455
    %2477 = vmatpush1.msra.mxu0 %v2454
    %2478 = vmatprep.subr.mxu0 0.0
    %2479 = vmatpush1.msra.mxu0 0.0
    %2480 = vmatprep.subr.mxu0 0.0
    %2481 = vmatpush1.msra.mxu0 0.0
    %2482 = vmatprep.subr.mxu0 0.0
    %2483 = vmatpush1.msra.mxu0 0.0
    %2484 = vmatprep.subr.mxu0 0.0
    %2485 = vmatpush1.msra.mxu0 0.0
    %2486 = vmatprep.subr.mxu0 0.0
    %2487 = vmatpush1.msra.mxu0 0.0
    %2488 = vmatprep.subr.mxu0 0.0
    %2489 = vmatpush1.msra.mxu0 0.0
    %2490 = vmatprep.subr.mxu0 0.0
    %2491 = vmatpush1.msra.mxu0 0.0
    %2492 = vmatprep.subr.mxu0 0.0
    %2493 = vmatpush1.msra.mxu0 0.0
    %2494 = vmatprep.subr.mxu0 0.0
    %2495 = vmatpush1.msra.mxu0 0.0
    %2496 = vmatprep.subr.mxu0 0.0
    %2497 = vmatpush1.msra.mxu0 0.0
    %2498 = vmatprep.subr.mxu0 0.0
    %2499 = vmatpush1.msra.mxu0 0.0
    %2500 = vmatprep.subr.mxu0 0.0
    %2501 = vmatpush1.msra.mxu0 0.0
    %2502 = vmatprep.subr.mxu0 0.0
    %2503 = vmatpush1.msra.mxu0 0.0
    %2504 = vmatprep.subr.mxu0 0.0
    %2505 = vmatpush1.msra.mxu0 0.0
    %2506 = vmatprep.subr.mxu0 0.0
    %2507 = vmatpush1.msra.mxu0 0.0
    %2508 = vmatprep.subr.mxu0 0.0
    %2509 = vmatpush1.msra.mxu0 0.0
    %2510 = vmatprep.subr.mxu0 0.0
    %2511 = vmatpush1.msra.mxu0 0.0
    %2512 = vmatprep.subr.mxu0 0.0
    %2513 = vmatpush1.msra.mxu0 0.0
    %2514 = vmatprep.subr.mxu0 0.0
    %2515 = vmatpush1.msra.mxu0 0.0
    %2516 = vmatprep.subr.mxu0 0.0
    %2517 = vmatpush1.msra.mxu0 0.0
    %2518 = vmatprep.subr.mxu0 0.0
    %2519 = vmatpush1.msra.mxu0 0.0
    %2520 = vmatprep.subr.mxu0 0.0
    %2521 = vmatpush1.msra.mxu0 0.0
    %2522 = vmatprep.subr.mxu0 0.0
    %2523 = vmatpush1.msra.mxu0 0.0
    %2524 = vmatprep.subr.mxu0 0.0
    %2525 = vmatpush1.msra.mxu0 0.0
    %2526 = vmatprep.subr.mxu0 0.0
    %2527 = vmatpush1.msra.mxu0 0.0
    %2528 = vmatprep.subr.mxu0 0.0
    %2529 = vmatpush1.msra.mxu0 0.0
    %2530 = vmatprep.subr.mxu0 0.0
    %2531 = vmatpush1.msra.mxu0 0.0
    %2532 = vmatprep.subr.mxu0 0.0
    %2533 = vmatpush1.msra.mxu0 0.0
    %2534 = vmatprep.subr.mxu0 0.0
    %2535 = vmatpush1.msra.mxu0 0.0
    %2536 = vmatprep.subr.mxu0 0.0
    %2537 = vmatpush1.msra.mxu0 0.0
    %2538 = vmatprep.mubr.f32.mxu0 0.0
    %2539 = vmatmul.mubr.f32.gmra.mrb[0].mxu0 %v2463
    %v2540 = vpop.f32.mrb[0].mxu0
    %v2541 = vadd.f32 0.0, %v2540
    %v2542 = vpop.f32.mrb[0].mxu0
    %v2543 = vadd.f32 0.0, %v2542
    %2544 = vmatprep.mubr.f32.mxu0 0.0
    %2545 = vmatmul.mubr.f32.gmra.mrb[0].mxu0 %v2466
    %v2546 = vpop.f32.mrb[0].mxu0
    %v2547 = vadd.f32 0.0, %v2546
    %v2548 = vpop.f32.mrb[0].mxu0
    %v2549 = vadd.f32 0.0, %v2548
    %2550 = vmatprep.mubr.f32.mxu0 0.0
    %2551 = vmatmul.mubr.f32.gmra.mrb[0].mxu0 %v2469
    %v2552 = vpop.f32.mrb[0].mxu0
    %v2553 = vadd.f32 0.0, %v2552
    %v2554 = vpop.f32.mrb[0].mxu0
    %v2555 = vadd.f32 0.0, %v2554
    %2556 = vmatprep.mubr.f32.mxu0 0.0
    %2557 = vmatmul.mubr.f32.gmra.mrb[0].mxu0 %v2472
    %v2558 = vpop.f32.mrb[0].mxu0
    %v2559 = vadd.f32 0.0, %v2558
    %v2560 = vpop.f32.mrb[0].mxu0
    %v2561 = vadd.f32 0.0, %v2560
    %2562 = vdwg.mxu0
    %2563 = vmatprep.subr.mxu0 %v2449
    %2564 = vmatpush1.msra.mxu0 %v2448
    %2565 = vmatprep.subr.mxu0 %v2457
    %2566 = vmatpush1.msra.mxu0 %v2456
    %2567 = vmatprep.subr.mxu0 0.0
    %2568 = vmatpush1.msra.mxu0 0.0
    %2569 = vmatprep.subr.mxu0 0.0
    %2570 = vmatpush1.msra.mxu0 0.0
    %2571 = vmatprep.subr.mxu0 0.0
    %2572 = vmatpush1.msra.mxu0 0.0
    %2573 = vmatprep.subr.mxu0 0.0
    %2574 = vmatpush1.msra.mxu0 0.0
    %2575 = vmatprep.subr.mxu0 0.0
    %2576 = vmatpush1.msra.mxu0 0.0
    %2577 = vmatprep.subr.mxu0 0.0
    %2578 = vmatpush1.msra.mxu0 0.0
    %2579 = vmatprep.subr.mxu0 0.0
    %2580 = vmatpush1.msra.mxu0 0.0
    %2581 = vmatprep.subr.mxu0 0.0
    %2582 = vmatpush1.msra.mxu0 0.0
    %2583 = vmatprep.subr.mxu0 0.0
    %2584 = vmatpush1.msra.mxu0 0.0
    %2585 = vmatprep.subr.mxu0 0.0
    %2586 = vmatpush1.msra.mxu0 0.0
    %2587 = vmatprep.subr.mxu0 0.0
    %2588 = vmatpush1.msra.mxu0 0.0
    %2589 = vmatprep.subr.mxu0 0.0
    %2590 = vmatpush1.msra.mxu0 0.0
    %2591 = vmatprep.subr.mxu0 0.0
    %2592 = vmatpush1.msra.mxu0 0.0
    %2593 = vmatprep.subr.mxu0 0.0
    %2594 = vmatpush1.msra.mxu0 0.0
    %2595 = vmatprep.subr.mxu0 0.0
    %2596 = vmatpush1.msra.mxu0 0.0
    %2597 = vmatprep.subr.mxu0 0.0
    %2598 = vmatpush1.msra.mxu0 0.0
    %2599 = vmatprep.subr.mxu0 0.0
    %2600 = vmatpush1.msra.mxu0 0.0
    %2601 = vmatprep.subr.mxu0 0.0
    %2602 = vmatpush1.msra.mxu0 0.0
    %2603 = vmatprep.subr.mxu0 0.0
    %2604 = vmatpush1.msra.mxu0 0.0
    %2605 = vmatprep.subr.mxu0 0.0
    %2606 = vmatpush1.msra.mxu0 0.0
    %2607 = vmatprep.subr.mxu0 0.0
    %2608 = vmatpush1.msra.mxu0 0.0
    %2609 = vmatprep.subr.mxu0 0.0
    %2610 = vmatpush1.msra.mxu0 0.0
    %2611 = vmatprep.subr.mxu0 0.0
    %2612 = vmatpush1.msra.mxu0 0.0
    %2613 = vmatprep.subr.mxu0 0.0
    %2614 = vmatpush1.msra.mxu0 0.0
    %2615 = vmatprep.subr.mxu0 0.0
    %2616 = vmatpush1.msra.mxu0 0.0
    %2617 = vmatprep.subr.mxu0 0.0
    %2618 = vmatpush1.msra.mxu0 0.0
    %2619 = vmatprep.subr.mxu0 0.0
    %2620 = vmatpush1.msra.mxu0 0.0
    %2621 = vmatprep.subr.mxu0 0.0
    %2622 = vmatpush1.msra.mxu0 0.0
    %2623 = vmatprep.subr.mxu0 0.0
    %2624 = vmatpush1.msra.mxu0 0.0
    %2625 = vmatprep.subr.mxu0 0.0
    %2626 = vmatpush1.msra.mxu0 0.0
    %2627 = vmatprep.mubr.f32.mxu0 0.0
    %2628 = vmatmul.mubr.f32.gmra.mrb[0].mxu0 %v2463
    %v2629 = vpop.f32.mrb[0].mxu0
    %v2630 = vadd.f32 0.0, %v2629
    %v2631 = vpop.f32.mrb[0].mxu0
    %v2632 = vadd.f32 0.0, %v2631
    %2633 = vmatprep.mubr.f32.mxu0 0.0
    %2634 = vmatmul.mubr.f32.gmra.mrb[0].mxu0 %v2466
    %v2635 = vpop.f32.mrb[0].mxu0
    %v2636 = vadd.f32 0.0, %v2635
    %v2637 = vpop.f32.mrb[0].mxu0
    %v2638 = vadd.f32 0.0, %v2637
    %2639 = vmatprep.mubr.f32.mxu0 0.0
    %2640 = vmatmul.mubr.f32.gmra.mrb[0].mxu0 %v2469
    %v2641 = vpop.f32.mrb[0].mxu0
    %v2642 = vadd.f32 0.0, %v2641
    %v2643 = vpop.f32.mrb[0].mxu0
    %v2644 = vadd.f32 0.0, %v2643
    %2645 = vmatprep.mubr.f32.mxu0 0.0
    %2646 = vmatmul.mubr.f32.gmra.mrb[0].mxu0 %v2472
    %v2647 = vpop.f32.mrb[0].mxu0
    %v2648 = vadd.f32 0.0, %v2647
    %v2649 = vpop.f32.mrb[0].mxu0
    %v2650 = vadd.f32 0.0, %v2649
    %2651 = vdwg.mxu0
    %2652 = vmatprep.subr.mxu0 %v2451
    %2653 = vmatpush1.msra.mxu0 %v2450
    %2654 = vmatprep.subr.mxu0 %v2459
    %2655 = vmatpush1.msra.mxu0 %v2458
    %2656 = vmatprep.subr.mxu0 0.0
    %2657 = vmatpush1.msra.mxu0 0.0
    %2658 = vmatprep.subr.mxu0 0.0
    %2659 = vmatpush1.msra.mxu0 0.0
    %2660 = vmatprep.subr.mxu0 0.0
    %2661 = vmatpush1.msra.mxu0 0.0
    %2662 = vmatprep.subr.mxu0 0.0
    %2663 = vmatpush1.msra.mxu0 0.0
    %2664 = vmatprep.subr.mxu0 0.0
    %2665 = vmatpush1.msra.mxu0 0.0
    %2666 = vmatprep.subr.mxu0 0.0
    %2667 = vmatpush1.msra.mxu0 0.0
    %2668 = vmatprep.subr.mxu0 0.0
    %2669 = vmatpush1.msra.mxu0 0.0
    %2670 = vmatprep.subr.mxu0 0.0
    %2671 = vmatpush1.msra.mxu0 0.0
    %2672 = vmatprep.subr.mxu0 0.0
    %2673 = vmatpush1.msra.mxu0 0.0
    %2674 = vmatprep.subr.mxu0 0.0
    %2675 = vmatpush1.msra.mxu0 0.0
    %2676 = vmatprep.subr.mxu0 0.0
    %2677 = vmatpush1.msra.mxu0 0.0
    %2678 = vmatprep.subr.mxu0 0.0
    %2679 = vmatpush1.msra.mxu0 0.0
    %2680 = vmatprep.subr.mxu0 0.0
    %2681 = vmatpush1.msra.mxu0 0.0
    %2682 = vmatprep.subr.mxu0 0.0
    %2683 = vmatpush1.msra.mxu0 0.0
    %2684 = vmatprep.subr.mxu0 0.0
    %2685 = vmatpush1.msra.mxu0 0.0
    %2686 = vmatprep.subr.mxu0 0.0
    %2687 = vmatpush1.msra.mxu0 0.0
    %2688 = vmatprep.subr.mxu0 0.0
    %2689 = vmatpush1.msra.mxu0 0.0
    %2690 = vmatprep.subr.mxu0 0.0
    %2691 = vmatpush1.msra.mxu0 0.0
    %2692 = vmatprep.subr.mxu0 0.0
    %2693 = vmatpush1.msra.mxu0 0.0
    %2694 = vmatprep.subr.mxu0 0.0
    %2695 = vmatpush1.msra.mxu0 0.0
    %2696 = vmatprep.subr.mxu0 0.0
    %2697 = vmatpush1.msra.mxu0 0.0
    %2698 = vmatprep.subr.mxu0 0.0
    %2699 = vmatpush1.msra.mxu0 0.0
    %2700 = vmatprep.subr.mxu0 0.0
    %2701 = vmatpush1.msra.mxu0 0.0
    %2702 = vmatprep.subr.mxu0 0.0
    %2703 = vmatpush1.msra.mxu0 0.0
    %2704 = vmatprep.subr.mxu0 0.0
    %2705 = vmatpush1.msra.mxu0 0.0
    %2706 = vmatprep.subr.mxu0 0.0
    %2707 = vmatpush1.msra.mxu0 0.0
    %2708 = vmatprep.subr.mxu0 0.0
    %2709 = vmatpush1.msra.mxu0 0.0
    %2710 = vmatprep.subr.mxu0 0.0
    %2711 = vmatpush1.msra.mxu0 0.0
    %2712 = vmatprep.subr.mxu0 0.0
    %2713 = vmatpush1.msra.mxu0 0.0
    %2714 = vmatprep.subr.mxu0 0.0
    %2715 = vmatpush1.msra.mxu0 0.0
    %2716 = vmatprep.mubr.f32.mxu0 0.0
    %2717 = vmatmul.mubr.f32.gmra.mrb[0].mxu0 %v2463
    %v2718 = vpop.f32.mrb[0].mxu0
    %v2719 = vadd.f32 0.0, %v2718
    %v2720 = vpop.f32.mrb[0].mxu0
    %v2721 = vadd.f32 0.0, %v2720
    %2722 = vmatprep.mubr.f32.mxu0 0.0
    %2723 = vmatmul.mubr.f32.gmra.mrb[0].mxu0 %v2466
    %v2724 = vpop.f32.mrb[0].mxu0
    %v2725 = vadd.f32 0.0, %v2724
    %v2726 = vpop.f32.mrb[0].mxu0
    %v2727 = vadd.f32 0.0, %v2726
    %2728 = vmatprep.mubr.f32.mxu0 0.0
    %2729 = vmatmul.mubr.f32.gmra.mrb[0].mxu0 %v2469
    %v2730 = vpop.f32.mrb[0].mxu0
    %v2731 = vadd.f32 0.0, %v2730
    %v2732 = vpop.f32.mrb[0].mxu0
    %v2733 = vadd.f32 0.0, %v2732
    %2734 = vmatprep.mubr.f32.mxu0 0.0
    %2735 = vmatmul.mubr.f32.gmra.mrb[0].mxu0 %v2472
    %v2736 = vpop.f32.mrb[0].mxu0
    %v2737 = vadd.f32 0.0, %v2736
    %v2738 = vpop.f32.mrb[0].mxu0
    %v2739 = vadd.f32 0.0, %v2738
    %2740 = vdwg.mxu0
    %2741 = vmatprep.subr.mxu0 %v2453
    %2742 = vmatpush1.msra.mxu0 %v2452
    %2743 = vmatprep.subr.mxu0 %v2461
    %2744 = vmatpush1.msra.mxu0 %v2460
    %2745 = vmatprep.subr.mxu0 0.0
    %2746 = vmatpush1.msra.mxu0 0.0
    %2747 = vmatprep.subr.mxu0 0.0
    %2748 = vmatpush1.msra.mxu0 0.0
    %2749 = vmatprep.subr.mxu0 0.0
    %2750 = vmatpush1.msra.mxu0 0.0
    %2751 = vmatprep.subr.mxu0 0.0
    %2752 = vmatpush1.msra.mxu0 0.0
    %2753 = vmatprep.subr.mxu0 0.0
    %2754 = vmatpush1.msra.mxu0 0.0
    %2755 = vmatprep.subr.mxu0 0.0
    %2756 = vmatpush1.msra.mxu0 0.0
    %2757 = vmatprep.subr.mxu0 0.0
    %2758 = vmatpush1.msra.mxu0 0.0
    %2759 = vmatprep.subr.mxu0 0.0
    %2760 = vmatpush1.msra.mxu0 0.0
    %2761 = vmatprep.subr.mxu0 0.0
    %2762 = vmatpush1.msra.mxu0 0.0
    %2763 = vmatprep.subr.mxu0 0.0
    %2764 = vmatpush1.msra.mxu0 0.0
    %2765 = vmatprep.subr.mxu0 0.0
    %2766 = vmatpush1.msra.mxu0 0.0
    %2767 = vmatprep.subr.mxu0 0.0
    %2768 = vmatpush1.msra.mxu0 0.0
    %2769 = vmatprep.subr.mxu0 0.0
    %2770 = vmatpush1.msra.mxu0 0.0
    %2771 = vmatprep.subr.mxu0 0.0
    %2772 = vmatpush1.msra.mxu0 0.0
    %2773 = vmatprep.subr.mxu0 0.0
    %2774 = vmatpush1.msra.mxu0 0.0
    %2775 = vmatprep.subr.mxu0 0.0
    %2776 = vmatpush1.msra.mxu0 0.0
    %2777 = vmatprep.subr.mxu0 0.0
    %2778 = vmatpush1.msra.mxu0 0.0
    %2779 = vmatprep.subr.mxu0 0.0
    %2780 = vmatpush1.msra.mxu0 0.0
    %2781 = vmatprep.subr.mxu0 0.0
    %2782 = vmatpush1.msra.mxu0 0.0
    %2783 = vmatprep.subr.mxu0 0.0
    %2784 = vmatpush1.msra.mxu0 0.0
    %2785 = vmatprep.subr.mxu0 0.0
    %2786 = vmatpush1.msra.mxu0 0.0
    %2787 = vmatprep.subr.mxu0 0.0
    %2788 = vmatpush1.msra.mxu0 0.0
    %2789 = vmatprep.subr.mxu0 0.0
    %2790 = vmatpush1.msra.mxu0 0.0
    %2791 = vmatprep.subr.mxu0 0.0
    %2792 = vmatpush1.msra.mxu0 0.0
    %2793 = vmatprep.subr.mxu0 0.0
    %2794 = vmatpush1.msra.mxu0 0.0
    %2795 = vmatprep.subr.mxu0 0.0
    %2796 = vmatpush1.msra.mxu0 0.0
    %2797 = vmatprep.subr.mxu0 0.0
    %2798 = vmatpush1.msra.mxu0 0.0
    %2799 = vmatprep.subr.mxu0 0.0
    %2800 = vmatpush1.msra.mxu0 0.0
    %2801 = vmatprep.subr.mxu0 0.0
    %2802 = vmatpush1.msra.mxu0 0.0
    %2803 = vmatprep.subr.mxu0 0.0
    %2804 = vmatpush1.msra.mxu0 0.0
    %2805 = vmatprep.mubr.f32.mxu0 0.0
    %2806 = vmatmul.mubr.f32.gmra.mrb[0].mxu0 %v2463
    %v2807 = vpop.f32.mrb[0].mxu0
    %v2808 = vadd.f32 0.0, %v2807
    %v2809 = vpop.f32.mrb[0].mxu0
    %v2810 = vadd.f32 0.0, %v2809
    %2811 = vmatprep.mubr.f32.mxu0 0.0
    %2812 = vmatmul.mubr.f32.gmra.mrb[0].mxu0 %v2466
    %v2813 = vpop.f32.mrb[0].mxu0
    %v2814 = vadd.f32 0.0, %v2813
    %v2815 = vpop.f32.mrb[0].mxu0
    %v2816 = vadd.f32 0.0, %v2815
    %2817 = vmatprep.mubr.f32.mxu0 0.0
    %2818 = vmatmul.mubr.f32.gmra.mrb[0].mxu0 %v2469
    %v2819 = vpop.f32.mrb[0].mxu0
    %v2820 = vadd.f32 0.0, %v2819
    %v2821 = vpop.f32.mrb[0].mxu0
    %v2822 = vadd.f32 0.0, %v2821
    %2823 = vmatprep.mubr.f32.mxu0 0.0
    %2824 = vmatmul.mubr.f32.gmra.mrb[0].mxu0 %v2472
    %v2825 = vpop.f32.mrb[0].mxu0
    %v2826 = vadd.f32 0.0, %v2825
    %v2827 = vpop.f32.mrb[0].mxu0
    %v2828 = vadd.f32 0.0, %v2827
    %2829 = vdwg.mxu0
    %2830 = vmatprep.subr.mxu0 %v2319
    %2831 = vmatpush1.msra.mxu0 %v2318
    %2832 = vmatprep.subr.mxu0 %v2327
    %2833 = vmatpush1.msra.mxu0 %v2326
    %2834 = vmatprep.subr.mxu0 %v2335
    %2835 = vmatpush1.msra.mxu0 %v2334
    %2836 = vmatprep.subr.mxu0 %v2343
    %2837 = vmatpush1.msra.mxu0 %v2342
    %2838 = vmatprep.subr.mxu0 %v2351
    %2839 = vmatpush1.msra.mxu0 %v2350
    %2840 = vmatprep.subr.mxu0 %v2359
    %2841 = vmatpush1.msra.mxu0 %v2358
    %2842 = vmatprep.subr.mxu0 %v2367
    %2843 = vmatpush1.msra.mxu0 %v2366
    %2844 = vmatprep.subr.mxu0 %v2375
    %2845 = vmatpush1.msra.mxu0 %v2374
    %2846 = vmatprep.subr.mxu0 %v2383
    %2847 = vmatpush1.msra.mxu0 %v2382
    %2848 = vmatprep.subr.mxu0 %v2391
    %2849 = vmatpush1.msra.mxu0 %v2390
    %2850 = vmatprep.subr.mxu0 %v2399
    %2851 = vmatpush1.msra.mxu0 %v2398
    %2852 = vmatprep.subr.mxu0 %v2407
    %2853 = vmatpush1.msra.mxu0 %v2406
    %2854 = vmatprep.subr.mxu0 %v2415
    %2855 = vmatpush1.msra.mxu0 %v2414
    %2856 = vmatprep.subr.mxu0 %v2423
    %2857 = vmatpush1.msra.mxu0 %v2422
    %2858 = vmatprep.subr.mxu0 %v2431
    %2859 = vmatpush1.msra.mxu0 %v2430
    %2860 = vmatprep.subr.mxu0 %v2439
    %2861 = vmatpush1.msra.mxu0 %v2438
    %2862 = vmatprep.subr.mxu0 0.0
    %2863 = vmatpush1.msra.mxu0 0.0
    %2864 = vmatprep.subr.mxu0 0.0
    %2865 = vmatpush1.msra.mxu0 0.0
    %2866 = vmatprep.subr.mxu0 0.0
    %2867 = vmatpush1.msra.mxu0 0.0
    %2868 = vmatprep.subr.mxu0 0.0
    %2869 = vmatpush1.msra.mxu0 0.0
    %2870 = vmatprep.subr.mxu0 0.0
    %2871 = vmatpush1.msra.mxu0 0.0
    %2872 = vmatprep.subr.mxu0 0.0
    %2873 = vmatpush1.msra.mxu0 0.0
    %2874 = vmatprep.subr.mxu0 0.0
    %2875 = vmatpush1.msra.mxu0 0.0
    %2876 = vmatprep.subr.mxu0 0.0
    %2877 = vmatpush1.msra.mxu0 0.0
    %2878 = vmatprep.subr.mxu0 0.0
    %2879 = vmatpush1.msra.mxu0 0.0
    %2880 = vmatprep.subr.mxu0 0.0
    %2881 = vmatpush1.msra.mxu0 0.0
    %2882 = vmatprep.subr.mxu0 0.0
    %2883 = vmatpush1.msra.mxu0 0.0
    %2884 = vmatprep.subr.mxu0 0.0
    %2885 = vmatpush1.msra.mxu0 0.0
    %2886 = vmatprep.subr.mxu0 0.0
    %2887 = vmatpush1.msra.mxu0 0.0
    %2888 = vmatprep.subr.mxu0 0.0
    %2889 = vmatpush1.msra.mxu0 0.0
    %2890 = vmatprep.subr.mxu0 0.0
    %2891 = vmatpush1.msra.mxu0 0.0
    %2892 = vmatprep.subr.mxu0 0.0
    %2893 = vmatpush1.msra.mxu0 0.0
    %2894 = vmatprep.mubr.f32.mxu0 0.0
    %2895 = vmatmul.mubr.f32.gmra.mrb[0].mxu0 %v2314
    %v2896 = vpop.f32.mrb[0].mxu0
    %v2897 = vadd.f32 %v2541, %v2896
    %v2898 = vpop.f32.mrb[0].mxu0
    %v2899 = vadd.f32 %v2543, %v2898
    %2900 = vmatprep.mubr.f32.mxu0 0.0
    %2901 = vmatmul.mubr.f32.gmra.mrb[0].mxu0 %v2315
    %v2902 = vpop.f32.mrb[0].mxu0
    %v2903 = vadd.f32 %v2547, %v2902
    %v2904 = vpop.f32.mrb[0].mxu0
    %v2905 = vadd.f32 %v2549, %v2904
    %2906 = vmatprep.mubr.f32.mxu0 0.0
    %2907 = vmatmul.mubr.f32.gmra.mrb[0].mxu0 %v2316
    %v2908 = vpop.f32.mrb[0].mxu0
    %v2909 = vadd.f32 %v2553, %v2908
    %v2910 = vpop.f32.mrb[0].mxu0
    %v2911 = vadd.f32 %v2555, %v2910
    %2912 = vmatprep.mubr.f32.mxu0 0.0
    %2913 = vmatmul.mubr.f32.gmra.mrb[0].mxu0 %v2317
    %v2914 = vpop.f32.mrb[0].mxu0
    %v2915 = vadd.f32 %v2559, %v2914
    %v2916 = vpop.f32.mrb[0].mxu0
    %v2917 = vadd.f32 %v2561, %v2916
    %2918 = vdwg.mxu0
    %2919 = vmatprep.subr.mxu0 %v2321
    %2920 = vmatpush1.msra.mxu0 %v2320
    %2921 = vmatprep.subr.mxu0 %v2329
    %2922 = vmatpush1.msra.mxu0 %v2328
    %2923 = vmatprep.subr.mxu0 %v2337
    %2924 = vmatpush1.msra.mxu0 %v2336
    %2925 = vmatprep.subr.mxu0 %v2345
    %2926 = vmatpush1.msra.mxu0 %v2344
    %2927 = vmatprep.subr.mxu0 %v2353
    %2928 = vmatpush1.msra.mxu0 %v2352
    %2929 = vmatprep.subr.mxu0 %v2361
    %2930 = vmatpush1.msra.mxu0 %v2360
    %2931 = vmatprep.subr.mxu0 %v2369
    %2932 = vmatpush1.msra.mxu0 %v2368
    %2933 = vmatprep.subr.mxu0 %v2377
    %2934 = vmatpush1.msra.mxu0 %v2376
    %2935 = vmatprep.subr.mxu0 %v2385
    %2936 = vmatpush1.msra.mxu0 %v2384
    %2937 = vmatprep.subr.mxu0 %v2393
    %2938 = vmatpush1.msra.mxu0 %v2392
    %2939 = vmatprep.subr.mxu0 %v2401
    %2940 = vmatpush1.msra.mxu0 %v2400
    %2941 = vmatprep.subr.mxu0 %v2409
    %2942 = vmatpush1.msra.mxu0 %v2408
    %2943 = vmatprep.subr.mxu0 %v2417
    %2944 = vmatpush1.msra.mxu0 %v2416
    %2945 = vmatprep.subr.mxu0 %v2425
    %2946 = vmatpush1.msra.mxu0 %v2424
    %2947 = vmatprep.subr.mxu0 %v2433
    %2948 = vmatpush1.msra.mxu0 %v2432
    %2949 = vmatprep.subr.mxu0 %v2441
    %2950 = vmatpush1.msra.mxu0 %v2440
    %2951 = vmatprep.subr.mxu0 0.0
    %2952 = vmatpush1.msra.mxu0 0.0
    %2953 = vmatprep.subr.mxu0 0.0
    %2954 = vmatpush1.msra.mxu0 0.0
    %2955 = vmatprep.subr.mxu0 0.0
    %2956 = vmatpush1.msra.mxu0 0.0
    %2957 = vmatprep.subr.mxu0 0.0
    %2958 = vmatpush1.msra.mxu0 0.0
    %2959 = vmatprep.subr.mxu0 0.0
    %2960 = vmatpush1.msra.mxu0 0.0
    %2961 = vmatprep.subr.mxu0 0.0
    %2962 = vmatpush1.msra.mxu0 0.0
    %2963 = vmatprep.subr.mxu0 0.0
    %2964 = vmatpush1.msra.mxu0 0.0
    %2965 = vmatprep.subr.mxu0 0.0
    %2966 = vmatpush1.msra.mxu0 0.0
    %2967 = vmatprep.subr.mxu0 0.0
    %2968 = vmatpush1.msra.mxu0 0.0
    %2969 = vmatprep.subr.mxu0 0.0
    %2970 = vmatpush1.msra.mxu0 0.0
    %2971 = vmatprep.subr.mxu0 0.0
    %2972 = vmatpush1.msra.mxu0 0.0
    %2973 = vmatprep.subr.mxu0 0.0
    %2974 = vmatpush1.msra.mxu0 0.0
    %2975 = vmatprep.subr.mxu0 0.0
    %2976 = vmatpush1.msra.mxu0 0.0
    %2977 = vmatprep.subr.mxu0 0.0
    %2978 = vmatpush1.msra.mxu0 0.0
    %2979 = vmatprep.subr.mxu0 0.0
    %2980 = vmatpush1.msra.mxu0 0.0
    %2981 = vmatprep.subr.mxu0 0.0
    %2982 = vmatpush1.msra.mxu0 0.0
    %2983 = vmatprep.mubr.f32.mxu0 0.0
    %2984 = vmatmul.mubr.f32.gmra.mrb[0].mxu0 %v2314
    %v2985 = vpop.f32.mrb[0].mxu0
    %v2986 = vadd.f32 %v2630, %v2985
    %v2987 = vpop.f32.mrb[0].mxu0
    %v2988 = vadd.f32 %v2632, %v2987
    %2989 = vmatprep.mubr.f32.mxu0 0.0
    %2990 = vmatmul.mubr.f32.gmra.mrb[0].mxu0 %v2315
    %v2991 = vpop.f32.mrb[0].mxu0
    %v2992 = vadd.f32 %v2636, %v2991
    %v2993 = vpop.f32.mrb[0].mxu0
    %v2994 = vadd.f32 %v2638, %v2993
    %2995 = vmatprep.mubr.f32.mxu0 0.0
    %2996 = vmatmul.mubr.f32.gmra.mrb[0].mxu0 %v2316
    %v2997 = vpop.f32.mrb[0].mxu0
    %v2998 = vadd.f32 %v2642, %v2997
    %v2999 = vpop.f32.mrb[0].mxu0
    %v3000 = vadd.f32 %v2644, %v2999
    %3001 = vmatprep.mubr.f32.mxu0 0.0
    %3002 = vmatmul.mubr.f32.gmra.mrb[0].mxu0 %v2317
    %v3003 = vpop.f32.mrb[0].mxu0
    %v3004 = vadd.f32 %v2648, %v3003
    %v3005 = vpop.f32.mrb[0].mxu0
    %v3006 = vadd.f32 %v2650, %v3005
    %3007 = vdwg.mxu0
    %3008 = vmatprep.subr.mxu0 %v2323
    %3009 = vmatpush1.msra.mxu0 %v2322
    %3010 = vmatprep.subr.mxu0 %v2331
    %3011 = vmatpush1.msra.mxu0 %v2330
    %3012 = vmatprep.subr.mxu0 %v2339
    %3013 = vmatpush1.msra.mxu0 %v2338
    %3014 = vmatprep.subr.mxu0 %v2347
    %3015 = vmatpush1.msra.mxu0 %v2346
    %3016 = vmatprep.subr.mxu0 %v2355
    %3017 = vmatpush1.msra.mxu0 %v2354
    %3018 = vmatprep.subr.mxu0 %v2363
    %3019 = vmatpush1.msra.mxu0 %v2362
    %3020 = vmatprep.subr.mxu0 %v2371
    %3021 = vmatpush1.msra.mxu0 %v2370
    %3022 = vmatprep.subr.mxu0 %v2379
    %3023 = vmatpush1.msra.mxu0 %v2378
    %3024 = vmatprep.subr.mxu0 %v2387
    %3025 = vmatpush1.msra.mxu0 %v2386
    %3026 = vmatprep.subr.mxu0 %v2395
    %3027 = vmatpush1.msra.mxu0 %v2394
    %3028 = vmatprep.subr.mxu0 %v2403
    %3029 = vmatpush1.msra.mxu0 %v2402
    %3030 = vmatprep.subr.mxu0 %v2411
    %3031 = vmatpush1.msra.mxu0 %v2410
    %3032 = vmatprep.subr.mxu0 %v2419
    %3033 = vmatpush1.msra.mxu0 %v2418
    %3034 = vmatprep.subr.mxu0 %v2427
    %3035 = vmatpush1.msra.mxu0 %v2426
    %3036 = vmatprep.subr.mxu0 %v2435
    %3037 = vmatpush1.msra.mxu0 %v2434
    %3038 = vmatprep.subr.mxu0 %v2443
    %3039 = vmatpush1.msra.mxu0 %v2442
    %3040 = vmatprep.subr.mxu0 0.0
    %3041 = vmatpush1.msra.mxu0 0.0
    %3042 = vmatprep.subr.mxu0 0.0
    %3043 = vmatpush1.msra.mxu0 0.0
    %3044 = vmatprep.subr.mxu0 0.0
    %3045 = vmatpush1.msra.mxu0 0.0
    %3046 = vmatprep.subr.mxu0 0.0
    %3047 = vmatpush1.msra.mxu0 0.0
    %3048 = vmatprep.subr.mxu0 0.0
    %3049 = vmatpush1.msra.mxu0 0.0
    %3050 = vmatprep.subr.mxu0 0.0
    %3051 = vmatpush1.msra.mxu0 0.0
    %3052 = vmatprep.subr.mxu0 0.0
    %3053 = vmatpush1.msra.mxu0 0.0
    %3054 = vmatprep.subr.mxu0 0.0
    %3055 = vmatpush1.msra.mxu0 0.0
    %3056 = vmatprep.subr.mxu0 0.0
    %3057 = vmatpush1.msra.mxu0 0.0
    %3058 = vmatprep.subr.mxu0 0.0
    %3059 = vmatpush1.msra.mxu0 0.0
    %3060 = vmatprep.subr.mxu0 0.0
    %3061 = vmatpush1.msra.mxu0 0.0
    %3062 = vmatprep.subr.mxu0 0.0
    %3063 = vmatpush1.msra.mxu0 0.0
    %3064 = vmatprep.subr.mxu0 0.0
    %3065 = vmatpush1.msra.mxu0 0.0
    %3066 = vmatprep.subr.mxu0 0.0
    %3067 = vmatpush1.msra.mxu0 0.0
    %3068 = vmatprep.subr.mxu0 0.0
    %3069 = vmatpush1.msra.mxu0 0.0
    %3070 = vmatprep.subr.mxu0 0.0
    %3071 = vmatpush1.msra.mxu0 0.0
    %3072 = vmatprep.mubr.f32.mxu0 0.0
    %3073 = vmatmul.mubr.f32.gmra.mrb[0].mxu0 %v2314
    %v3074 = vpop.f32.mrb[0].mxu0
    %v3075 = vadd.f32 %v2719, %v3074
    %v3076 = vpop.f32.mrb[0].mxu0
    %v3077 = vadd.f32 %v2721, %v3076
    %3078 = vmatprep.mubr.f32.mxu0 0.0
    %3079 = vmatmul.mubr.f32.gmra.mrb[0].mxu0 %v2315
    %v3080 = vpop.f32.mrb[0].mxu0
    %v3081 = vadd.f32 %v2725, %v3080
    %v3082 = vpop.f32.mrb[0].mxu0
    %v3083 = vadd.f32 %v2727, %v3082
    %3084 = vmatprep.mubr.f32.mxu0 0.0
    %3085 = vmatmul.mubr.f32.gmra.mrb[0].mxu0 %v2316
    %v3086 = vpop.f32.mrb[0].mxu0
    %v3087 = vadd.f32 %v2731, %v3086
    %v3088 = vpop.f32.mrb[0].mxu0
    %v3089 = vadd.f32 %v2733, %v3088
    %3090 = vmatprep.mubr.f32.mxu0 0.0
    %3091 = vmatmul.mubr.f32.gmra.mrb[0].mxu0 %v2317
    %v3092 = vpop.f32.mrb[0].mxu0
    %v3093 = vadd.f32 %v2737, %v3092
    %v3094 = vpop.f32.mrb[0].mxu0
    %v3095 = vadd.f32 %v2739, %v3094
    %3096 = vdwg.mxu0
    %3097 = vmatprep.subr.mxu0 %v2325
    %3098 = vmatpush1.msra.mxu0 %v2324
    %3099 = vmatprep.subr.mxu0 %v2333
    %3100 = vmatpush1.msra.mxu0 %v2332
    %3101 = vmatprep.subr.mxu0 %v2341
    %3102 = vmatpush1.msra.mxu0 %v2340
    %3103 = vmatprep.subr.mxu0 %v2349
    %3104 = vmatpush1.msra.mxu0 %v2348
    %3105 = vmatprep.subr.mxu0 %v2357
    %3106 = vmatpush1.msra.mxu0 %v2356
    %3107 = vmatprep.subr.mxu0 %v2365
    %3108 = vmatpush1.msra.mxu0 %v2364
    %3109 = vmatprep.subr.mxu0 %v2373
    %3110 = vmatpush1.msra.mxu0 %v2372
    %3111 = vmatprep.subr.mxu0 %v2381
    %3112 = vmatpush1.msra.mxu0 %v2380
    %3113 = vmatprep.subr.mxu0 %v2389
    %3114 = vmatpush1.msra.mxu0 %v2388
    %3115 = vmatprep.subr.mxu0 %v2397
    %3116 = vmatpush1.msra.mxu0 %v2396
    %3117 = vmatprep.subr.mxu0 %v2405
    %3118 = vmatpush1.msra.mxu0 %v2404
    %3119 = vmatprep.subr.mxu0 %v2413
    %3120 = vmatpush1.msra.mxu0 %v2412
    %3121 = vmatprep.subr.mxu0 %v2421
    %3122 = vmatpush1.msra.mxu0 %v2420
    %3123 = vmatprep.subr.mxu0 %v2429
    %3124 = vmatpush1.msra.mxu0 %v2428
    %3125 = vmatprep.subr.mxu0 %v2437
    %3126 = vmatpush1.msra.mxu0 %v2436
    %3127 = vmatprep.subr.mxu0 %v2445
    %3128 = vmatpush1.msra.mxu0 %v2444
    %3129 = vmatprep.subr.mxu0 0.0
    %3130 = vmatpush1.msra.mxu0 0.0
    %3131 = vmatprep.subr.mxu0 0.0
    %3132 = vmatpush1.msra.mxu0 0.0
    %3133 = vmatprep.subr.mxu0 0.0
    %3134 = vmatpush1.msra.mxu0 0.0
    %3135 = vmatprep.subr.mxu0 0.0
    %3136 = vmatpush1.msra.mxu0 0.0
    %3137 = vmatprep.subr.mxu0 0.0
    %3138 = vmatpush1.msra.mxu0 0.0
    %3139 = vmatprep.subr.mxu0 0.0
    %3140 = vmatpush1.msra.mxu0 0.0
    %3141 = vmatprep.subr.mxu0 0.0
    %3142 = vmatpush1.msra.mxu0 0.0
    %3143 = vmatprep.subr.mxu0 0.0
    %3144 = vmatpush1.msra.mxu0 0.0
    %3145 = vmatprep.subr.mxu0 0.0
    %3146 = vmatpush1.msra.mxu0 0.0
    %3147 = vmatprep.subr.mxu0 0.0
    %3148 = vmatpush1.msra.mxu0 0.0
    %3149 = vmatprep.subr.mxu0 0.0
    %3150 = vmatpush1.msra.mxu0 0.0
    %3151 = vmatprep.subr.mxu0 0.0
    %3152 = vmatpush1.msra.mxu0 0.0
    %3153 = vmatprep.subr.mxu0 0.0
    %3154 = vmatpush1.msra.mxu0 0.0
    %3155 = vmatprep.subr.mxu0 0.0
    %3156 = vmatpush1.msra.mxu0 0.0
    %3157 = vmatprep.subr.mxu0 0.0
    %3158 = vmatpush1.msra.mxu0 0.0
    %3159 = vmatprep.subr.mxu0 0.0
    %3160 = vmatpush1.msra.mxu0 0.0
    %3161 = vmatprep.mubr.f32.mxu0 0.0
    %3162 = vmatmul.mubr.f32.gmra.mrb[0].mxu0 %v2314
    %v3163 = vpop.f32.mrb[0].mxu0
    %v3164 = vadd.f32 %v2808, %v3163
    %v3165 = vpop.f32.mrb[0].mxu0
    %v3166 = vadd.f32 %v2810, %v3165
    %3167 = vmatprep.mubr.f32.mxu0 0.0
    %3168 = vmatmul.mubr.f32.gmra.mrb[0].mxu0 %v2315
    %v3169 = vpop.f32.mrb[0].mxu0
    %v3170 = vadd.f32 %v2814, %v3169
    %v3171 = vpop.f32.mrb[0].mxu0
    %v3172 = vadd.f32 %v2816, %v3171
    %3173 = vmatprep.mubr.f32.mxu0 0.0
    %3174 = vmatmul.mubr.f32.gmra.mrb[0].mxu0 %v2316
    %v3175 = vpop.f32.mrb[0].mxu0
    %v3176 = vadd.f32 %v2820, %v3175
    %v3177 = vpop.f32.mrb[0].mxu0
    %v3178 = vadd.f32 %v2822, %v3177
    %3179 = vmatprep.mubr.f32.mxu0 0.0
    %3180 = vmatmul.mubr.f32.gmra.mrb[0].mxu0 %v2317
    %v3181 = vpop.f32.mrb[0].mxu0
    %v3182 = vadd.f32 %v2826, %v3181
    %v3183 = vpop.f32.mrb[0].mxu0
    %v3184 = vadd.f32 %v2828, %v3183
    %3185 = vdwg.mxu0
    %v3186 = vld [vmem:[%s18] sm:$0xff]
    %v3188 = vlaneseq
    %v3189 = vshrl.u32 %v3188, 7
    %v3190 = vsub.s32 0, %v3189
    %v3191 = vrot.slane %v3186, %v3190
    %v3192 = vlaneseq
    %v3193 = vshrl.u32 %v3192, 7
    %v3194 = vsub.s32 1, %v3193
    %v3195 = vrot.slane %v3186, %v3194
    %v3196 = vlaneseq
    %v3197 = vshrl.u32 %v3196, 7
    %v3198 = vsub.s32 2, %v3197
    %v3199 = vrot.slane %v3186, %v3198
    %v3200 = vlaneseq
    %v3201 = vshrl.u32 %v3200, 7
    %v3202 = vsub.s32 3, %v3201
    %v3203 = vrot.slane %v3186, %v3202
    %v3204 = vlaneseq
    %v3205 = vshrl.u32 %v3204, 7
    %v3206 = vsub.s32 4, %v3205
    %v3207 = vrot.slane %v3186, %v3206
    %v3208 = vlaneseq
    %v3209 = vshrl.u32 %v3208, 7
    %v3210 = vsub.s32 5, %v3209
    %v3211 = vrot.slane %v3186, %v3210
    %v3212 = vlaneseq
    %v3213 = vshrl.u32 %v3212, 7
    %v3214 = vsub.s32 6, %v3213
    %v3215 = vrot.slane %v3186, %v3214
    %v3216 = vlaneseq
    %v3217 = vshrl.u32 %v3216, 7
    %v3218 = vsub.s32 7, %v3217
    %v3219 = vrot.slane %v3186, %v3218
    %v3228 = vadd.f32 %v2897, %v3191
    %v3229 = vadd.f32 %v2899, %v3195
    %v3230 = vadd.f32 %v2986, %v3199
    %v3231 = vadd.f32 %v2988, %v3203
    %v3232 = vadd.f32 %v3075, %v3207
    %v3233 = vadd.f32 %v3077, %v3211
    %v3234 = vadd.f32 %v3164, %v3215
    %v3235 = vadd.f32 %v3166, %v3219
    %v3236 = vadd.f32 %v2903, %v3191
    %v3237 = vadd.f32 %v2905, %v3195
    %v3238 = vadd.f32 %v2992, %v3199
    %v3239 = vadd.f32 %v2994, %v3203
    %v3240 = vadd.f32 %v3081, %v3207
    %v3241 = vadd.f32 %v3083, %v3211
    %v3242 = vadd.f32 %v3170, %v3215
    %v3243 = vadd.f32 %v3172, %v3219
    %v3244 = vadd.f32 %v2909, %v3191
    %v3245 = vadd.f32 %v2911, %v3195
    %v3246 = vadd.f32 %v2998, %v3199
    %v3247 = vadd.f32 %v3000, %v3203
    %v3248 = vadd.f32 %v3087, %v3207
    %v3249 = vadd.f32 %v3089, %v3211
    %v3250 = vadd.f32 %v3176, %v3215
    %v3251 = vadd.f32 %v3178, %v3219
    %v3252 = vadd.f32 %v2915, %v3191
    %v3253 = vadd.f32 %v2917, %v3195
    %v3254 = vadd.f32 %v3004, %v3199
    %v3255 = vadd.f32 %v3006, %v3203
    %v3256 = vadd.f32 %v3093, %v3207
    %v3257 = vadd.f32 %v3095, %v3211
    %v3258 = vadd.f32 %v3182, %v3215
    %v3259 = vadd.f32 %v3184, %v3219
    %v3260 = vmax.f32 %v3228, %v3236
    %v3261 = vmax.f32 %v3260, %v3244
    %v3262 = vmax.f32 %v3261, %v3252
    %v3263 = vrot.slane %v3262, 4
    %v3264 = vmax.f32 %v3262, %v3263
    %v3265 = vrot.slane %v3264, 2
    %v3266 = vmax.f32 %v3264, %v3265
    %v3267 = vrot.slane %v3266, 1
    %v3268 = vmax.f32 %v3266, %v3267
    %v3269 = vmax.f32 %v3229, %v3237
    %v3270 = vmax.f32 %v3269, %v3245
    %v3271 = vmax.f32 %v3270, %v3253
    %v3272 = vrot.slane %v3271, 4
    %v3273 = vmax.f32 %v3271, %v3272
    %v3274 = vrot.slane %v3273, 2
    %v3275 = vmax.f32 %v3273, %v3274
    %v3276 = vrot.slane %v3275, 1
    %v3277 = vmax.f32 %v3275, %v3276
    %v3278 = vmax.f32 %v3230, %v3238
    %v3279 = vmax.f32 %v3278, %v3246
    %v3280 = vmax.f32 %v3279, %v3254
    %v3281 = vrot.slane %v3280, 4
    %v3282 = vmax.f32 %v3280, %v3281
    %v3283 = vrot.slane %v3282, 2
    %v3284 = vmax.f32 %v3282, %v3283
    %v3285 = vrot.slane %v3284, 1
    %v3286 = vmax.f32 %v3284, %v3285
    %v3287 = vmax.f32 %v3231, %v3239
    %v3288 = vmax.f32 %v3287, %v3247
    %v3289 = vmax.f32 %v3288, %v3255
    %v3290 = vrot.slane %v3289, 4
    %v3291 = vmax.f32 %v3289, %v3290
    %v3292 = vrot.slane %v3291, 2
    %v3293 = vmax.f32 %v3291, %v3292
    %v3294 = vrot.slane %v3293, 1
    %v3295 = vmax.f32 %v3293, %v3294
    %v3296 = vmax.f32 %v3232, %v3240
    %v3297 = vmax.f32 %v3296, %v3248
    %v3298 = vmax.f32 %v3297, %v3256
    %v3299 = vrot.slane %v3298, 4
    %v3300 = vmax.f32 %v3298, %v3299
    %v3301 = vrot.slane %v3300, 2
    %v3302 = vmax.f32 %v3300, %v3301
    %v3303 = vrot.slane %v3302, 1
    %v3304 = vmax.f32 %v3302, %v3303
    %v3305 = vmax.f32 %v3233, %v3241
    %v3306 = vmax.f32 %v3305, %v3249
    %v3307 = vmax.f32 %v3306, %v3257
    %v3308 = vrot.slane %v3307, 4
    %v3309 = vmax.f32 %v3307, %v3308
    %v3310 = vrot.slane %v3309, 2
    %v3311 = vmax.f32 %v3309, %v3310
    %v3312 = vrot.slane %v3311, 1
    %v3313 = vmax.f32 %v3311, %v3312
    %v3314 = vmax.f32 %v3234, %v3242
    %v3315 = vmax.f32 %v3314, %v3250
    %v3316 = vmax.f32 %v3315, %v3258
    %v3317 = vrot.slane %v3316, 4
    %v3318 = vmax.f32 %v3316, %v3317
    %v3319 = vrot.slane %v3318, 2
    %v3320 = vmax.f32 %v3318, %v3319
    %v3321 = vrot.slane %v3320, 1
    %v3322 = vmax.f32 %v3320, %v3321
    %v3323 = vmax.f32 %v3235, %v3243
    %v3324 = vmax.f32 %v3323, %v3251
    %v3325 = vmax.f32 %v3324, %v3259
    %v3326 = vrot.slane %v3325, 4
    %v3327 = vmax.f32 %v3325, %v3326
    %v3328 = vrot.slane %v3327, 2
    %v3329 = vmax.f32 %v3327, %v3328
    %v3330 = vrot.slane %v3329, 1
    %v3331 = vmax.f32 %v3329, %v3330
    %v3332 = vld [vmem:[%s19] sm:$0xff]
    %v3333 = vld [vmem:[%s19 + $0x8] sm:$0xff]
    %v3334 = vld [vmem:[%s19 + $0x10] sm:$0xff]
    %v3335 = vld [vmem:[%s19 + $0x18] sm:$0xff]
    %v3336 = vld [vmem:[%s19 + $0x20] sm:$0xff]
    %v3337 = vld [vmem:[%s19 + $0x28] sm:$0xff]
    %v3338 = vld [vmem:[%s19 + $0x30] sm:$0xff]
    %v3339 = vld [vmem:[%s19 + $0x38] sm:$0xff]
    %v3340 = vld [vmem:[%s19 + $0x40] sm:$0xff]
    %v3341 = vld [vmem:[%s19 + $0x48] sm:$0xff]
    %v3342 = vld [vmem:[%s19 + $0x50] sm:$0xff]
    %v3343 = vld [vmem:[%s19 + $0x58] sm:$0xff]
    %v3344 = vld [vmem:[%s19 + $0x60] sm:$0xff]
    %v3345 = vld [vmem:[%s19 + $0x68] sm:$0xff]
    %v3346 = vld [vmem:[%s19 + $0x70] sm:$0xff]
    %v3347 = vld [vmem:[%s19 + $0x78] sm:$0xff]
    %v3348 = vld [vmem:[%s19 + $0x80] sm:$0xff]
    %v3349 = vld [vmem:[%s19 + $0x88] sm:$0xff]
    %v3350 = vld [vmem:[%s19 + $0x90] sm:$0xff]
    %v3351 = vld [vmem:[%s19 + $0x98] sm:$0xff]
    %v3352 = vld [vmem:[%s19 + $0xa0] sm:$0xff]
    %v3353 = vld [vmem:[%s19 + $0xa8] sm:$0xff]
    %v3354 = vld [vmem:[%s19 + $0xb0] sm:$0xff]
    %v3355 = vld [vmem:[%s19 + $0xb8] sm:$0xff]
    %v3356 = vld [vmem:[%s19 + $0xc0] sm:$0xff]
    %v3357 = vld [vmem:[%s19 + $0xc8] sm:$0xff]
    %v3358 = vld [vmem:[%s19 + $0xd0] sm:$0xff]
    %v3359 = vld [vmem:[%s19 + $0xd8] sm:$0xff]
    %v3360 = vld [vmem:[%s19 + $0xe0] sm:$0xff]
    %v3361 = vld [vmem:[%s19 + $0xe8] sm:$0xff]
    %v3362 = vld [vmem:[%s19 + $0xf0] sm:$0xff]
    %v3363 = vld [vmem:[%s19 + $0xf8] sm:$0xff]
    %v3364 = vld [vmem:[%s19 + $0x100] sm:$0xff]
    %v3365 = vld [vmem:[%s19 + $0x108] sm:$0xff]
    %v3366 = vld [vmem:[%s19 + $0x110] sm:$0xff]
    %v3367 = vld [vmem:[%s19 + $0x118] sm:$0xff]
    %v3368 = vld [vmem:[%s19 + $0x120] sm:$0xff]
    %v3369 = vld [vmem:[%s19 + $0x128] sm:$0xff]
    %v3370 = vld [vmem:[%s19 + $0x130] sm:$0xff]
    %v3371 = vld [vmem:[%s19 + $0x138] sm:$0xff]
    %v3372 = vld [vmem:[%s19 + $0x140] sm:$0xff]
    %v3373 = vld [vmem:[%s19 + $0x148] sm:$0xff]
    %v3374 = vld [vmem:[%s19 + $0x150] sm:$0xff]
    %v3375 = vld [vmem:[%s19 + $0x158] sm:$0xff]
    %v3376 = vld [vmem:[%s19 + $0x160] sm:$0xff]
    %v3377 = vld [vmem:[%s19 + $0x168] sm:$0xff]
    %v3378 = vld [vmem:[%s19 + $0x170] sm:$0xff]
    %v3379 = vld [vmem:[%s19 + $0x178] sm:$0xff]
    %v3380 = vld [vmem:[%s19 + $0x180] sm:$0xff]
    %v3381 = vld [vmem:[%s19 + $0x188] sm:$0xff]
    %v3382 = vld [vmem:[%s19 + $0x190] sm:$0xff]
    %v3383 = vld [vmem:[%s19 + $0x198] sm:$0xff]
    %v3384 = vld [vmem:[%s19 + $0x1a0] sm:$0xff]
    %v3385 = vld [vmem:[%s19 + $0x1a8] sm:$0xff]
    %v3386 = vld [vmem:[%s19 + $0x1b0] sm:$0xff]
    %v3387 = vld [vmem:[%s19 + $0x1b8] sm:$0xff]
    %v3388 = vld [vmem:[%s19 + $0x1c0] sm:$0xff]
    %v3389 = vld [vmem:[%s19 + $0x1c8] sm:$0xff]
    %v3390 = vld [vmem:[%s19 + $0x1d0] sm:$0xff]
    %v3391 = vld [vmem:[%s19 + $0x1d8] sm:$0xff]
    %v3392 = vld [vmem:[%s19 + $0x1e0] sm:$0xff]
    %v3393 = vld [vmem:[%s19 + $0x1e8] sm:$0xff]
    %v3394 = vld [vmem:[%s19 + $0x1f0] sm:$0xff]
    %v3395 = vld [vmem:[%s19 + $0x1f8] sm:$0xff]
    %v3396 = vld [vmem:[%s19 + $0x200] sm:$0xff]
    %v3397 = vld [vmem:[%s19 + $0x208] sm:$0xff]
    %v3398 = vld [vmem:[%s19 + $0x210] sm:$0xff]
    %v3399 = vld [vmem:[%s19 + $0x218] sm:$0xff]
    %v3400 = vld [vmem:[%s19 + $0x220] sm:$0xff]
    %v3401 = vld [vmem:[%s19 + $0x228] sm:$0xff]
    %v3402 = vld [vmem:[%s19 + $0x230] sm:$0xff]
    %v3403 = vld [vmem:[%s19 + $0x238] sm:$0xff]
    %v3404 = vld [vmem:[%s19 + $0x240] sm:$0xff]
    %v3405 = vld [vmem:[%s19 + $0x248] sm:$0xff]
    %v3406 = vld [vmem:[%s19 + $0x250] sm:$0xff]
    %v3407 = vld [vmem:[%s19 + $0x258] sm:$0xff]
    %v3408 = vld [vmem:[%s19 + $0x260] sm:$0xff]
    %v3409 = vld [vmem:[%s19 + $0x268] sm:$0xff]
    %v3410 = vld [vmem:[%s19 + $0x270] sm:$0xff]
    %v3411 = vld [vmem:[%s19 + $0x278] sm:$0xff]
    %v3412 = vld [vmem:[%s19 + $0x280] sm:$0xff]
    %v3413 = vld [vmem:[%s19 + $0x288] sm:$0xff]
    %v3414 = vld [vmem:[%s19 + $0x290] sm:$0xff]
    %v3415 = vld [vmem:[%s19 + $0x298] sm:$0xff]
    %v3416 = vld [vmem:[%s19 + $0x2a0] sm:$0xff]
    %v3417 = vld [vmem:[%s19 + $0x2a8] sm:$0xff]
    %v3418 = vld [vmem:[%s19 + $0x2b0] sm:$0xff]
    %v3419 = vld [vmem:[%s19 + $0x2b8] sm:$0xff]
    %v3420 = vld [vmem:[%s19 + $0x2c0] sm:$0xff]
    %v3421 = vld [vmem:[%s19 + $0x2c8] sm:$0xff]
    %v3422 = vld [vmem:[%s19 + $0x2d0] sm:$0xff]
    %v3423 = vld [vmem:[%s19 + $0x2d8] sm:$0xff]
    %v3424 = vld [vmem:[%s19 + $0x2e0] sm:$0xff]
    %v3425 = vld [vmem:[%s19 + $0x2e8] sm:$0xff]
    %v3426 = vld [vmem:[%s19 + $0x2f0] sm:$0xff]
    %v3427 = vld [vmem:[%s19 + $0x2f8] sm:$0xff]
    %v3428 = vld [vmem:[%s19 + $0x300] sm:$0xff]
    %v3429 = vld [vmem:[%s19 + $0x308] sm:$0xff]
    %v3430 = vld [vmem:[%s19 + $0x310] sm:$0xff]
    %v3431 = vld [vmem:[%s19 + $0x318] sm:$0xff]
    %v3432 = vld [vmem:[%s19 + $0x320] sm:$0xff]
    %v3433 = vld [vmem:[%s19 + $0x328] sm:$0xff]
    %v3434 = vld [vmem:[%s19 + $0x330] sm:$0xff]
    %v3435 = vld [vmem:[%s19 + $0x338] sm:$0xff]
    %v3436 = vld [vmem:[%s19 + $0x340] sm:$0xff]
    %v3437 = vld [vmem:[%s19 + $0x348] sm:$0xff]
    %v3438 = vld [vmem:[%s19 + $0x350] sm:$0xff]
    %v3439 = vld [vmem:[%s19 + $0x358] sm:$0xff]
    %v3440 = vld [vmem:[%s19 + $0x360] sm:$0xff]
    %v3441 = vld [vmem:[%s19 + $0x368] sm:$0xff]
    %v3442 = vld [vmem:[%s19 + $0x370] sm:$0xff]
    %v3443 = vld [vmem:[%s19 + $0x378] sm:$0xff]
    %v3444 = vld [vmem:[%s19 + $0x380] sm:$0xff]
    %v3445 = vld [vmem:[%s19 + $0x388] sm:$0xff]
    %v3446 = vld [vmem:[%s19 + $0x390] sm:$0xff]
    %v3447 = vld [vmem:[%s19 + $0x398] sm:$0xff]
    %v3448 = vld [vmem:[%s19 + $0x3a0] sm:$0xff]
    %v3449 = vld [vmem:[%s19 + $0x3a8] sm:$0xff]
    %v3450 = vld [vmem:[%s19 + $0x3b0] sm:$0xff]
    %v3451 = vld [vmem:[%s19 + $0x3b8] sm:$0xff]
    %v3452 = vld [vmem:[%s19 + $0x3c0] sm:$0xff]
    %v3453 = vld [vmem:[%s19 + $0x3c8] sm:$0xff]
    %v3454 = vld [vmem:[%s19 + $0x3d0] sm:$0xff]
    %v3455 = vld [vmem:[%s19 + $0x3d8] sm:$0xff]
    %v3456 = vld [vmem:[%s19 + $0x3e0] sm:$0xff]
    %v3457 = vld [vmem:[%s19 + $0x3e8] sm:$0xff]
    %v3458 = vld [vmem:[%s19 + $0x3f0] sm:$0xff]
    %v3459 = vld [vmem:[%s19 + $0x3f8] sm:$0xff]
    %v3460 = vld [vmem:[%s20] sm:$0x1]
    %3461 = vmatprep.subr.mxu0 0.0
    %3462 = vmatpush1.msra.mxu0 %v3332
    %3463 = vmatprep.subr.mxu0 0.0
    %3464 = vmatpush1.msra.mxu0 %v3333
    %3465 = vmatprep.subr.mxu0 0.0
    %3466 = vmatpush1.msra.mxu0 %v3334
    %3467 = vmatprep.subr.mxu0 0.0
    %3468 = vmatpush1.msra.mxu0 %v3335
    %3469 = vmatprep.subr.mxu0 0.0
    %3470 = vmatpush1.msra.mxu0 %v3336
    %3471 = vmatprep.subr.mxu0 0.0
    %3472 = vmatpush1.msra.mxu0 %v3337
    %3473 = vmatprep.subr.mxu0 0.0
    %3474 = vmatpush1.msra.mxu0 %v3338
    %3475 = vmatprep.subr.mxu0 0.0
    %3476 = vmatpush1.msra.mxu0 %v3339
    %3477 = vmatprep.subr.mxu0 0.0
    %3478 = vmatpush1.msra.mxu0 %v3340
    %3479 = vmatprep.subr.mxu0 0.0
    %3480 = vmatpush1.msra.mxu0 %v3341
    %3481 = vmatprep.subr.mxu0 0.0
    %3482 = vmatpush1.msra.mxu0 %v3342
    %3483 = vmatprep.subr.mxu0 0.0
    %3484 = vmatpush1.msra.mxu0 %v3343
    %3485 = vmatprep.subr.mxu0 0.0
    %3486 = vmatpush1.msra.mxu0 %v3344
    %3487 = vmatprep.subr.mxu0 0.0
    %3488 = vmatpush1.msra.mxu0 %v3345
    %3489 = vmatprep.subr.mxu0 0.0
    %3490 = vmatpush1.msra.mxu0 %v3346
    %3491 = vmatprep.subr.mxu0 0.0
    %3492 = vmatpush1.msra.mxu0 %v3347
    %3493 = vmatprep.subr.mxu0 0.0
    %3494 = vmatpush1.msra.mxu0 %v3348
    %3495 = vmatprep.subr.mxu0 0.0
    %3496 = vmatpush1.msra.mxu0 %v3349
    %3497 = vmatprep.subr.mxu0 0.0
    %3498 = vmatpush1.msra.mxu0 %v3350
    %3499 = vmatprep.subr.mxu0 0.0
    %3500 = vmatpush1.msra.mxu0 %v3351
    %3501 = vmatprep.subr.mxu0 0.0
    %3502 = vmatpush1.msra.mxu0 %v3352
    %3503 = vmatprep.subr.mxu0 0.0
    %3504 = vmatpush1.msra.mxu0 %v3353
    %3505 = vmatprep.subr.mxu0 0.0
    %3506 = vmatpush1.msra.mxu0 %v3354
    %3507 = vmatprep.subr.mxu0 0.0
    %3508 = vmatpush1.msra.mxu0 %v3355
    %3509 = vmatprep.subr.mxu0 0.0
    %3510 = vmatpush1.msra.mxu0 %v3356
    %3511 = vmatprep.subr.mxu0 0.0
    %3512 = vmatpush1.msra.mxu0 %v3357
    %3513 = vmatprep.subr.mxu0 0.0
    %3514 = vmatpush1.msra.mxu0 %v3358
    %3515 = vmatprep.subr.mxu0 0.0
    %3516 = vmatpush1.msra.mxu0 %v3359
    %3517 = vmatprep.subr.mxu0 0.0
    %3518 = vmatpush1.msra.mxu0 %v3360
    %3519 = vmatprep.subr.mxu0 0.0
    %3520 = vmatpush1.msra.mxu0 %v3361
    %3521 = vmatprep.subr.mxu0 0.0
    %3522 = vmatpush1.msra.mxu0 %v3362
    %3523 = vmatprep.subr.mxu0 0.0
    %3524 = vmatpush1.msra.mxu0 %v3363
    %3525 = vmatprep.mubr.f32.mxu0 %v3277
    %3526 = vmatmul.mubr.f32.gmra.mrb[0].mxu0 %v3268
    %v3527 = vpop.f32.mrb[0].mxu0
    %v3528 = vadd.f32 %v3460, %v3527
    %v3529 = vpop.f32.mrb[0].mxu0
    %3530 = vdwg.mxu0
    %3531 = vmatprep.subr.mxu0 0.0
    %3532 = vmatpush1.msra.mxu0 %v3364
    %3533 = vmatprep.subr.mxu0 0.0
    %3534 = vmatpush1.msra.mxu0 %v3365
    %3535 = vmatprep.subr.mxu0 0.0
    %3536 = vmatpush1.msra.mxu0 %v3366
    %3537 = vmatprep.subr.mxu0 0.0
    %3538 = vmatpush1.msra.mxu0 %v3367
    %3539 = vmatprep.subr.mxu0 0.0
    %3540 = vmatpush1.msra.mxu0 %v3368
    %3541 = vmatprep.subr.mxu0 0.0
    %3542 = vmatpush1.msra.mxu0 %v3369
    %3543 = vmatprep.subr.mxu0 0.0
    %3544 = vmatpush1.msra.mxu0 %v3370
    %3545 = vmatprep.subr.mxu0 0.0
    %3546 = vmatpush1.msra.mxu0 %v3371
    %3547 = vmatprep.subr.mxu0 0.0
    %3548 = vmatpush1.msra.mxu0 %v3372
    %3549 = vmatprep.subr.mxu0 0.0
    %3550 = vmatpush1.msra.mxu0 %v3373
    %3551 = vmatprep.subr.mxu0 0.0
    %3552 = vmatpush1.msra.mxu0 %v3374
    %3553 = vmatprep.subr.mxu0 0.0
    %3554 = vmatpush1.msra.mxu0 %v3375
    %3555 = vmatprep.subr.mxu0 0.0
    %3556 = vmatpush1.msra.mxu0 %v3376
    %3557 = vmatprep.subr.mxu0 0.0
    %3558 = vmatpush1.msra.mxu0 %v3377
    %3559 = vmatprep.subr.mxu0 0.0
    %3560 = vmatpush1.msra.mxu0 %v3378
    %3561 = vmatprep.subr.mxu0 0.0
    %3562 = vmatpush1.msra.mxu0 %v3379
    %3563 = vmatprep.subr.mxu0 0.0
    %3564 = vmatpush1.msra.mxu0 %v3380
    %3565 = vmatprep.subr.mxu0 0.0
    %3566 = vmatpush1.msra.mxu0 %v3381
    %3567 = vmatprep.subr.mxu0 0.0
    %3568 = vmatpush1.msra.mxu0 %v3382
    %3569 = vmatprep.subr.mxu0 0.0
    %3570 = vmatpush1.msra.mxu0 %v3383
    %3571 = vmatprep.subr.mxu0 0.0
    %3572 = vmatpush1.msra.mxu0 %v3384
    %3573 = vmatprep.subr.mxu0 0.0
    %3574 = vmatpush1.msra.mxu0 %v3385
    %3575 = vmatprep.subr.mxu0 0.0
    %3576 = vmatpush1.msra.mxu0 %v3386
    %3577 = vmatprep.subr.mxu0 0.0
    %3578 = vmatpush1.msra.mxu0 %v3387
    %3579 = vmatprep.subr.mxu0 0.0
    %3580 = vmatpush1.msra.mxu0 %v3388
    %3581 = vmatprep.subr.mxu0 0.0
    %3582 = vmatpush1.msra.mxu0 %v3389
    %3583 = vmatprep.subr.mxu0 0.0
    %3584 = vmatpush1.msra.mxu0 %v3390
    %3585 = vmatprep.subr.mxu0 0.0
    %3586 = vmatpush1.msra.mxu0 %v3391
    %3587 = vmatprep.subr.mxu0 0.0
    %3588 = vmatpush1.msra.mxu0 %v3392
    %3589 = vmatprep.subr.mxu0 0.0
    %3590 = vmatpush1.msra.mxu0 %v3393
    %3591 = vmatprep.subr.mxu0 0.0
    %3592 = vmatpush1.msra.mxu0 %v3394
    %3593 = vmatprep.subr.mxu0 0.0
    %3594 = vmatpush1.msra.mxu0 %v3395
    %3595 = vmatprep.mubr.f32.mxu0 %v3295
    %3596 = vmatmul.mubr.f32.gmra.mrb[0].mxu0 %v3286
    %v3597 = vpop.f32.mrb[0].mxu0
    %v3598 = vadd.f32 %v3528, %v3597
    %v3599 = vpop.f32.mrb[0].mxu0
    %3600 = vdwg.mxu0
    %3601 = vmatprep.subr.mxu0 0.0
    %3602 = vmatpush1.msra.mxu0 %v3396
    %3603 = vmatprep.subr.mxu0 0.0
    %3604 = vmatpush1.msra.mxu0 %v3397
    %3605 = vmatprep.subr.mxu0 0.0
    %3606 = vmatpush1.msra.mxu0 %v3398
    %3607 = vmatprep.subr.mxu0 0.0
    %3608 = vmatpush1.msra.mxu0 %v3399
    %3609 = vmatprep.subr.mxu0 0.0
    %3610 = vmatpush1.msra.mxu0 %v3400
    %3611 = vmatprep.subr.mxu0 0.0
    %3612 = vmatpush1.msra.mxu0 %v3401
    %3613 = vmatprep.subr.mxu0 0.0
    %3614 = vmatpush1.msra.mxu0 %v3402
    %3615 = vmatprep.subr.mxu0 0.0
    %3616 = vmatpush1.msra.mxu0 %v3403
    %3617 = vmatprep.subr.mxu0 0.0
    %3618 = vmatpush1.msra.mxu0 %v3404
    %3619 = vmatprep.subr.mxu0 0.0
    %3620 = vmatpush1.msra.mxu0 %v3405
    %3621 = vmatprep.subr.mxu0 0.0
    %3622 = vmatpush1.msra.mxu0 %v3406
    %3623 = vmatprep.subr.mxu0 0.0
    %3624 = vmatpush1.msra.mxu0 %v3407
    %3625 = vmatprep.subr.mxu0 0.0
    %3626 = vmatpush1.msra.mxu0 %v3408
    %3627 = vmatprep.subr.mxu0 0.0
    %3628 = vmatpush1.msra.mxu0 %v3409
    %3629 = vmatprep.subr.mxu0 0.0
    %3630 = vmatpush1.msra.mxu0 %v3410
    %3631 = vmatprep.subr.mxu0 0.0
    %3632 = vmatpush1.msra.mxu0 %v3411
    %3633 = vmatprep.subr.mxu0 0.0
    %3634 = vmatpush1.msra.mxu0 %v3412
    %3635 = vmatprep.subr.mxu0 0.0
    %3636 = vmatpush1.msra.mxu0 %v3413
    %3637 = vmatprep.subr.mxu0 0.0
    %3638 = vmatpush1.msra.mxu0 %v3414
    %3639 = vmatprep.subr.mxu0 0.0
    %3640 = vmatpush1.msra.mxu0 %v3415
    %3641 = vmatprep.subr.mxu0 0.0
    %3642 = vmatpush1.msra.mxu0 %v3416
    %3643 = vmatprep.subr.mxu0 0.0
    %3644 = vmatpush1.msra.mxu0 %v3417
    %3645 = vmatprep.subr.mxu0 0.0
    %3646 = vmatpush1.msra.mxu0 %v3418
    %3647 = vmatprep.subr.mxu0 0.0
    %3648 = vmatpush1.msra.mxu0 %v3419
    %3649 = vmatprep.subr.mxu0 0.0
    %3650 = vmatpush1.msra.mxu0 %v3420
    %3651 = vmatprep.subr.mxu0 0.0
    %3652 = vmatpush1.msra.mxu0 %v3421
    %3653 = vmatprep.subr.mxu0 0.0
    %3654 = vmatpush1.msra.mxu0 %v3422
    %3655 = vmatprep.subr.mxu0 0.0
    %3656 = vmatpush1.msra.mxu0 %v3423
    %3657 = vmatprep.subr.mxu0 0.0
    %3658 = vmatpush1.msra.mxu0 %v3424
    %3659 = vmatprep.subr.mxu0 0.0
    %3660 = vmatpush1.msra.mxu0 %v3425
    %3661 = vmatprep.subr.mxu0 0.0
    %3662 = vmatpush1.msra.mxu0 %v3426
    %3663 = vmatprep.subr.mxu0 0.0
    %3664 = vmatpush1.msra.mxu0 %v3427
    %3665 = vmatprep.mubr.f32.mxu0 %v3313
    %3666 = vmatmul.mubr.f32.gmra.mrb[0].mxu0 %v3304
    %v3667 = vpop.f32.mrb[0].mxu0
    %v3668 = vadd.f32 %v3598, %v3667
    %v3669 = vpop.f32.mrb[0].mxu0
    %3670 = vdwg.mxu0
    %3671 = vmatprep.subr.mxu0 0.0
    %3672 = vmatpush1.msra.mxu0 %v3428
    %3673 = vmatprep.subr.mxu0 0.0
    %3674 = vmatpush1.msra.mxu0 %v3429
    %3675 = vmatprep.subr.mxu0 0.0
    %3676 = vmatpush1.msra.mxu0 %v3430
    %3677 = vmatprep.subr.mxu0 0.0
    %3678 = vmatpush1.msra.mxu0 %v3431
    %3679 = vmatprep.subr.mxu0 0.0
    %3680 = vmatpush1.msra.mxu0 %v3432
    %3681 = vmatprep.subr.mxu0 0.0
    %3682 = vmatpush1.msra.mxu0 %v3433
    %3683 = vmatprep.subr.mxu0 0.0
    %3684 = vmatpush1.msra.mxu0 %v3434
    %3685 = vmatprep.subr.mxu0 0.0
    %3686 = vmatpush1.msra.mxu0 %v3435
    %3687 = vmatprep.subr.mxu0 0.0
    %3688 = vmatpush1.msra.mxu0 %v3436
    %3689 = vmatprep.subr.mxu0 0.0
    %3690 = vmatpush1.msra.mxu0 %v3437
    %3691 = vmatprep.subr.mxu0 0.0
    %3692 = vmatpush1.msra.mxu0 %v3438
    %3693 = vmatprep.subr.mxu0 0.0
    %3694 = vmatpush1.msra.mxu0 %v3439
    %3695 = vmatprep.subr.mxu0 0.0
    %3696 = vmatpush1.msra.mxu0 %v3440
    %3697 = vmatprep.subr.mxu0 0.0
    %3698 = vmatpush1.msra.mxu0 %v3441
    %3699 = vmatprep.subr.mxu0 0.0
    %3700 = vmatpush1.msra.mxu0 %v3442
    %3701 = vmatprep.subr.mxu0 0.0
    %3702 = vmatpush1.msra.mxu0 %v3443
    %3703 = vmatprep.subr.mxu0 0.0
    %3704 = vmatpush1.msra.mxu0 %v3444
    %3705 = vmatprep.subr.mxu0 0.0
    %3706 = vmatpush1.msra.mxu0 %v3445
    %3707 = vmatprep.subr.mxu0 0.0
    %3708 = vmatpush1.msra.mxu0 %v3446
    %3709 = vmatprep.subr.mxu0 0.0
    %3710 = vmatpush1.msra.mxu0 %v3447
    %3711 = vmatprep.subr.mxu0 0.0
    %3712 = vmatpush1.msra.mxu0 %v3448
    %3713 = vmatprep.subr.mxu0 0.0
    %3714 = vmatpush1.msra.mxu0 %v3449
    %3715 = vmatprep.subr.mxu0 0.0
    %3716 = vmatpush1.msra.mxu0 %v3450
    %3717 = vmatprep.subr.mxu0 0.0
    %3718 = vmatpush1.msra.mxu0 %v3451
    %3719 = vmatprep.subr.mxu0 0.0
    %3720 = vmatpush1.msra.mxu0 %v3452
    %3721 = vmatprep.subr.mxu0 0.0
    %3722 = vmatpush1.msra.mxu0 %v3453
    %3723 = vmatprep.subr.mxu0 0.0
    %3724 = vmatpush1.msra.mxu0 %v3454
    %3725 = vmatprep.subr.mxu0 0.0
    %3726 = vmatpush1.msra.mxu0 %v3455
    %3727 = vmatprep.subr.mxu0 0.0
    %3728 = vmatpush1.msra.mxu0 %v3456
    %3729 = vmatprep.subr.mxu0 0.0
    %3730 = vmatpush1.msra.mxu0 %v3457
    %3731 = vmatprep.subr.mxu0 0.0
    %3732 = vmatpush1.msra.mxu0 %v3458
    %3733 = vmatprep.subr.mxu0 0.0
    %3734 = vmatpush1.msra.mxu0 %v3459
    %3735 = vmatprep.mubr.f32.mxu0 %v3331
    %3736 = vmatmul.mubr.f32.gmra.mrb[0].mxu0 %v3322
    %v3737 = vpop.f32.mrb[0].mxu0
    %v3738 = vadd.f32 %v3668, %v3737
    %v3739 = vpop.f32.mrb[0].mxu0
    %3740 = vdwg.mxu0
    %vm3741 = vcmask 16384
    %3742 = vst.msk [vmem:[#allocation3] sm:$0x1] %vm3741, %v3738
    // Predicated region
    $region86: #{gapnet_cls_forward.1} parent=1 // pred_check
      _
    $region87: #{gapnet_cls_forward.1} parent=1 // pred_check_branch
      %3744 = sbr.rel (0) target = $region89
    $region88: #{gapnet_cls_forward.1} parent=1 // pred_region
      %s3746 = ssub.s32 16, 16
      %3747 = vsyncadd [#allocation4], %s3746
      %s3749 = sshll.u32 [#allocation3], 4
      %s3750 = int_to_ptr.vmem [resolvable:$true] %s3749
      %3752 = dma.vmem_to_hbm [thread:$0]  %s3750, 16, %s21, [#allocation4]
    $region89: #{gapnet_cls_forward.1} parent=1 // pred_fallthru
      _
    // Predicated region
    $region90: #{gapnet_cls_forward.1} parent=1 // pred_check
      _
    $region91: #{gapnet_cls_forward.1} parent=1 // pred_check_branch
      %3754 = sbr.rel (0) target = $region93
    $region92: #{gapnet_cls_forward.1} parent=1 // pred_region
      %3755 = dma.done [#allocation4], 16
    $region93: #{gapnet_cls_forward.1} parent=1 // pred_fallthru
      _
    %3756 = vsyncpa [#allocation4], 1

</llo_original>
